<compile_context>
chip_gen: v7x
topology: tpu7x:2x2x1
jax: 0.10.0
libtpu: 0.0.40
codegen_flags: <defaults>
</compile_context>

<pallas_src>
import functools
import math

import jax
import jax.numpy as jnp
from jax.experimental import pallas as pl
from jax.experimental.pallas import tpu as pltpu

# ----------------------------- config (small, module-consistent) -----------------------------
B = 2              # batch
S = 8              # BERT sequence length
VOCAB_BERT = 64    # stands in for 30522
VOCAB_GPT = 64     # stands in for 50257
H_BERT = 32        # stands in for 768
H_GPT = 32         # stands in for 768
N_HEADS = 4        # stands in for 12
DH_BERT = H_BERT // N_HEADS
DH_GPT = H_GPT // N_HEADS
FFN_BERT = 4 * H_BERT
FFN_GPT = 4 * H_GPT
N_LAYERS_BERT = 2
N_LAYERS_GPT = 2
MAX_POS = 16
BERT_LN_EPS = 1e-12
GPT_LN_EPS = 1e-5
MASK_NEG = -1e9          # stands in for torch.finfo(dtype).min in HF's extended attention mask
APPROX_RECIPROCAL = True # softmax denom via EUP vrcp (~2^-12 rel err); False -> exact division
VMEM_LIMIT = 32 * 1024 * 1024


# ----------------------------- in-kernel math helpers (all f32) -----------------------------
def _ln(x, g, b, eps):
    mu = jnp.mean(x, axis=-1, keepdims=True)
    var = jnp.mean(jnp.square(x - mu), axis=-1, keepdims=True)
    return (x - mu) * jax.lax.rsqrt(var + eps) * g + b


def _erf(x):
    # Abramowitz & Stegun 7.1.26 rational approximation (|err| < 1.5e-7); only abs/mul/add/div/exp/where.
    a1, a2, a3, a4, a5 = 0.254829592, -0.284496736, 1.421413741, -1.453152027, 1.061405429
    pp = 0.3275911
    ax = jnp.abs(x)
    t = 1.0 / (1.0 + pp * ax)
    poly = ((((a5 * t + a4) * t + a3) * t + a2) * t + a1) * t
    y = 1.0 - poly * jnp.exp(-ax * ax)
    return jnp.where(x >= 0, y, -y)


def _gelu_erf(x):
    # HF BERT hidden_act="gelu" (exact erf form, approximated to f32 noise level in-kernel)
    return 0.5 * x * (1.0 + _erf(x * (1.0 / math.sqrt(2.0))))


def _gelu_new(x):
    # HF GPT-Neo activation_function="gelu_new" (tanh approximation)
    return 0.5 * x * (1.0 + jnp.tanh(math.sqrt(2.0 / math.pi) * (x + 0.044715 * x * x * x)))


def _softmax_lastdim(s):
    s = s - jnp.max(s, axis=-1, keepdims=True)
    p = jnp.exp(s)
    denom = jnp.sum(p, axis=-1, keepdims=True)
    if APPROX_RECIPROCAL:
        return p * pl.reciprocal(denom, approx=True)
    return p / denom


# ----------------------------- BlockSpec helpers -----------------------------
def _resident(shape):
    # full array, constant block index -> stays resident in VMEM across all grid steps
    n = len(shape)
    return pl.BlockSpec(tuple(shape), lambda l, n=n: (0,) * n)


def _per_layer(shape):
    # leading dim indexed by the layer grid axis; trailing dims are the full per-layer tensor
    block = (1,) + tuple(shape[1:])
    n = len(shape) - 1
    return pl.BlockSpec(block, lambda l, n=n: (l,) + (0,) * n)


# ----------------------------- fused BERT encoder kernel -----------------------------
def _bert_encoder_kernel(emb_ref, key_bias_ref, eg_ref, eb_ref,
                         qkv_w_ref, qkv_b_ref, ao_w_ref, ao_b_ref,
                         aln_g_ref, aln_b_ref, i_w_ref, i_b_ref,
                         o_w_ref, o_b_ref, oln_g_ref, oln_b_ref,
                         out_ref, *, num_layers, num_heads):
    l = pl.program_id(0)
    BS, H = out_ref.shape
    Bb, Ss = key_bias_ref.shape
    dh = H // num_heads

    # step 0: embedding LayerNorm (dropout = identity in eval). out_ref (constant block index over the
    # "arbitrary" layer axis) is the VMEM-resident hidden-state carry for the whole encoder.
    @pl.when(l == 0)
    def _():
        out_ref[...] = _ln(emb_ref[...], eg_ref[...], eb_ref[...], BERT_LN_EPS)

    x = out_ref[...]                                   # (B*S, H) f32 carry
    x_bf = x.astype(jnp.bfloat16)

    # Q/K/V projections: weights stored (1, 3, H, H) per layer -> split along a leading (non-lane) axis.
    # 1/sqrt(dh) is already folded into the Q weight (and bias) at init.
    q = jnp.dot(x_bf, qkv_w_ref[0, 0], preferred_element_type=jnp.float32) + qkv_b_ref[0, 0]
    k = jnp.dot(x_bf, qkv_w_ref[0, 1], preferred_element_type=jnp.float32) + qkv_b_ref[0, 1]
    v = jnp.dot(x_bf, qkv_w_ref[0, 2], preferred_element_type=jnp.float32) + qkv_b_ref[0, 2]
    q3 = q.reshape(Bb, Ss, H)
    k3 = k.reshape(Bb, Ss, H)
    v3 = v.reshape(Bb, Ss, H)

    # additive key bias precomputed in the wrapper: (B, S) -> broadcast to (B, 1, S)
    kb = key_bias_ref[...][:, None, :]

    # per-head attention, statically unrolled; contexts merged ONCE full-width (no scratch, no partial
    # masked stores). TODO(synk): at real dims move heads to a grid/batch axis instead of the unroll.
    ctxs = []
    for hh in range(num_heads):
        lo = hh * dh
        qh = q3[:, :, lo:lo + dh].astype(jnp.bfloat16)
        kh = k3[:, :, lo:lo + dh].astype(jnp.bfloat16)
        vh = v3[:, :, lo:lo + dh].astype(jnp.bfloat16)
        s = jnp.einsum("bqd,bkd->bqk", qh, kh,
                       preferred_element_type=jnp.float32) + kb          # (B, S, S) f32
        p = _softmax_lastdim(s)
        ctxs.append(jnp.einsum("bqk,bkd->bqd", p.astype(jnp.bfloat16), vh,
                               preferred_element_type=jnp.float32))      # (B, S, dh) f32
    ctx = jnp.concatenate(ctxs, axis=-1).reshape(BS, H)                  # single lane-dense merge

    # attention output projection + residual + LN
    attn_out = jnp.dot(ctx.astype(jnp.bfloat16), ao_w_ref[0],
                       preferred_element_type=jnp.float32) + ao_b_ref[0]
    h1 = _ln(attn_out + x, aln_g_ref[0], aln_b_ref[0], BERT_LN_EPS)

    # FFN (GELU fused, f32 elementwise), residual + LN
    inter = _gelu_erf(jnp.dot(h1.astype(jnp.bfloat16), i_w_ref[0],
                              preferred_element_type=jnp.float32) + i_b_ref[0])
    ffn = jnp.dot(inter.astype(jnp.bfloat16), o_w_ref[0],
                  preferred_element_type=jnp.float32) + o_b_ref[0]
    out_ref[...] = _ln(ffn + h1, oln_g_ref[0], oln_b_ref[0], BERT_LN_EPS)


def bert_encoder(p, emb2d, key_bias):
    BS, H = emb2d.shape
    Bb, Ss = key_bias.shape
    L = p["qkv_w"].shape[0]
    kern = functools.partial(_bert_encoder_kernel, num_layers=L, num_heads=N_HEADS)
    # TODO(synk): at real B*S add an outer 'parallel' row-tile grid axis (v7x 2 TCs) and tile i_w/o_w
    #             along the FFN axis so the bf16 weight double-buffer fits 64 MiB VMEM.
    return pl.pallas_call(
        kern,
        out_shape=jax.ShapeDtypeStruct((BS, H), jnp.float32),
        grid=(L,),
        in_specs=[
            _resident((BS, H)),                 # pre-LN embeddings (aliased to the output buffer)
            _resident((Bb, Ss)),                # precomputed additive key bias (f32)
            _resident((1, H)),                  # emb LN gamma
            _resident((1, H)),                  # emb LN beta
            _per_layer(p["qkv_w"].shape),       # (L, 3, H, H) bf16
            _per_layer(p["qkv_b"].shape),       # (L, 3, 1, H) f32
            _per_layer(p["ao_w"].shape),
            _per_layer(p["ao_b"].shape),
            _per_layer(p["attn_ln_g"].shape),
            _per_layer(p["attn_ln_b"].shape),
            _per_layer(p["i_w"].shape),
            _per_layer(p["i_b"].shape),
            _per_layer(p["o_w"].shape),
            _per_layer(p["o_b"].shape),
            _per_layer(p["out_ln_g"].shape),
            _per_layer(p["out_ln_b"].shape),
        ],
        out_specs=_resident((BS, H)),
        input_output_aliases={0: 0},            # emb2d HBM buffer reused for the output hidden state
        compiler_params=pltpu.CompilerParams(
            dimension_semantics=("arbitrary",),
            vmem_limit_bytes=VMEM_LIMIT),
    )(emb2d, key_bias, p["emb_ln_g"], p["emb_ln_b"],
      p["qkv_w"], p["qkv_b"], p["ao_w"], p["ao_b"],
      p["attn_ln_g"], p["attn_ln_b"], p["i_w"], p["i_b"],
      p["o_w"], p["o_b"], p["out_ln_g"], p["out_ln_b"])


# ----------------------------- fused proj + GPT-Neo decoder kernel -----------------------------
def _gpt_decoder_kernel(cls_ref, pw_ref, pb_ref, wpe_ref,
                        ln1_g_ref, ln1_b_ref, v_w_ref,
                        ao_w_ref, ao_b_ref, ln2_g_ref, ln2_b_ref,
                        fc_w_ref, fc_b_ref, pj_w_ref, pj_b_ref,
                        lnf_g_ref, lnf_b_ref, lm_ref,
                        out_ref, h_ref, *, num_layers):
    l = pl.program_id(0)

    # step 0: embedding_proj(cls).unsqueeze(1) + wpe[:1]  (seq_len == 1, position 0)
    @pl.when(l == 0)
    def _():
        h_ref[...] = (jnp.dot(cls_ref[...].astype(jnp.bfloat16), pw_ref[...],
                              preferred_element_type=jnp.float32)
                      + pb_ref[...] + wpe_ref[...])

    x = h_ref[...]                                                       # (B, H_GPT): one token per row

    ln1 = _ln(x, ln1_g_ref[0], ln1_b_ref[0], GPT_LN_EPS)
    # Single-token causal self-attention: softmax over the one allowed key is exactly 1 for every head
    # (GPT-Neo applies no 1/sqrt(d) scaling), so context == V — exact, not approximate. Only the V
    # projection weight is streamed (Q/K weights are never DMA'd); q/k/v have no bias in GPT-Neo.
    ctx = jnp.dot(ln1.astype(jnp.bfloat16), v_w_ref[0, 0],
                  preferred_element_type=jnp.float32)
    attn_out = jnp.dot(ctx.astype(jnp.bfloat16), ao_w_ref[0],
                       preferred_element_type=jnp.float32) + ao_b_ref[0]
    h1 = x + attn_out

    ln2 = _ln(h1, ln2_g_ref[0], ln2_b_ref[0], GPT_LN_EPS)
    fc = _gelu_new(jnp.dot(ln2.astype(jnp.bfloat16), fc_w_ref[0],
                           preferred_element_type=jnp.float32) + fc_b_ref[0])
    mlp = jnp.dot(fc.astype(jnp.bfloat16), pj_w_ref[0],
                  preferred_element_type=jnp.float32) + pj_b_ref[0]
    h_new = h1 + mlp
    h_ref[...] = h_new

    @pl.when(l == num_layers - 1)
    def _():
        hf = _ln(h_new, lnf_g_ref[...], lnf_b_ref[...], GPT_LN_EPS)
        # TODO(synk): at real vocab (50257) tile the vocab axis ('parallel' grid dim, 128-multiple tiles)
        out_ref[...] = jnp.dot(hf.astype(jnp.bfloat16), lm_ref[...],
                               preferred_element_type=jnp.float32)


def gpt_decoder(pg, pproj, cls):
    # Decoder sequence is structurally one token (embedding_proj(cls).unsqueeze(1)); the kernel's
    # context==V simplification is valid ONLY for seq_len == 1.
    assert cls.ndim == 2, "gpt_decoder expects a single projected CLS token per batch row"
    Bq, Hb = cls.shape
    Hg = pg["lnf_g"].shape[-1]
    L = pg["qkv_w"].shape[0]
    V = pg["lm_head_w"].shape[-1]
    kern = functools.partial(_gpt_decoder_kernel, num_layers=L)
    return pl.pallas_call(
        kern,
        out_shape=jax.ShapeDtypeStruct((Bq, V), jnp.float32),
        grid=(L,),
        in_specs=[
            _resident((Bq, Hb)),                 # CLS embedding from BERT
            _resident((Hb, Hg)),                 # embedding_proj weight (bf16)
            _resident((1, Hg)),                  # embedding_proj bias
            _resident((1, Hg)),                  # wpe[0]
            _per_layer(pg["ln1_g"].shape),
            _per_layer(pg["ln1_b"].shape),
            # stream ONLY the V component of the (L, 3, H, H) qkv stack
            pl.BlockSpec((1, 1, Hg, Hg), lambda l: (l, 2, 0, 0)),
            _per_layer(pg["ao_w"].shape),
            _per_layer(pg["ao_b"].shape),
            _per_layer(pg["ln2_g"].shape),
            _per_layer(pg["ln2_b"].shape),
            _per_layer(pg["fc_w"].shape),
            _per_layer(pg["fc_b"].shape),
            _per_layer(pg["pj_w"].shape),
            _per_layer(pg["pj_b"].shape),
            _resident((1, Hg)),                  # final LN gamma
            _resident((1, Hg)),                  # final LN beta
            _resident((Hg, V)),                  # tied lm_head (wte.T, bf16)
        ],
        out_specs=_resident((Bq, V)),
        scratch_shapes=[pltpu.VMEM((Bq, Hg), jnp.float32)],   # tiny hidden-state carry across layers
        compiler_params=pltpu.CompilerParams(
            dimension_semantics=("arbitrary",),
            vmem_limit_bytes=VMEM_LIMIT),
    )(cls, pproj["w"], pproj["b"], pg["wpe"][0:1],
      pg["ln1_g"], pg["ln1_b"], pg["qkv_w"], pg["ao_w"], pg["ao_b"],
      pg["ln2_g"], pg["ln2_b"], pg["fc_w"], pg["fc_b"], pg["pj_w"], pg["pj_b"],
      pg["lnf_g"], pg["lnf_b"], pg["lm_head_w"])


# ----------------------------- parameter init (deterministic, synthetic) -----------------------------
def init_params(key):
    keys = iter(jax.random.split(key, 256))

    def dense(shape):
        return 0.02 * jax.random.normal(next(keys), shape, dtype=jnp.float32)

    ones = lambda s: jnp.ones(s, jnp.float32)
    zeros = lambda s: jnp.zeros(s, jnp.float32)
    Lb, Lg = N_LAYERS_BERT, N_LAYERS_GPT
    q_fold = 1.0 / math.sqrt(DH_BERT)   # 1/sqrt(dh) folded into BERT Wq (and bq, zero here) at init

    def qkv_block(h, q_scale):
        # (3, h, h): q/k/v split along a leading axis so the kernel never lane-slices the fused output
        return jnp.stack([dense((h, h)) * q_scale, dense((h, h)), dense((h, h))], axis=0)

    bert = dict(
        word_emb=dense((VOCAB_BERT, H_BERT)),
        pos_emb=dense((MAX_POS, H_BERT)),
        type_emb=dense((2, H_BERT)),
        emb_ln_g=ones((1, H_BERT)), emb_ln_b=zeros((1, H_BERT)),
        qkv_w=jnp.stack([qkv_block(H_BERT, q_fold) for _ in range(Lb)]).astype(jnp.bfloat16),
        qkv_b=zeros((Lb, 3, 1, H_BERT)),            # BERT q/k/v biases (zero synthetic init)
        ao_w=jnp.stack([dense((H_BERT, H_BERT)) for _ in range(Lb)]).astype(jnp.bfloat16),
        ao_b=zeros((Lb, 1, H_BERT)),
        attn_ln_g=ones((Lb, 1, H_BERT)), attn_ln_b=zeros((Lb, 1, H_BERT)),
        i_w=jnp.stack([dense((H_BERT, FFN_BERT)) for _ in range(Lb)]).astype(jnp.bfloat16),
        i_b=zeros((Lb, 1, FFN_BERT)),
        o_w=jnp.stack([dense((FFN_BERT, H_BERT)) for _ in range(Lb)]).astype(jnp.bfloat16),
        o_b=zeros((Lb, 1, H_BERT)),
        out_ln_g=ones((Lb, 1, H_BERT)), out_ln_b=zeros((Lb, 1, H_BERT)),
    )

    wte = dense((VOCAB_GPT, H_GPT))
    gpt = dict(
        wpe=dense((MAX_POS, H_GPT)),
        ln1_g=ones((Lg, 1, H_GPT)), ln1_b=zeros((Lg, 1, H_GPT)),
        # GPT-Neo q/k/v projections have no bias and no 1/sqrt(d) scaling
        qkv_w=jnp.stack([qkv_block(H_GPT, 1.0) for _ in range(Lg)]).astype(jnp.bfloat16),
        ao_w=jnp.stack([dense((H_GPT, H_GPT)) for _ in range(Lg)]).astype(jnp.bfloat16),
        ao_b=zeros((Lg, 1, H_GPT)),
        ln2_g=ones((Lg, 1, H_GPT)), ln2_b=zeros((Lg, 1, H_GPT)),
        fc_w=jnp.stack([dense((H_GPT, FFN_GPT)) for _ in range(Lg)]).astype(jnp.bfloat16),
        fc_b=zeros((Lg, 1, FFN_GPT)),
        pj_w=jnp.stack([dense((FFN_GPT, H_GPT)) for _ in range(Lg)]).astype(jnp.bfloat16),
        pj_b=zeros((Lg, 1, H_GPT)),
        lnf_g=ones((1, H_GPT)), lnf_b=zeros((1, H_GPT)),
        lm_head_w=wte.T.astype(jnp.bfloat16),        # lm_head tied to wte (no bias)
    )

    proj = dict(w=dense((H_BERT, H_GPT)).astype(jnp.bfloat16), b=zeros((1, H_GPT)))
    return dict(bert=bert, gpt=gpt, proj=proj)


# ----------------------------- forward -----------------------------
def tars_forward(params, input_ids, attention_mask=None, decoder_input_ids=None):
    # TODO(synk): decoder_input_ids is not a GPTNeoForCausalLM.forward argument; accepted and ignored.
    del decoder_input_ids
    if attention_mask is None:
        attention_mask = jnp.ones_like(input_ids)
    pb, pg, pp = params["bert"], params["gpt"], params["proj"]
    batch, seq = input_ids.shape

    # BERT embeddings: word + position + token_type(=0) gathers stay in JAX;
    # the embedding LayerNorm is fused into step 0 of the encoder kernel.
    emb = (pb["word_emb"][input_ids]
           + pb["pos_emb"][:seq][None, :, :]
           + pb["type_emb"][0][None, None, :]).reshape(batch * seq, H_BERT)
    # additive key bias hoisted out of the per-layer loop (computed once, resident in VMEM)
    key_bias = (1.0 - attention_mask.astype(jnp.float32)) * MASK_NEG     # (B, S)

    last_hidden = bert_encoder(pb, emb, key_bias)                        # (B*S, H_BERT)
    cls = last_hidden.reshape(batch, seq, H_BERT)[:, 0, :]               # (B, H_BERT)

    logits = gpt_decoder(pg, pp, cls)                                    # (B, VOCAB_GPT), seq_len == 1
    return logits[:, None, :]                                            # (B, 1, VOCAB_GPT)


# ----------------------------- main -----------------------------
if __name__ == "__main__":
    root = jax.random.PRNGKey(0)
    pkey, dkey = jax.random.split(root)
    params = init_params(pkey)

    input_ids = jax.random.randint(dkey, (B, S), 0, VOCAB_BERT, dtype=jnp.int32)
    attention_mask = jnp.ones((B, S), dtype=jnp.int32)

    fwd = jax.jit(lambda ids, mask: tars_forward(params, ids, mask))
    logits = fwd(input_ids, attention_mask)
    jax.block_until_ready(logits)

    assert logits.shape == (B, 1, VOCAB_GPT), logits.shape
    assert bool(jnp.all(jnp.isfinite(logits)))
    print("KERNEL_OK")
</pallas_src>

<mosaic_0001>
module attributes {stable_mosaic.version = 11 : i64} {
  func.func @_gpt_decoder_kernel(%arg0: i32, %arg1: memref<2x32xf32, #tpu.memory_space<vmem>>, %arg2: memref<32x32xbf16, #tpu.memory_space<vmem>>, %arg3: memref<1x32xf32, #tpu.memory_space<vmem>>, %arg4: memref<1x32xf32, #tpu.memory_space<vmem>>, %arg5: memref<1x1x32xf32, #tpu.memory_space<vmem>>, %arg6: memref<1x1x32xf32, #tpu.memory_space<vmem>>, %arg7: memref<1x1x32x32xbf16, #tpu.memory_space<vmem>>, %arg8: memref<1x32x32xbf16, #tpu.memory_space<vmem>>, %arg9: memref<1x1x32xf32, #tpu.memory_space<vmem>>, %arg10: memref<1x1x32xf32, #tpu.memory_space<vmem>>, %arg11: memref<1x1x32xf32, #tpu.memory_space<vmem>>, %arg12: memref<1x32x128xbf16, #tpu.memory_space<vmem>>, %arg13: memref<1x1x128xf32, #tpu.memory_space<vmem>>, %arg14: memref<1x128x32xbf16, #tpu.memory_space<vmem>>, %arg15: memref<1x1x32xf32, #tpu.memory_space<vmem>>, %arg16: memref<1x32xf32, #tpu.memory_space<vmem>>, %arg17: memref<1x32xf32, #tpu.memory_space<vmem>>, %arg18: memref<32x64xbf16, #tpu.memory_space<vmem>>, %arg19: memref<2x64xf32, #tpu.memory_space<vmem>>, %arg20: memref<2x32xf32, #tpu.memory_space<vmem>>) attributes {dimension_semantics = [#tpu.dimension_semantics<arbitrary>], iteration_bounds = array<i64: 2>, scalar_prefetch = 0 : i64, scratch_operands = 1 : i64, tpu.core_type = #tpu.core_type<tc>, window_params = [{pipeline_mode = #tpu.pipeline_mode<synchronous>, transform_indices = @transform_0, window_bounds = array<i64: 2, 32>}, {pipeline_mode = #tpu.pipeline_mode<synchronous>, transform_indices = @transform_1, window_bounds = array<i64: 32, 32>}, {pipeline_mode = #tpu.pipeline_mode<synchronous>, transform_indices = @transform_2, window_bounds = array<i64: 1, 32>}, {pipeline_mode = #tpu.pipeline_mode<synchronous>, transform_indices = @transform_3, window_bounds = array<i64: 1, 32>}, {transform_indices = @transform_4, window_bounds = array<i64: 1, 1, 32>}, {transform_indices = @transform_5, window_bounds = array<i64: 1, 1, 32>}, {transform_indices = @transform_6, window_bounds = array<i64: 1, 1, 32, 32>}, {transform_indices = @transform_7, window_bounds = array<i64: 1, 32, 32>}, {transform_indices = @transform_8, window_bounds = array<i64: 1, 1, 32>}, {transform_indices = @transform_9, window_bounds = array<i64: 1, 1, 32>}, {transform_indices = @transform_10, window_bounds = array<i64: 1, 1, 32>}, {transform_indices = @transform_11, window_bounds = array<i64: 1, 32, 128>}, {transform_indices = @transform_12, window_bounds = array<i64: 1, 1, 128>}, {transform_indices = @transform_13, window_bounds = array<i64: 1, 128, 32>}, {transform_indices = @transform_14, window_bounds = array<i64: 1, 1, 32>}, {pipeline_mode = #tpu.pipeline_mode<synchronous>, transform_indices = @transform_15, window_bounds = array<i64: 1, 32>}, {pipeline_mode = #tpu.pipeline_mode<synchronous>, transform_indices = @transform_16, window_bounds = array<i64: 1, 32>}, {pipeline_mode = #tpu.pipeline_mode<synchronous>, transform_indices = @transform_17, window_bounds = array<i64: 32, 64>}, {pipeline_mode = #tpu.pipeline_mode<synchronous>, transform_indices = @transform_18, window_bounds = array<i64: 2, 64>}]} {
    %c0_i32 = arith.constant 0 : i32
    %0 = arith.cmpi eq, %arg0, %c0_i32 : i32
    %1 = arith.extui %0 : i1 to i32
    %c0_i32_0 = arith.constant 0 : i32
    %2 = arith.cmpi ne, %1, %c0_i32_0 : i32
    scf.if %2 {
      %c0_56 = arith.constant 0 : index
      %c0_57 = arith.constant 0 : index
      %103 = vector.load %arg1[%c0_56, %c0_57] : memref<2x32xf32, #tpu.memory_space<vmem>>, vector<2x32xf32>
      %104 = arith.truncf %103 : vector<2x32xf32> to vector<2x32xbf16>
      %c0_58 = arith.constant 0 : index
      %c0_59 = arith.constant 0 : index
      %105 = vector.load %arg2[%c0_58, %c0_59] : memref<32x32xbf16, #tpu.memory_space<vmem>>, vector<32x32xbf16>
      %cst_60 = arith.constant dense<0.000000e+00> : vector<2x32xf32>
      %106 = tpu.matmul %104, %105, %cst_60 {dimension_numbers = #tpu.dot_dimension_numbers<[1], [0], [0], [1], [0, 0, 1, 1], [], []>} : vector<2x32xbf16>, vector<32x32xbf16>, vector<2x32xf32> -> vector<2x32xf32>
      %c0_61 = arith.constant 0 : index
      %c0_62 = arith.constant 0 : index
      %107 = vector.load %arg3[%c0_61, %c0_62] : memref<1x32xf32, #tpu.memory_space<vmem>>, vector<1x32xf32>
      %108 = vector.broadcast %107 : vector<1x32xf32> to vector<2x32xf32>
      %109 = arith.addf %106, %108 : vector<2x32xf32>
      %c0_63 = arith.constant 0 : index
      %c0_64 = arith.constant 0 : index
      %110 = vector.load %arg4[%c0_63, %c0_64] : memref<1x32xf32, #tpu.memory_space<vmem>>, vector<1x32xf32>
      %111 = vector.broadcast %110 : vector<1x32xf32> to vector<2x32xf32>
      %112 = arith.addf %109, %111 : vector<2x32xf32>
      %c0_65 = arith.constant 0 : index
      %c0_66 = arith.constant 0 : index
      %113 = vector.load %arg20[%c0_65, %c0_66] : memref<2x32xf32, #tpu.memory_space<vmem>>, vector<2x32xf32>
      tpu.vector_store %arg20[%c0_65, %c0_66], %112 {strides = array<i32>} : memref<2x32xf32, #tpu.memory_space<vmem>>, vector<2x32xf32>,
    } else {
    }
    %c0 = arith.constant 0 : index
    %c0_1 = arith.constant 0 : index
    %3 = vector.load %arg20[%c0, %c0_1] : memref<2x32xf32, #tpu.memory_space<vmem>>, vector<2x32xf32>
    %c0_2 = arith.constant 0 : index
    %c0_3 = arith.constant 0 : index
    %c0_4 = arith.constant 0 : index
    %4 = vector.load %arg5[%c0_2, %c0_3, %c0_4] : memref<1x1x32xf32, #tpu.memory_space<vmem>>, vector<1x1x32xf32>
    %5 = vector.shape_cast %4 : vector<1x1x32xf32> to vector<1x32xf32>
    %c0_5 = arith.constant 0 : index
    %c0_6 = arith.constant 0 : index
    %c0_7 = arith.constant 0 : index
    %6 = vector.load %arg6[%c0_5, %c0_6, %c0_7] : memref<1x1x32xf32, #tpu.memory_space<vmem>>, vector<1x1x32xf32>
    %7 = vector.shape_cast %6 : vector<1x1x32xf32> to vector<1x32xf32>
    %cst = arith.constant dense<0.000000e+00> : vector<2xf32>
    %8 = vector.multi_reduction <add>, %3, %cst [1] : vector<2x32xf32> to vector<2xf32>
    %9 = vector.shape_cast %8 : vector<2xf32> to vector<2x1xf32>
    %cst_8 = arith.constant 3.200000e+01 : f32
    %10 = vector.broadcast %cst_8 : f32 to vector<2x1xf32>
    %11 = arith.divf %9, %10 : vector<2x1xf32>
    %12 = vector.broadcast %11 : vector<2x1xf32> to vector<2x32xf32>
    %13 = arith.subf %3, %12 : vector<2x32xf32>
    %14 = arith.mulf %13, %13 : vector<2x32xf32>
    %cst_9 = arith.constant dense<0.000000e+00> : vector<2xf32>
    %15 = vector.multi_reduction <add>, %14, %cst_9 [1] : vector<2x32xf32> to vector<2xf32>
    %16 = vector.shape_cast %15 : vector<2xf32> to vector<2x1xf32>
    %cst_10 = arith.constant 3.200000e+01 : f32
    %17 = vector.broadcast %cst_10 : f32 to vector<2x1xf32>
    %18 = arith.divf %16, %17 : vector<2x1xf32>
    %19 = vector.broadcast %11 : vector<2x1xf32> to vector<2x32xf32>
    %20 = arith.subf %3, %19 : vector<2x32xf32>
    %cst_11 = arith.constant 9.99999974E-6 : f32
    %21 = vector.broadcast %cst_11 : f32 to vector<2x1xf32>
    %22 = arith.addf %18, %21 : vector<2x1xf32>
    %23 = math.rsqrt %22 : vector<2x1xf32>
    %24 = vector.broadcast %23 : vector<2x1xf32> to vector<2x32xf32>
    %25 = arith.mulf %20, %24 : vector<2x32xf32>
    %26 = vector.broadcast %5 : vector<1x32xf32> to vector<2x32xf32>
    %27 = arith.mulf %25, %26 : vector<2x32xf32>
    %28 = vector.broadcast %7 : vector<1x32xf32> to vector<2x32xf32>
    %29 = arith.addf %27, %28 : vector<2x32xf32>
    %30 = arith.truncf %29 : vector<2x32xf32> to vector<2x32xbf16>
    %c0_12 = arith.constant 0 : index
    %c0_13 = arith.constant 0 : index
    %c0_14 = arith.constant 0 : index
    %c0_15 = arith.constant 0 : index
    %31 = vector.load %arg7[%c0_12, %c0_13, %c0_14, %c0_15] : memref<1x1x32x32xbf16, #tpu.memory_space<vmem>>, vector<1x1x32x32xbf16>
    %32 = vector.shape_cast %31 : vector<1x1x32x32xbf16> to vector<32x32xbf16>
    %cst_16 = arith.constant dense<0.000000e+00> : vector<2x32xf32>
    %33 = tpu.matmul %30, %32, %cst_16 {dimension_numbers = #tpu.dot_dimension_numbers<[1], [0], [0], [1], [0, 0, 1, 1], [], []>} : vector<2x32xbf16>, vector<32x32xbf16>, vector<2x32xf32> -> vector<2x32xf32>
    %34 = arith.truncf %33 : vector<2x32xf32> to vector<2x32xbf16>
    %c0_17 = arith.constant 0 : index
    %c0_18 = arith.constant 0 : index
    %c0_19 = arith.constant 0 : index
    %35 = vector.load %arg8[%c0_17, %c0_18, %c0_19] : memref<1x32x32xbf16, #tpu.memory_space<vmem>>, vector<1x32x32xbf16>
    %36 = vector.shape_cast %35 : vector<1x32x32xbf16> to vector<32x32xbf16>
    %cst_20 = arith.constant dense<0.000000e+00> : vector<2x32xf32>
    %37 = tpu.matmul %34, %36, %cst_20 {dimension_numbers = #tpu.dot_dimension_numbers<[1], [0], [0], [1], [0, 0, 1, 1], [], []>} : vector<2x32xbf16>, vector<32x32xbf16>, vector<2x32xf32> -> vector<2x32xf32>
    %c0_21 = arith.constant 0 : index
    %c0_22 = arith.constant 0 : index
    %c0_23 = arith.constant 0 : index
    %38 = vector.load %arg9[%c0_21, %c0_22, %c0_23] : memref<1x1x32xf32, #tpu.memory_space<vmem>>, vector<1x1x32xf32>
    %39 = vector.shape_cast %38 : vector<1x1x32xf32> to vector<1x32xf32>
    %40 = vector.broadcast %39 : vector<1x32xf32> to vector<2x32xf32>
    %41 = arith.addf %37, %40 : vector<2x32xf32>
    %42 = arith.addf %3, %41 : vector<2x32xf32>
    %c0_24 = arith.constant 0 : index
    %c0_25 = arith.constant 0 : index
    %c0_26 = arith.constant 0 : index
    %43 = vector.load %arg10[%c0_24, %c0_25, %c0_26] : memref<1x1x32xf32, #tpu.memory_space<vmem>>, vector<1x1x32xf32>
    %44 = vector.shape_cast %43 : vector<1x1x32xf32> to vector<1x32xf32>
    %c0_27 = arith.constant 0 : index
    %c0_28 = arith.constant 0 : index
    %c0_29 = arith.constant 0 : index
    %45 = vector.load %arg11[%c0_27, %c0_28, %c0_29] : memref<1x1x32xf32, #tpu.memory_space<vmem>>, vector<1x1x32xf32>
    %46 = vector.shape_cast %45 : vector<1x1x32xf32> to vector<1x32xf32>
    %cst_30 = arith.constant dense<0.000000e+00> : vector<2xf32>
    %47 = vector.multi_reduction <add>, %42, %cst_30 [1] : vector<2x32xf32> to vector<2xf32>
    %48 = vector.shape_cast %47 : vector<2xf32> to vector<2x1xf32>
    %cst_31 = arith.constant 3.200000e+01 : f32
    %49 = vector.broadcast %cst_31 : f32 to vector<2x1xf32>
    %50 = arith.divf %48, %49 : vector<2x1xf32>
    %51 = vector.broadcast %50 : vector<2x1xf32> to vector<2x32xf32>
    %52 = arith.subf %42, %51 : vector<2x32xf32>
    %53 = arith.mulf %52, %52 : vector<2x32xf32>
    %cst_32 = arith.constant dense<0.000000e+00> : vector<2xf32>
    %54 = vector.multi_reduction <add>, %53, %cst_32 [1] : vector<2x32xf32> to vector<2xf32>
    %55 = vector.shape_cast %54 : vector<2xf32> to vector<2x1xf32>
    %cst_33 = arith.constant 3.200000e+01 : f32
    %56 = vector.broadcast %cst_33 : f32 to vector<2x1xf32>
    %57 = arith.divf %55, %56 : vector<2x1xf32>
    %58 = vector.broadcast %50 : vector<2x1xf32> to vector<2x32xf32>
    %59 = arith.subf %42, %58 : vector<2x32xf32>
    %cst_34 = arith.constant 9.99999974E-6 : f32
    %60 = vector.broadcast %cst_34 : f32 to vector<2x1xf32>
    %61 = arith.addf %57, %60 : vector<2x1xf32>
    %62 = math.rsqrt %61 : vector<2x1xf32>
    %63 = vector.broadcast %62 : vector<2x1xf32> to vector<2x32xf32>
    %64 = arith.mulf %59, %63 : vector<2x32xf32>
    %65 = vector.broadcast %44 : vector<1x32xf32> to vector<2x32xf32>
    %66 = arith.mulf %64, %65 : vector<2x32xf32>
    %67 = vector.broadcast %46 : vector<1x32xf32> to vector<2x32xf32>
    %68 = arith.addf %66, %67 : vector<2x32xf32>
    %69 = arith.truncf %68 : vector<2x32xf32> to vector<2x32xbf16>
    %c0_35 = arith.constant 0 : index
    %c0_36 = arith.constant 0 : index
    %c0_37 = arith.constant 0 : index
    %70 = vector.load %arg12[%c0_35, %c0_36, %c0_37] : memref<1x32x128xbf16, #tpu.memory_space<vmem>>, vector<1x32x128xbf16>
    %71 = vector.shape_cast %70 : vector<1x32x128xbf16> to vector<32x128xbf16>
    %cst_38 = arith.constant dense<0.000000e+00> : vector<2x128xf32>
    %72 = tpu.matmul %69, %71, %cst_38 {dimension_numbers = #tpu.dot_dimension_numbers<[1], [0], [0], [1], [0, 0, 1, 1], [], []>} : vector<2x32xbf16>, vector<32x128xbf16>, vector<2x128xf32> -> vector<2x128xf32>
    %c0_39 = arith.constant 0 : index
    %c0_40 = arith.constant 0 : index
    %c0_41 = arith.constant 0 : index
    %73 = vector.load %arg13[%c0_39, %c0_40, %c0_41] : memref<1x1x128xf32, #tpu.memory_space<vmem>>, vector<1x1x128xf32>
    %74 = vector.shape_cast %73 : vector<1x1x128xf32> to vector<1x128xf32>
    %75 = vector.broadcast %74 : vector<1x128xf32> to vector<2x128xf32>
    %76 = arith.addf %72, %75 : vector<2x128xf32>
    %cst_42 = arith.constant 5.000000e-01 : f32
    %77 = vector.broadcast %cst_42 : f32 to vector<2x128xf32>
    %78 = arith.mulf %77, %76 : vector<2x128xf32>
    %cst_43 = arith.constant 4.471500e-02 : f32
    %79 = vector.broadcast %cst_43 : f32 to vector<2x128xf32>
    %80 = arith.mulf %79, %76 : vector<2x128xf32>
    %81 = arith.mulf %80, %76 : vector<2x128xf32>
    %82 = arith.mulf %81, %76 : vector<2x128xf32>
    %83 = arith.addf %76, %82 : vector<2x128xf32>
    %cst_44 = arith.constant 0.797884583 : f32
    %84 = vector.broadcast %cst_44 : f32 to vector<2x128xf32>
    %85 = arith.mulf %84, %83 : vector<2x128xf32>
    %86 = math.tanh %85 : vector<2x128xf32>
    %cst_45 = arith.constant 1.000000e+00 : f32
    %87 = vector.broadcast %cst_45 : f32 to vector<2x128xf32>
    %88 = arith.addf %87, %86 : vector<2x128xf32>
    %89 = arith.mulf %78, %88 : vector<2x128xf32>
    %90 = arith.truncf %89 : vector<2x128xf32> to vector<2x128xbf16>
    %c0_46 = arith.constant 0 : index
    %c0_47 = arith.constant 0 : index
    %c0_48 = arith.constant 0 : index
    %91 = vector.load %arg14[%c0_46, %c0_47, %c0_48] : memref<1x128x32xbf16, #tpu.memory_space<vmem>>, vector<1x128x32xbf16>
    %92 = vector.shape_cast %91 : vector<1x128x32xbf16> to vector<128x32xbf16>
    %cst_49 = arith.constant dense<0.000000e+00> : vector<2x32xf32>
    %93 = tpu.matmul %90, %92, %cst_49 {dimension_numbers = #tpu.dot_dimension_numbers<[1], [0], [0], [1], [0, 0, 1, 1], [], []>} : vector<2x128xbf16>, vector<128x32xbf16>, vector<2x32xf32> -> vector<2x32xf32>
    %c0_50 = arith.constant 0 : index
    %c0_51 = arith.constant 0 : index
    %c0_52 = arith.constant 0 : index
    %94 = vector.load %arg15[%c0_50, %c0_51, %c0_52] : memref<1x1x32xf32, #tpu.memory_space<vmem>>, vector<1x1x32xf32>
    %95 = vector.shape_cast %94 : vector<1x1x32xf32> to vector<1x32xf32>
    %96 = vector.broadcast %95 : vector<1x32xf32> to vector<2x32xf32>
    %97 = arith.addf %93, %96 : vector<2x32xf32>
    %98 = arith.addf %42, %97 : vector<2x32xf32>
    %c0_53 = arith.constant 0 : index
    %c0_54 = arith.constant 0 : index
    %99 = vector.load %arg20[%c0_53, %c0_54] : memref<2x32xf32, #tpu.memory_space<vmem>>, vector<2x32xf32>
    tpu.vector_store %arg20[%c0_53, %c0_54], %98 {strides = array<i32>} : memref<2x32xf32, #tpu.memory_space<vmem>>, vector<2x32xf32>,
    %c1_i32 = arith.constant 1 : i32
    %100 = arith.cmpi eq, %arg0, %c1_i32 : i32
    %101 = arith.extui %100 : i1 to i32
    %c0_i32_55 = arith.constant 0 : i32
    %102 = arith.cmpi ne, %101, %c0_i32_55 : i32
    scf.if %102 {
      %c0_56 = arith.constant 0 : index
      %c0_57 = arith.constant 0 : index
      %103 = vector.load %arg16[%c0_56, %c0_57] : memref<1x32xf32, #tpu.memory_space<vmem>>, vector<1x32xf32>
      %c0_58 = arith.constant 0 : index
      %c0_59 = arith.constant 0 : index
      %104 = vector.load %arg17[%c0_58, %c0_59] : memref<1x32xf32, #tpu.memory_space<vmem>>, vector<1x32xf32>
      %cst_60 = arith.constant dense<0.000000e+00> : vector<2xf32>
      %105 = vector.multi_reduction <add>, %98, %cst_60 [1] : vector<2x32xf32> to vector<2xf32>
      %106 = vector.shape_cast %105 : vector<2xf32> to vector<2x1xf32>
      %cst_61 = arith.constant 3.200000e+01 : f32
      %107 = vector.broadcast %cst_61 : f32 to vector<2x1xf32>
      %108 = arith.divf %106, %107 : vector<2x1xf32>
      %109 = vector.broadcast %108 : vector<2x1xf32> to vector<2x32xf32>
      %110 = arith.subf %98, %109 : vector<2x32xf32>
      %111 = arith.mulf %110, %110 : vector<2x32xf32>
      %cst_62 = arith.constant dense<0.000000e+00> : vector<2xf32>
      %112 = vector.multi_reduction <add>, %111, %cst_62 [1] : vector<2x32xf32> to vector<2xf32>
      %113 = vector.shape_cast %112 : vector<2xf32> to vector<2x1xf32>
      %cst_63 = arith.constant 3.200000e+01 : f32
      %114 = vector.broadcast %cst_63 : f32 to vector<2x1xf32>
      %115 = arith.divf %113, %114 : vector<2x1xf32>
      %116 = vector.broadcast %108 : vector<2x1xf32> to vector<2x32xf32>
      %117 = arith.subf %98, %116 : vector<2x32xf32>
      %cst_64 = arith.constant 9.99999974E-6 : f32
      %118 = vector.broadcast %cst_64 : f32 to vector<2x1xf32>
      %119 = arith.addf %115, %118 : vector<2x1xf32>
      %120 = math.rsqrt %119 : vector<2x1xf32>
      %121 = vector.broadcast %120 : vector<2x1xf32> to vector<2x32xf32>
      %122 = arith.mulf %117, %121 : vector<2x32xf32>
      %123 = vector.broadcast %103 : vector<1x32xf32> to vector<2x32xf32>
      %124 = arith.mulf %122, %123 : vector<2x32xf32>
      %125 = vector.broadcast %104 : vector<1x32xf32> to vector<2x32xf32>
      %126 = arith.addf %124, %125 : vector<2x32xf32>
      %127 = arith.truncf %126 : vector<2x32xf32> to vector<2x32xbf16>
      %c0_65 = arith.constant 0 : index
      %c0_66 = arith.constant 0 : index
      %128 = vector.load %arg18[%c0_65, %c0_66] : memref<32x64xbf16, #tpu.memory_space<vmem>>, vector<32x64xbf16>
      %cst_67 = arith.constant dense<0.000000e+00> : vector<2x64xf32>
      %129 = tpu.matmul %127, %128, %cst_67 {dimension_numbers = #tpu.dot_dimension_numbers<[1], [0], [0], [1], [0, 0, 1, 1], [], []>} : vector<2x32xbf16>, vector<32x64xbf16>, vector<2x64xf32> -> vector<2x64xf32>
      %c0_68 = arith.constant 0 : index
      %c0_69 = arith.constant 0 : index
      %130 = vector.load %arg19[%c0_68, %c0_69] : memref<2x64xf32, #tpu.memory_space<vmem>>, vector<2x64xf32>
      tpu.vector_store %arg19[%c0_68, %c0_69], %129 {strides = array<i32>} : memref<2x64xf32, #tpu.memory_space<vmem>>, vector<2x64xf32>,
    } else {
    }
    return
  }
  func.func @transform_0(%arg0: i32) -> (i32, i32) {
    %c0_i32 = arith.constant 0 : i32
    %c0_i32_0 = arith.constant 0 : i32
    %c0_i32_1 = arith.constant 0 : i32
    return %c0_i32, %c0_i32_0 : i32, i32
  }
  func.func @transform_1(%arg0: i32) -> (i32, i32) {
    %c0_i32 = arith.constant 0 : i32
    %c0_i32_0 = arith.constant 0 : i32
    %c0_i32_1 = arith.constant 0 : i32
    return %c0_i32, %c0_i32_0 : i32, i32
  }
  func.func @transform_2(%arg0: i32) -> (i32, i32) {
    %c0_i32 = arith.constant 0 : i32
    %c0_i32_0 = arith.constant 0 : i32
    %c0_i32_1 = arith.constant 0 : i32
    return %c0_i32, %c0_i32_0 : i32, i32
  }
  func.func @transform_3(%arg0: i32) -> (i32, i32) {
    %c0_i32 = arith.constant 0 : i32
    %c0_i32_0 = arith.constant 0 : i32
    %c0_i32_1 = arith.constant 0 : i32
    return %c0_i32, %c0_i32_0 : i32, i32
  }
  func.func @transform_4(%arg0: i32) -> (i32, i32, i32) {
    %c0_i32 = arith.constant 0 : i32
    %c0_i32_0 = arith.constant 0 : i32
    %c0_i32_1 = arith.constant 0 : i32
    return %arg0, %c0_i32, %c0_i32_0 : i32, i32, i32
  }
  func.func @transform_5(%arg0: i32) -> (i32, i32, i32) {
    %c0_i32 = arith.constant 0 : i32
    %c0_i32_0 = arith.constant 0 : i32
    %c0_i32_1 = arith.constant 0 : i32
    return %arg0, %c0_i32, %c0_i32_0 : i32, i32, i32
  }
  func.func @transform_6(%arg0: i32) -> (i32, i32, i32, i32) {
    %c2_i32 = arith.constant 2 : i32
    %c0_i32 = arith.constant 0 : i32
    %c0_i32_0 = arith.constant 0 : i32
    %c0_i32_1 = arith.constant 0 : i32
    return %arg0, %c2_i32, %c0_i32, %c0_i32_0 : i32, i32, i32, i32
  }
  func.func @transform_7(%arg0: i32) -> (i32, i32, i32) {
    %c0_i32 = arith.constant 0 : i32
    %c0_i32_0 = arith.constant 0 : i32
    %c0_i32_1 = arith.constant 0 : i32
    return %arg0, %c0_i32, %c0_i32_0 : i32, i32, i32
  }
  func.func @transform_8(%arg0: i32) -> (i32, i32, i32) {
    %c0_i32 = arith.constant 0 : i32
    %c0_i32_0 = arith.constant 0 : i32
    %c0_i32_1 = arith.constant 0 : i32
    return %arg0, %c0_i32, %c0_i32_0 : i32, i32, i32
  }
  func.func @transform_9(%arg0: i32) -> (i32, i32, i32) {
    %c0_i32 = arith.constant 0 : i32
    %c0_i32_0 = arith.constant 0 : i32
    %c0_i32_1 = arith.constant 0 : i32
    return %arg0, %c0_i32, %c0_i32_0 : i32, i32, i32
  }
  func.func @transform_10(%arg0: i32) -> (i32, i32, i32) {
    %c0_i32 = arith.constant 0 : i32
    %c0_i32_0 = arith.constant 0 : i32
    %c0_i32_1 = arith.constant 0 : i32
    return %arg0, %c0_i32, %c0_i32_0 : i32, i32, i32
  }
  func.func @transform_11(%arg0: i32) -> (i32, i32, i32) {
    %c0_i32 = arith.constant 0 : i32
    %c0_i32_0 = arith.constant 0 : i32
    %c0_i32_1 = arith.constant 0 : i32
    return %arg0, %c0_i32, %c0_i32_0 : i32, i32, i32
  }
  func.func @transform_12(%arg0: i32) -> (i32, i32, i32) {
    %c0_i32 = arith.constant 0 : i32
    %c0_i32_0 = arith.constant 0 : i32
    %c0_i32_1 = arith.constant 0 : i32
    return %arg0, %c0_i32, %c0_i32_0 : i32, i32, i32
  }
  func.func @transform_13(%arg0: i32) -> (i32, i32, i32) {
    %c0_i32 = arith.constant 0 : i32
    %c0_i32_0 = arith.constant 0 : i32
    %c0_i32_1 = arith.constant 0 : i32
    return %arg0, %c0_i32, %c0_i32_0 : i32, i32, i32
  }
  func.func @transform_14(%arg0: i32) -> (i32, i32, i32) {
    %c0_i32 = arith.constant 0 : i32
    %c0_i32_0 = arith.constant 0 : i32
    %c0_i32_1 = arith.constant 0 : i32
    return %arg0, %c0_i32, %c0_i32_0 : i32, i32, i32
  }
  func.func @transform_15(%arg0: i32) -> (i32, i32) {
    %c0_i32 = arith.constant 0 : i32
    %c0_i32_0 = arith.constant 0 : i32
    %c0_i32_1 = arith.constant 0 : i32
    return %c0_i32, %c0_i32_0 : i32, i32
  }
  func.func @transform_16(%arg0: i32) -> (i32, i32) {
    %c0_i32 = arith.constant 0 : i32
    %c0_i32_0 = arith.constant 0 : i32
    %c0_i32_1 = arith.constant 0 : i32
    return %c0_i32, %c0_i32_0 : i32, i32
  }
  func.func @transform_17(%arg0: i32) -> (i32, i32) {
    %c0_i32 = arith.constant 0 : i32
    %c0_i32_0 = arith.constant 0 : i32
    %c0_i32_1 = arith.constant 0 : i32
    return %c0_i32, %c0_i32_0 : i32, i32
  }
  func.func @transform_18(%arg0: i32) -> (i32, i32) {
    %c0_i32 = arith.constant 0 : i32
    %c0_i32_0 = arith.constant 0 : i32
    %c0_i32_1 = arith.constant 0 : i32
    return %c0_i32, %c0_i32_0 : i32, i32
  }
}

module attributes {stable_mosaic.version = 11 : i64} {
  func.func @_bert_encoder_kernel(%arg0: i32, %arg1: memref<16x32xf32, #tpu.memory_space<vmem>>, %arg2: memref<2x8xf32, #tpu.memory_space<vmem>>, %arg3: memref<1x32xf32, #tpu.memory_space<vmem>>, %arg4: memref<1x32xf32, #tpu.memory_space<vmem>>, %arg5: memref<1x3x32x32xbf16, #tpu.memory_space<vmem>>, %arg6: memref<1x3x1x32xf32, #tpu.memory_space<vmem>>, %arg7: memref<1x32x32xbf16, #tpu.memory_space<vmem>>, %arg8: memref<1x1x32xf32, #tpu.memory_space<vmem>>, %arg9: memref<1x1x32xf32, #tpu.memory_space<vmem>>, %arg10: memref<1x1x32xf32, #tpu.memory_space<vmem>>, %arg11: memref<1x32x128xbf16, #tpu.memory_space<vmem>>, %arg12: memref<1x1x128xf32, #tpu.memory_space<vmem>>, %arg13: memref<1x128x32xbf16, #tpu.memory_space<vmem>>, %arg14: memref<1x1x32xf32, #tpu.memory_space<vmem>>, %arg15: memref<1x1x32xf32, #tpu.memory_space<vmem>>, %arg16: memref<1x1x32xf32, #tpu.memory_space<vmem>>, %arg17: memref<16x32xf32, #tpu.memory_space<vmem>>) attributes {dimension_semantics = [#tpu.dimension_semantics<arbitrary>], iteration_bounds = array<i64: 2>, scalar_prefetch = 0 : i64, scratch_operands = 0 : i64, tpu.core_type = #tpu.core_type<tc>, window_params = [{pipeline_mode = #tpu.pipeline_mode<synchronous>, transform_indices = @transform_0, window_bounds = array<i64: 16, 32>}, {pipeline_mode = #tpu.pipeline_mode<synchronous>, transform_indices = @transform_1, window_bounds = array<i64: 2, 8>}, {pipeline_mode = #tpu.pipeline_mode<synchronous>, transform_indices = @transform_2, window_bounds = array<i64: 1, 32>}, {pipeline_mode = #tpu.pipeline_mode<synchronous>, transform_indices = @transform_3, window_bounds = array<i64: 1, 32>}, {transform_indices = @transform_4, window_bounds = array<i64: 1, 3, 32, 32>}, {transform_indices = @transform_5, window_bounds = array<i64: 1, 3, 1, 32>}, {transform_indices = @transform_6, window_bounds = array<i64: 1, 32, 32>}, {transform_indices = @transform_7, window_bounds = array<i64: 1, 1, 32>}, {transform_indices = @transform_8, window_bounds = array<i64: 1, 1, 32>}, {transform_indices = @transform_9, window_bounds = array<i64: 1, 1, 32>}, {transform_indices = @transform_10, window_bounds = array<i64: 1, 32, 128>}, {transform_indices = @transform_11, window_bounds = array<i64: 1, 1, 128>}, {transform_indices = @transform_12, window_bounds = array<i64: 1, 128, 32>}, {transform_indices = @transform_13, window_bounds = array<i64: 1, 1, 32>}, {transform_indices = @transform_14, window_bounds = array<i64: 1, 1, 32>}, {transform_indices = @transform_15, window_bounds = array<i64: 1, 1, 32>}, {pipeline_mode = #tpu.pipeline_mode<synchronous>, transform_indices = @transform_16, window_bounds = array<i64: 16, 32>}]} {
    %c0_i32 = arith.constant 0 : i32
    %0 = arith.cmpi eq, %arg0, %c0_i32 : i32
    %1 = arith.extui %0 : i1 to i32
    %c0_i32_0 = arith.constant 0 : i32
    %2 = arith.cmpi ne, %1, %c0_i32_0 : i32
    scf.if %2 {
      %c0_104 = arith.constant 0 : index
      %c0_105 = arith.constant 0 : index
      %236 = vector.load %arg1[%c0_104, %c0_105] : memref<16x32xf32, #tpu.memory_space<vmem>>, vector<16x32xf32>
      %c0_106 = arith.constant 0 : index
      %c0_107 = arith.constant 0 : index
      %237 = vector.load %arg3[%c0_106, %c0_107] : memref<1x32xf32, #tpu.memory_space<vmem>>, vector<1x32xf32>
      %c0_108 = arith.constant 0 : index
      %c0_109 = arith.constant 0 : index
      %238 = vector.load %arg4[%c0_108, %c0_109] : memref<1x32xf32, #tpu.memory_space<vmem>>, vector<1x32xf32>
      %cst_110 = arith.constant dense<0.000000e+00> : vector<16xf32>
      %239 = vector.multi_reduction <add>, %236, %cst_110 [1] : vector<16x32xf32> to vector<16xf32>
      %240 = vector.shape_cast %239 : vector<16xf32> to vector<16x1xf32>
      %cst_111 = arith.constant 3.200000e+01 : f32
      %241 = vector.broadcast %cst_111 : f32 to vector<16x1xf32>
      %242 = arith.divf %240, %241 : vector<16x1xf32>
      %243 = vector.broadcast %242 : vector<16x1xf32> to vector<16x32xf32>
      %244 = arith.subf %236, %243 : vector<16x32xf32>
      %245 = arith.mulf %244, %244 : vector<16x32xf32>
      %cst_112 = arith.constant dense<0.000000e+00> : vector<16xf32>
      %246 = vector.multi_reduction <add>, %245, %cst_112 [1] : vector<16x32xf32> to vector<16xf32>
      %247 = vector.shape_cast %246 : vector<16xf32> to vector<16x1xf32>
      %cst_113 = arith.constant 3.200000e+01 : f32
      %248 = vector.broadcast %cst_113 : f32 to vector<16x1xf32>
      %249 = arith.divf %247, %248 : vector<16x1xf32>
      %250 = vector.broadcast %242 : vector<16x1xf32> to vector<16x32xf32>
      %251 = arith.subf %236, %250 : vector<16x32xf32>
      %cst_114 = arith.constant 9.99999996E-13 : f32
      %252 = vector.broadcast %cst_114 : f32 to vector<16x1xf32>
      %253 = arith.addf %249, %252 : vector<16x1xf32>
      %254 = math.rsqrt %253 : vector<16x1xf32>
      %255 = vector.broadcast %254 : vector<16x1xf32> to vector<16x32xf32>
      %256 = arith.mulf %251, %255 : vector<16x32xf32>
      %257 = vector.broadcast %237 : vector<1x32xf32> to vector<16x32xf32>
      %258 = arith.mulf %256, %257 : vector<16x32xf32>
      %259 = vector.broadcast %238 : vector<1x32xf32> to vector<16x32xf32>
      %260 = arith.addf %258, %259 : vector<16x32xf32>
      %c0_115 = arith.constant 0 : index
      %c0_116 = arith.constant 0 : index
      %261 = vector.load %arg17[%c0_115, %c0_116] : memref<16x32xf32, #tpu.memory_space<vmem>>, vector<16x32xf32>
      tpu.vector_store %arg17[%c0_115, %c0_116], %260 {strides = array<i32>} : memref<16x32xf32, #tpu.memory_space<vmem>>, vector<16x32xf32>,
    } else {
    }
    %c0 = arith.constant 0 : index
    %c0_1 = arith.constant 0 : index
    %3 = vector.load %arg17[%c0, %c0_1] : memref<16x32xf32, #tpu.memory_space<vmem>>, vector<16x32xf32>
    %4 = arith.truncf %3 : vector<16x32xf32> to vector<16x32xbf16>
    %c0_2 = arith.constant 0 : index
    %c0_3 = arith.constant 0 : index
    %c0_4 = arith.constant 0 : index
    %c0_5 = arith.constant 0 : index
    %5 = vector.load %arg5[%c0_2, %c0_3, %c0_4, %c0_5] : memref<1x3x32x32xbf16, #tpu.memory_space<vmem>>, vector<1x1x32x32xbf16>
    %6 = vector.shape_cast %5 : vector<1x1x32x32xbf16> to vector<32x32xbf16>
    %cst = arith.constant dense<0.000000e+00> : vector<16x32xf32>
    %7 = tpu.matmul %4, %6, %cst {dimension_numbers = #tpu.dot_dimension_numbers<[1], [0], [0], [1], [0, 0, 1, 1], [], []>} : vector<16x32xbf16>, vector<32x32xbf16>, vector<16x32xf32> -> vector<16x32xf32>
    %c0_6 = arith.constant 0 : index
    %c0_7 = arith.constant 0 : index
    %c0_8 = arith.constant 0 : index
    %c0_9 = arith.constant 0 : index
    %8 = vector.load %arg6[%c0_6, %c0_7, %c0_8, %c0_9] : memref<1x3x1x32xf32, #tpu.memory_space<vmem>>, vector<1x1x1x32xf32>
    %9 = vector.shape_cast %8 : vector<1x1x1x32xf32> to vector<1x32xf32>
    %10 = vector.broadcast %9 : vector<1x32xf32> to vector<16x32xf32>
    %11 = arith.addf %7, %10 : vector<16x32xf32>
    %c0_10 = arith.constant 0 : index
    %c1 = arith.constant 1 : index
    %c0_11 = arith.constant 0 : index
    %c0_12 = arith.constant 0 : index
    %12 = vector.load %arg5[%c0_10, %c1, %c0_11, %c0_12] : memref<1x3x32x32xbf16, #tpu.memory_space<vmem>>, vector<1x1x32x32xbf16>
    %13 = vector.shape_cast %12 : vector<1x1x32x32xbf16> to vector<32x32xbf16>
    %cst_13 = arith.constant dense<0.000000e+00> : vector<16x32xf32>
    %14 = tpu.matmul %4, %13, %cst_13 {dimension_numbers = #tpu.dot_dimension_numbers<[1], [0], [0], [1], [0, 0, 1, 1], [], []>} : vector<16x32xbf16>, vector<32x32xbf16>, vector<16x32xf32> -> vector<16x32xf32>
    %c0_14 = arith.constant 0 : index
    %c1_15 = arith.constant 1 : index
    %c0_16 = arith.constant 0 : index
    %c0_17 = arith.constant 0 : index
    %15 = vector.load %arg6[%c0_14, %c1_15, %c0_16, %c0_17] : memref<1x3x1x32xf32, #tpu.memory_space<vmem>>, vector<1x1x1x32xf32>
    %16 = vector.shape_cast %15 : vector<1x1x1x32xf32> to vector<1x32xf32>
    %17 = vector.broadcast %16 : vector<1x32xf32> to vector<16x32xf32>
    %18 = arith.addf %14, %17 : vector<16x32xf32>
    %c0_18 = arith.constant 0 : index
    %c2 = arith.constant 2 : index
    %c0_19 = arith.constant 0 : index
    %c0_20 = arith.constant 0 : index
    %19 = vector.load %arg5[%c0_18, %c2, %c0_19, %c0_20] : memref<1x3x32x32xbf16, #tpu.memory_space<vmem>>, vector<1x1x32x32xbf16>
    %20 = vector.shape_cast %19 : vector<1x1x32x32xbf16> to vector<32x32xbf16>
    %cst_21 = arith.constant dense<0.000000e+00> : vector<16x32xf32>
    %21 = tpu.matmul %4, %20, %cst_21 {dimension_numbers = #tpu.dot_dimension_numbers<[1], [0], [0], [1], [0, 0, 1, 1], [], []>} : vector<16x32xbf16>, vector<32x32xbf16>, vector<16x32xf32> -> vector<16x32xf32>
    %c0_22 = arith.constant 0 : index
    %c2_23 = arith.constant 2 : index
    %c0_24 = arith.constant 0 : index
    %c0_25 = arith.constant 0 : index
    %22 = vector.load %arg6[%c0_22, %c2_23, %c0_24, %c0_25] : memref<1x3x1x32xf32, #tpu.memory_space<vmem>>, vector<1x1x1x32xf32>
    %23 = vector.shape_cast %22 : vector<1x1x1x32xf32> to vector<1x32xf32>
    %24 = vector.broadcast %23 : vector<1x32xf32> to vector<16x32xf32>
    %25 = arith.addf %21, %24 : vector<16x32xf32>
    %26 = vector.shape_cast %11 : vector<16x32xf32> to vector<2x8x32xf32>
    %27 = vector.shape_cast %18 : vector<16x32xf32> to vector<2x8x32xf32>
    %28 = vector.shape_cast %25 : vector<16x32xf32> to vector<2x8x32xf32>
    %c0_26 = arith.constant 0 : index
    %c0_27 = arith.constant 0 : index
    %29 = vector.load %arg2[%c0_26, %c0_27] : memref<2x8xf32, #tpu.memory_space<vmem>>, vector<2x8xf32>
    %30 = vector.shape_cast %29 : vector<2x8xf32> to vector<2x1x8xf32>
    %31 = vector.extract_strided_slice %26 {offsets = [0, 0, 0], sizes = [2, 8, 8], strides = [1, 1, 1]} : vector<2x8x32xf32> to vector<2x8x8xf32>
    %32 = arith.truncf %31 : vector<2x8x8xf32> to vector<2x8x8xbf16>
    %33 = vector.extract_strided_slice %27 {offsets = [0, 0, 0], sizes = [2, 8, 8], strides = [1, 1, 1]} : vector<2x8x32xf32> to vector<2x8x8xf32>
    %34 = arith.truncf %33 : vector<2x8x8xf32> to vector<2x8x8xbf16>
    %35 = vector.extract_strided_slice %28 {offsets = [0, 0, 0], sizes = [2, 8, 8], strides = [1, 1, 1]} : vector<2x8x32xf32> to vector<2x8x8xf32>
    %36 = arith.truncf %35 : vector<2x8x8xf32> to vector<2x8x8xbf16>
    "tpu.trace_start"() <{level = 10 : i32, message = "bqd,bkd->bqk"}> : () -> ()
    %cst_28 = arith.constant dense<0.000000e+00> : vector<2x8x8xf32>
    %37 = tpu.matmul %32, %34, %cst_28 {dimension_numbers = #tpu.dot_dimension_numbers<[2], [2], [1], [1], [0, 0, 0, 1, 1, 1], [0], [0]>} : vector<2x8x8xbf16>, vector<2x8x8xbf16>, vector<2x8x8xf32> -> vector<2x8x8xf32>
    "tpu.trace_stop"() : () -> ()
    %38 = vector.broadcast %30 : vector<2x1x8xf32> to vector<2x8x8xf32>
    %39 = arith.addf %37, %38 : vector<2x8x8xf32>
    %cst_29 = arith.constant dense<0xFF800000> : vector<2x8xf32>
    %40 = vector.multi_reduction <maximumf>, %39, %cst_29 [2] : vector<2x8x8xf32> to vector<2x8xf32>
    %41 = vector.shape_cast %40 : vector<2x8xf32> to vector<2x8x1xf32>
    %42 = vector.broadcast %41 : vector<2x8x1xf32> to vector<2x8x8xf32>
    %43 = arith.subf %39, %42 : vector<2x8x8xf32>
    %44 = math.exp %43 : vector<2x8x8xf32>
    %cst_30 = arith.constant dense<0.000000e+00> : vector<2x8xf32>
    %45 = vector.multi_reduction <add>, %44, %cst_30 [2] : vector<2x8x8xf32> to vector<2x8xf32>
    %46 = vector.shape_cast %45 : vector<2x8xf32> to vector<2x8x1xf32>
    %47 = tpu.reciprocal %46 {approx = true} : vector<2x8x1xf32> -> vector<2x8x1xf32>
    %48 = vector.broadcast %47 : vector<2x8x1xf32> to vector<2x8x8xf32>
    %49 = arith.mulf %44, %48 : vector<2x8x8xf32>
    %50 = arith.truncf %49 : vector<2x8x8xf32> to vector<2x8x8xbf16>
    "tpu.trace_start"() <{level = 10 : i32, message = "bqk,bkd->bqd"}> : () -> ()
    %cst_31 = arith.constant dense<0.000000e+00> : vector<2x8x8xf32>
    %51 = tpu.matmul %50, %36, %cst_31 {dimension_numbers = #tpu.dot_dimension_numbers<[2], [1], [1], [2], [0, 0, 0, 1, 1, 2], [0], [0]>} : vector<2x8x8xbf16>, vector<2x8x8xbf16>, vector<2x8x8xf32> -> vector<2x8x8xf32>
    "tpu.trace_stop"() : () -> ()
    %52 = vector.extract_strided_slice %26 {offsets = [0, 0, 8], sizes = [2, 8, 8], strides = [1, 1, 1]} : vector<2x8x32xf32> to vector<2x8x8xf32>
    %53 = arith.truncf %52 : vector<2x8x8xf32> to vector<2x8x8xbf16>
    %54 = vector.extract_strided_slice %27 {offsets = [0, 0, 8], sizes = [2, 8, 8], strides = [1, 1, 1]} : vector<2x8x32xf32> to vector<2x8x8xf32>
    %55 = arith.truncf %54 : vector<2x8x8xf32> to vector<2x8x8xbf16>
    %56 = vector.extract_strided_slice %28 {offsets = [0, 0, 8], sizes = [2, 8, 8], strides = [1, 1, 1]} : vector<2x8x32xf32> to vector<2x8x8xf32>
    %57 = arith.truncf %56 : vector<2x8x8xf32> to vector<2x8x8xbf16>
    "tpu.trace_start"() <{level = 10 : i32, message = "bqd,bkd->bqk"}> : () -> ()
    %cst_32 = arith.constant dense<0.000000e+00> : vector<2x8x8xf32>
    %58 = tpu.matmul %53, %55, %cst_32 {dimension_numbers = #tpu.dot_dimension_numbers<[2], [2], [1], [1], [0, 0, 0, 1, 1, 1], [0], [0]>} : vector<2x8x8xbf16>, vector<2x8x8xbf16>, vector<2x8x8xf32> -> vector<2x8x8xf32>
    "tpu.trace_stop"() : () -> ()
    %59 = vector.broadcast %30 : vector<2x1x8xf32> to vector<2x8x8xf32>
    %60 = arith.addf %58, %59 : vector<2x8x8xf32>
    %cst_33 = arith.constant dense<0xFF800000> : vector<2x8xf32>
    %61 = vector.multi_reduction <maximumf>, %60, %cst_33 [2] : vector<2x8x8xf32> to vector<2x8xf32>
    %62 = vector.shape_cast %61 : vector<2x8xf32> to vector<2x8x1xf32>
    %63 = vector.broadcast %62 : vector<2x8x1xf32> to vector<2x8x8xf32>
    %64 = arith.subf %60, %63 : vector<2x8x8xf32>
    %65 = math.exp %64 : vector<2x8x8xf32>
    %cst_34 = arith.constant dense<0.000000e+00> : vector<2x8xf32>
    %66 = vector.multi_reduction <add>, %65, %cst_34 [2] : vector<2x8x8xf32> to vector<2x8xf32>
    %67 = vector.shape_cast %66 : vector<2x8xf32> to vector<2x8x1xf32>
    %68 = tpu.reciprocal %67 {approx = true} : vector<2x8x1xf32> -> vector<2x8x1xf32>
    %69 = vector.broadcast %68 : vector<2x8x1xf32> to vector<2x8x8xf32>
    %70 = arith.mulf %65, %69 : vector<2x8x8xf32>
    %71 = arith.truncf %70 : vector<2x8x8xf32> to vector<2x8x8xbf16>
    "tpu.trace_start"() <{level = 10 : i32, message = "bqk,bkd->bqd"}> : () -> ()
    %cst_35 = arith.constant dense<0.000000e+00> : vector<2x8x8xf32>
    %72 = tpu.matmul %71, %57, %cst_35 {dimension_numbers = #tpu.dot_dimension_numbers<[2], [1], [1], [2], [0, 0, 0, 1, 1, 2], [0], [0]>} : vector<2x8x8xbf16>, vector<2x8x8xbf16>, vector<2x8x8xf32> -> vector<2x8x8xf32>
    "tpu.trace_stop"() : () -> ()
    %73 = vector.extract_strided_slice %26 {offsets = [0, 0, 16], sizes = [2, 8, 8], strides = [1, 1, 1]} : vector<2x8x32xf32> to vector<2x8x8xf32>
    %74 = arith.truncf %73 : vector<2x8x8xf32> to vector<2x8x8xbf16>
    %75 = vector.extract_strided_slice %27 {offsets = [0, 0, 16], sizes = [2, 8, 8], strides = [1, 1, 1]} : vector<2x8x32xf32> to vector<2x8x8xf32>
    %76 = arith.truncf %75 : vector<2x8x8xf32> to vector<2x8x8xbf16>
    %77 = vector.extract_strided_slice %28 {offsets = [0, 0, 16], sizes = [2, 8, 8], strides = [1, 1, 1]} : vector<2x8x32xf32> to vector<2x8x8xf32>
    %78 = arith.truncf %77 : vector<2x8x8xf32> to vector<2x8x8xbf16>
    "tpu.trace_start"() <{level = 10 : i32, message = "bqd,bkd->bqk"}> : () -> ()
    %cst_36 = arith.constant dense<0.000000e+00> : vector<2x8x8xf32>
    %79 = tpu.matmul %74, %76, %cst_36 {dimension_numbers = #tpu.dot_dimension_numbers<[2], [2], [1], [1], [0, 0, 0, 1, 1, 1], [0], [0]>} : vector<2x8x8xbf16>, vector<2x8x8xbf16>, vector<2x8x8xf32> -> vector<2x8x8xf32>
    "tpu.trace_stop"() : () -> ()
    %80 = vector.broadcast %30 : vector<2x1x8xf32> to vector<2x8x8xf32>
    %81 = arith.addf %79, %80 : vector<2x8x8xf32>
    %cst_37 = arith.constant dense<0xFF800000> : vector<2x8xf32>
    %82 = vector.multi_reduction <maximumf>, %81, %cst_37 [2] : vector<2x8x8xf32> to vector<2x8xf32>
    %83 = vector.shape_cast %82 : vector<2x8xf32> to vector<2x8x1xf32>
    %84 = vector.broadcast %83 : vector<2x8x1xf32> to vector<2x8x8xf32>
    %85 = arith.subf %81, %84 : vector<2x8x8xf32>
    %86 = math.exp %85 : vector<2x8x8xf32>
    %cst_38 = arith.constant dense<0.000000e+00> : vector<2x8xf32>
    %87 = vector.multi_reduction <add>, %86, %cst_38 [2] : vector<2x8x8xf32> to vector<2x8xf32>
    %88 = vector.shape_cast %87 : vector<2x8xf32> to vector<2x8x1xf32>
    %89 = tpu.reciprocal %88 {approx = true} : vector<2x8x1xf32> -> vector<2x8x1xf32>
    %90 = vector.broadcast %89 : vector<2x8x1xf32> to vector<2x8x8xf32>
    %91 = arith.mulf %86, %90 : vector<2x8x8xf32>
    %92 = arith.truncf %91 : vector<2x8x8xf32> to vector<2x8x8xbf16>
    "tpu.trace_start"() <{level = 10 : i32, message = "bqk,bkd->bqd"}> : () -> ()
    %cst_39 = arith.constant dense<0.000000e+00> : vector<2x8x8xf32>
    %93 = tpu.matmul %92, %78, %cst_39 {dimension_numbers = #tpu.dot_dimension_numbers<[2], [1], [1], [2], [0, 0, 0, 1, 1, 2], [0], [0]>} : vector<2x8x8xbf16>, vector<2x8x8xbf16>, vector<2x8x8xf32> -> vector<2x8x8xf32>
    "tpu.trace_stop"() : () -> ()
    %94 = vector.extract_strided_slice %26 {offsets = [0, 0, 24], sizes = [2, 8, 8], strides = [1, 1, 1]} : vector<2x8x32xf32> to vector<2x8x8xf32>
    %95 = arith.truncf %94 : vector<2x8x8xf32> to vector<2x8x8xbf16>
    %96 = vector.extract_strided_slice %27 {offsets = [0, 0, 24], sizes = [2, 8, 8], strides = [1, 1, 1]} : vector<2x8x32xf32> to vector<2x8x8xf32>
    %97 = arith.truncf %96 : vector<2x8x8xf32> to vector<2x8x8xbf16>
    %98 = vector.extract_strided_slice %28 {offsets = [0, 0, 24], sizes = [2, 8, 8], strides = [1, 1, 1]} : vector<2x8x32xf32> to vector<2x8x8xf32>
    %99 = arith.truncf %98 : vector<2x8x8xf32> to vector<2x8x8xbf16>
    "tpu.trace_start"() <{level = 10 : i32, message = "bqd,bkd->bqk"}> : () -> ()
    %cst_40 = arith.constant dense<0.000000e+00> : vector<2x8x8xf32>
    %100 = tpu.matmul %95, %97, %cst_40 {dimension_numbers = #tpu.dot_dimension_numbers<[2], [2], [1], [1], [0, 0, 0, 1, 1, 1], [0], [0]>} : vector<2x8x8xbf16>, vector<2x8x8xbf16>, vector<2x8x8xf32> -> vector<2x8x8xf32>
    "tpu.trace_stop"() : () -> ()
    %101 = vector.broadcast %30 : vector<2x1x8xf32> to vector<2x8x8xf32>
    %102 = arith.addf %100, %101 : vector<2x8x8xf32>
    %cst_41 = arith.constant dense<0xFF800000> : vector<2x8xf32>
    %103 = vector.multi_reduction <maximumf>, %102, %cst_41 [2] : vector<2x8x8xf32> to vector<2x8xf32>
    %104 = vector.shape_cast %103 : vector<2x8xf32> to vector<2x8x1xf32>
    %105 = vector.broadcast %104 : vector<2x8x1xf32> to vector<2x8x8xf32>
    %106 = arith.subf %102, %105 : vector<2x8x8xf32>
    %107 = math.exp %106 : vector<2x8x8xf32>
    %cst_42 = arith.constant dense<0.000000e+00> : vector<2x8xf32>
    %108 = vector.multi_reduction <add>, %107, %cst_42 [2] : vector<2x8x8xf32> to vector<2x8xf32>
    %109 = vector.shape_cast %108 : vector<2x8xf32> to vector<2x8x1xf32>
    %110 = tpu.reciprocal %109 {approx = true} : vector<2x8x1xf32> -> vector<2x8x1xf32>
    %111 = vector.broadcast %110 : vector<2x8x1xf32> to vector<2x8x8xf32>
    %112 = arith.mulf %107, %111 : vector<2x8x8xf32>
    %113 = arith.truncf %112 : vector<2x8x8xf32> to vector<2x8x8xbf16>
    "tpu.trace_start"() <{level = 10 : i32, message = "bqk,bkd->bqd"}> : () -> ()
    %cst_43 = arith.constant dense<0.000000e+00> : vector<2x8x8xf32>
    %114 = tpu.matmul %113, %99, %cst_43 {dimension_numbers = #tpu.dot_dimension_numbers<[2], [1], [1], [2], [0, 0, 0, 1, 1, 2], [0], [0]>} : vector<2x8x8xbf16>, vector<2x8x8xbf16>, vector<2x8x8xf32> -> vector<2x8x8xf32>
    "tpu.trace_stop"() : () -> ()
    %115 = tpu.concatenate %51, %72, %93, %114 in 2 : vector<2x8x8xf32>, vector<2x8x8xf32>, vector<2x8x8xf32>, vector<2x8x8xf32> -> vector<2x8x32xf32>
    %116 = vector.shape_cast %115 : vector<2x8x32xf32> to vector<16x32xf32>
    %117 = arith.truncf %116 : vector<16x32xf32> to vector<16x32xbf16>
    %c0_44 = arith.constant 0 : index
    %c0_45 = arith.constant 0 : index
    %c0_46 = arith.constant 0 : index
    %118 = vector.load %arg7[%c0_44, %c0_45, %c0_46] : memref<1x32x32xbf16, #tpu.memory_space<vmem>>, vector<1x32x32xbf16>
    %119 = vector.shape_cast %118 : vector<1x32x32xbf16> to vector<32x32xbf16>
    %cst_47 = arith.constant dense<0.000000e+00> : vector<16x32xf32>
    %120 = tpu.matmul %117, %119, %cst_47 {dimension_numbers = #tpu.dot_dimension_numbers<[1], [0], [0], [1], [0, 0, 1, 1], [], []>} : vector<16x32xbf16>, vector<32x32xbf16>, vector<16x32xf32> -> vector<16x32xf32>
    %c0_48 = arith.constant 0 : index
    %c0_49 = arith.constant 0 : index
    %c0_50 = arith.constant 0 : index
    %121 = vector.load %arg8[%c0_48, %c0_49, %c0_50] : memref<1x1x32xf32, #tpu.memory_space<vmem>>, vector<1x1x32xf32>
    %122 = vector.shape_cast %121 : vector<1x1x32xf32> to vector<1x32xf32>
    %123 = vector.broadcast %122 : vector<1x32xf32> to vector<16x32xf32>
    %124 = arith.addf %120, %123 : vector<16x32xf32>
    %125 = arith.addf %124, %3 : vector<16x32xf32>
    %c0_51 = arith.constant 0 : index
    %c0_52 = arith.constant 0 : index
    %c0_53 = arith.constant 0 : index
    %126 = vector.load %arg9[%c0_51, %c0_52, %c0_53] : memref<1x1x32xf32, #tpu.memory_space<vmem>>, vector<1x1x32xf32>
    %127 = vector.shape_cast %126 : vector<1x1x32xf32> to vector<1x32xf32>
    %c0_54 = arith.constant 0 : index
    %c0_55 = arith.constant 0 : index
    %c0_56 = arith.constant 0 : index
    %128 = vector.load %arg10[%c0_54, %c0_55, %c0_56] : memref<1x1x32xf32, #tpu.memory_space<vmem>>, vector<1x1x32xf32>
    %129 = vector.shape_cast %128 : vector<1x1x32xf32> to vector<1x32xf32>
    %cst_57 = arith.constant dense<0.000000e+00> : vector<16xf32>
    %130 = vector.multi_reduction <add>, %125, %cst_57 [1] : vector<16x32xf32> to vector<16xf32>
    %131 = vector.shape_cast %130 : vector<16xf32> to vector<16x1xf32>
    %cst_58 = arith.constant 3.200000e+01 : f32
    %132 = vector.broadcast %cst_58 : f32 to vector<16x1xf32>
    %133 = arith.divf %131, %132 : vector<16x1xf32>
    %134 = vector.broadcast %133 : vector<16x1xf32> to vector<16x32xf32>
    %135 = arith.subf %125, %134 : vector<16x32xf32>
    %136 = arith.mulf %135, %135 : vector<16x32xf32>
    %cst_59 = arith.constant dense<0.000000e+00> : vector<16xf32>
    %137 = vector.multi_reduction <add>, %136, %cst_59 [1] : vector<16x32xf32> to vector<16xf32>
    %138 = vector.shape_cast %137 : vector<16xf32> to vector<16x1xf32>
    %cst_60 = arith.constant 3.200000e+01 : f32
    %139 = vector.broadcast %cst_60 : f32 to vector<16x1xf32>
    %140 = arith.divf %138, %139 : vector<16x1xf32>
    %141 = vector.broadcast %133 : vector<16x1xf32> to vector<16x32xf32>
    %142 = arith.subf %125, %141 : vector<16x32xf32>
    %cst_61 = arith.constant 9.99999996E-13 : f32
    %143 = vector.broadcast %cst_61 : f32 to vector<16x1xf32>
    %144 = arith.addf %140, %143 : vector<16x1xf32>
    %145 = math.rsqrt %144 : vector<16x1xf32>
    %146 = vector.broadcast %145 : vector<16x1xf32> to vector<16x32xf32>
    %147 = arith.mulf %142, %146 : vector<16x32xf32>
    %148 = vector.broadcast %127 : vector<1x32xf32> to vector<16x32xf32>
    %149 = arith.mulf %147, %148 : vector<16x32xf32>
    %150 = vector.broadcast %129 : vector<1x32xf32> to vector<16x32xf32>
    %151 = arith.addf %149, %150 : vector<16x32xf32>
    %152 = arith.truncf %151 : vector<16x32xf32> to vector<16x32xbf16>
    %c0_62 = arith.constant 0 : index
    %c0_63 = arith.constant 0 : index
    %c0_64 = arith.constant 0 : index
    %153 = vector.load %arg11[%c0_62, %c0_63, %c0_64] : memref<1x32x128xbf16, #tpu.memory_space<vmem>>, vector<1x32x128xbf16>
    %154 = vector.shape_cast %153 : vector<1x32x128xbf16> to vector<32x128xbf16>
    %cst_65 = arith.constant dense<0.000000e+00> : vector<16x128xf32>
    %155 = tpu.matmul %152, %154, %cst_65 {dimension_numbers = #tpu.dot_dimension_numbers<[1], [0], [0], [1], [0, 0, 1, 1], [], []>} : vector<16x32xbf16>, vector<32x128xbf16>, vector<16x128xf32> -> vector<16x128xf32>
    %c0_66 = arith.constant 0 : index
    %c0_67 = arith.constant 0 : index
    %c0_68 = arith.constant 0 : index
    %156 = vector.load %arg12[%c0_66, %c0_67, %c0_68] : memref<1x1x128xf32, #tpu.memory_space<vmem>>, vector<1x1x128xf32>
    %157 = vector.shape_cast %156 : vector<1x1x128xf32> to vector<1x128xf32>
    %158 = vector.broadcast %157 : vector<1x128xf32> to vector<16x128xf32>
    %159 = arith.addf %155, %158 : vector<16x128xf32>
    %cst_69 = arith.constant 5.000000e-01 : f32
    %160 = vector.broadcast %cst_69 : f32 to vector<16x128xf32>
    %161 = arith.mulf %160, %159 : vector<16x128xf32>
    %cst_70 = arith.constant 0.707106769 : f32
    %162 = vector.broadcast %cst_70 : f32 to vector<16x128xf32>
    %163 = arith.mulf %159, %162 : vector<16x128xf32>
    %164 = math.absf %163 : vector<16x128xf32>
    %cst_71 = arith.constant 0.327591091 : f32
    %165 = vector.broadcast %cst_71 : f32 to vector<16x128xf32>
    %166 = arith.mulf %165, %164 : vector<16x128xf32>
    %cst_72 = arith.constant 1.000000e+00 : f32
    %167 = vector.broadcast %cst_72 : f32 to vector<16x128xf32>
    %168 = arith.addf %167, %166 : vector<16x128xf32>
    %cst_73 = arith.constant 1.000000e+00 : f32
    %169 = vector.broadcast %cst_73 : f32 to vector<16x128xf32>
    %170 = arith.divf %169, %168 : vector<16x128xf32>
    %cst_74 = arith.constant 1.06140542 : f32
    %171 = vector.broadcast %cst_74 : f32 to vector<16x128xf32>
    %172 = arith.mulf %171, %170 : vector<16x128xf32>
    %cst_75 = arith.constant -1.45315206 : f32
    %173 = vector.broadcast %cst_75 : f32 to vector<16x128xf32>
    %174 = arith.addf %172, %173 : vector<16x128xf32>
    %175 = arith.mulf %174, %170 : vector<16x128xf32>
    %cst_76 = arith.constant 1.42141378 : f32
    %176 = vector.broadcast %cst_76 : f32 to vector<16x128xf32>
    %177 = arith.addf %175, %176 : vector<16x128xf32>
    %178 = arith.mulf %177, %170 : vector<16x128xf32>
    %cst_77 = arith.constant -0.284496725 : f32
    %179 = vector.broadcast %cst_77 : f32 to vector<16x128xf32>
    %180 = arith.addf %178, %179 : vector<16x128xf32>
    %181 = arith.mulf %180, %170 : vector<16x128xf32>
    %cst_78 = arith.constant 0.254829586 : f32
    %182 = vector.broadcast %cst_78 : f32 to vector<16x128xf32>
    %183 = arith.addf %181, %182 : vector<16x128xf32>
    %184 = arith.mulf %183, %170 : vector<16x128xf32>
    %cst_79 = arith.constant 0.000000e+00 : f32
    %185 = vector.broadcast %cst_79 : f32 to vector<16x128xf32>
    %186 = arith.subf %185, %164 : vector<16x128xf32>
    %187 = arith.mulf %186, %164 : vector<16x128xf32>
    %188 = math.exp %187 : vector<16x128xf32>
    %189 = arith.mulf %184, %188 : vector<16x128xf32>
    %cst_80 = arith.constant 1.000000e+00 : f32
    %190 = vector.broadcast %cst_80 : f32 to vector<16x128xf32>
    %191 = arith.subf %190, %189 : vector<16x128xf32>
    %cst_81 = arith.constant 0.000000e+00 : f32
    %192 = vector.broadcast %cst_81 : f32 to vector<16x128xf32>
    %193 = arith.cmpf oge, %163, %192 : vector<16x128xf32>
    %cst_82 = arith.constant 0.000000e+00 : f32
    %194 = vector.broadcast %cst_82 : f32 to vector<16x128xf32>
    %195 = arith.subf %194, %191 : vector<16x128xf32>
    %196 = arith.select %193, %191, %195 : vector<16x128xi1>, vector<16x128xf32>
    %cst_83 = arith.constant 1.000000e+00 : f32
    %197 = vector.broadcast %cst_83 : f32 to vector<16x128xf32>
    %198 = arith.addf %197, %196 : vector<16x128xf32>
    %199 = arith.mulf %161, %198 : vector<16x128xf32>
    %200 = arith.truncf %199 : vector<16x128xf32> to vector<16x128xbf16>
    %c0_84 = arith.constant 0 : index
    %c0_85 = arith.constant 0 : index
    %c0_86 = arith.constant 0 : index
    %201 = vector.load %arg13[%c0_84, %c0_85, %c0_86] : memref<1x128x32xbf16, #tpu.memory_space<vmem>>, vector<1x128x32xbf16>
    %202 = vector.shape_cast %201 : vector<1x128x32xbf16> to vector<128x32xbf16>
    %cst_87 = arith.constant dense<0.000000e+00> : vector<16x32xf32>
    %203 = tpu.matmul %200, %202, %cst_87 {dimension_numbers = #tpu.dot_dimension_numbers<[1], [0], [0], [1], [0, 0, 1, 1], [], []>} : vector<16x128xbf16>, vector<128x32xbf16>, vector<16x32xf32> -> vector<16x32xf32>
    %c0_88 = arith.constant 0 : index
    %c0_89 = arith.constant 0 : index
    %c0_90 = arith.constant 0 : index
    %204 = vector.load %arg14[%c0_88, %c0_89, %c0_90] : memref<1x1x32xf32, #tpu.memory_space<vmem>>, vector<1x1x32xf32>
    %205 = vector.shape_cast %204 : vector<1x1x32xf32> to vector<1x32xf32>
    %206 = vector.broadcast %205 : vector<1x32xf32> to vector<16x32xf32>
    %207 = arith.addf %203, %206 : vector<16x32xf32>
    %208 = arith.addf %207, %151 : vector<16x32xf32>
    %c0_91 = arith.constant 0 : index
    %c0_92 = arith.constant 0 : index
    %c0_93 = arith.constant 0 : index
    %209 = vector.load %arg15[%c0_91, %c0_92, %c0_93] : memref<1x1x32xf32, #tpu.memory_space<vmem>>, vector<1x1x32xf32>
    %210 = vector.shape_cast %209 : vector<1x1x32xf32> to vector<1x32xf32>
    %c0_94 = arith.constant 0 : index
    %c0_95 = arith.constant 0 : index
    %c0_96 = arith.constant 0 : index
    %211 = vector.load %arg16[%c0_94, %c0_95, %c0_96] : memref<1x1x32xf32, #tpu.memory_space<vmem>>, vector<1x1x32xf32>
    %212 = vector.shape_cast %211 : vector<1x1x32xf32> to vector<1x32xf32>
    %cst_97 = arith.constant dense<0.000000e+00> : vector<16xf32>
    %213 = vector.multi_reduction <add>, %208, %cst_97 [1] : vector<16x32xf32> to vector<16xf32>
    %214 = vector.shape_cast %213 : vector<16xf32> to vector<16x1xf32>
    %cst_98 = arith.constant 3.200000e+01 : f32
    %215 = vector.broadcast %cst_98 : f32 to vector<16x1xf32>
    %216 = arith.divf %214, %215 : vector<16x1xf32>
    %217 = vector.broadcast %216 : vector<16x1xf32> to vector<16x32xf32>
    %218 = arith.subf %208, %217 : vector<16x32xf32>
    %219 = arith.mulf %218, %218 : vector<16x32xf32>
    %cst_99 = arith.constant dense<0.000000e+00> : vector<16xf32>
    %220 = vector.multi_reduction <add>, %219, %cst_99 [1] : vector<16x32xf32> to vector<16xf32>
    %221 = vector.shape_cast %220 : vector<16xf32> to vector<16x1xf32>
    %cst_100 = arith.constant 3.200000e+01 : f32
    %222 = vector.broadcast %cst_100 : f32 to vector<16x1xf32>
    %223 = arith.divf %221, %222 : vector<16x1xf32>
    %224 = vector.broadcast %216 : vector<16x1xf32> to vector<16x32xf32>
    %225 = arith.subf %208, %224 : vector<16x32xf32>
    %cst_101 = arith.constant 9.99999996E-13 : f32
    %226 = vector.broadcast %cst_101 : f32 to vector<16x1xf32>
    %227 = arith.addf %223, %226 : vector<16x1xf32>
    %228 = math.rsqrt %227 : vector<16x1xf32>
    %229 = vector.broadcast %228 : vector<16x1xf32> to vector<16x32xf32>
    %230 = arith.mulf %225, %229 : vector<16x32xf32>
    %231 = vector.broadcast %210 : vector<1x32xf32> to vector<16x32xf32>
    %232 = arith.mulf %230, %231 : vector<16x32xf32>
    %233 = vector.broadcast %212 : vector<1x32xf32> to vector<16x32xf32>
    %234 = arith.addf %232, %233 : vector<16x32xf32>
    %c0_102 = arith.constant 0 : index
    %c0_103 = arith.constant 0 : index
    %235 = vector.load %arg17[%c0_102, %c0_103] : memref<16x32xf32, #tpu.memory_space<vmem>>, vector<16x32xf32>
    tpu.vector_store %arg17[%c0_102, %c0_103], %234 {strides = array<i32>} : memref<16x32xf32, #tpu.memory_space<vmem>>, vector<16x32xf32>,
    return
  }
  func.func @transform_0(%arg0: i32) -> (i32, i32) {
    %c0_i32 = arith.constant 0 : i32
    %c0_i32_0 = arith.constant 0 : i32
    %c0_i32_1 = arith.constant 0 : i32
    return %c0_i32, %c0_i32_0 : i32, i32
  }
  func.func @transform_1(%arg0: i32) -> (i32, i32) {
    %c0_i32 = arith.constant 0 : i32
    %c0_i32_0 = arith.constant 0 : i32
    %c0_i32_1 = arith.constant 0 : i32
    return %c0_i32, %c0_i32_0 : i32, i32
  }
  func.func @transform_2(%arg0: i32) -> (i32, i32) {
    %c0_i32 = arith.constant 0 : i32
    %c0_i32_0 = arith.constant 0 : i32
    %c0_i32_1 = arith.constant 0 : i32
    return %c0_i32, %c0_i32_0 : i32, i32
  }
  func.func @transform_3(%arg0: i32) -> (i32, i32) {
    %c0_i32 = arith.constant 0 : i32
    %c0_i32_0 = arith.constant 0 : i32
    %c0_i32_1 = arith.constant 0 : i32
    return %c0_i32, %c0_i32_0 : i32, i32
  }
  func.func @transform_4(%arg0: i32) -> (i32, i32, i32, i32) {
    %c0_i32 = arith.constant 0 : i32
    %c0_i32_0 = arith.constant 0 : i32
    %c0_i32_1 = arith.constant 0 : i32
    %c0_i32_2 = arith.constant 0 : i32
    return %arg0, %c0_i32, %c0_i32_0, %c0_i32_1 : i32, i32, i32, i32
  }
  func.func @transform_5(%arg0: i32) -> (i32, i32, i32, i32) {
    %c0_i32 = arith.constant 0 : i32
    %c0_i32_0 = arith.constant 0 : i32
    %c0_i32_1 = arith.constant 0 : i32
    %c0_i32_2 = arith.constant 0 : i32
    return %arg0, %c0_i32, %c0_i32_0, %c0_i32_1 : i32, i32, i32, i32
  }
  func.func @transform_6(%arg0: i32) -> (i32, i32, i32) {
    %c0_i32 = arith.constant 0 : i32
    %c0_i32_0 = arith.constant 0 : i32
    %c0_i32_1 = arith.constant 0 : i32
    return %arg0, %c0_i32, %c0_i32_0 : i32, i32, i32
  }
  func.func @transform_7(%arg0: i32) -> (i32, i32, i32) {
    %c0_i32 = arith.constant 0 : i32
    %c0_i32_0 = arith.constant 0 : i32
    %c0_i32_1 = arith.constant 0 : i32
    return %arg0, %c0_i32, %c0_i32_0 : i32, i32, i32
  }
  func.func @transform_8(%arg0: i32) -> (i32, i32, i32) {
    %c0_i32 = arith.constant 0 : i32
    %c0_i32_0 = arith.constant 0 : i32
    %c0_i32_1 = arith.constant 0 : i32
    return %arg0, %c0_i32, %c0_i32_0 : i32, i32, i32
  }
  func.func @transform_9(%arg0: i32) -> (i32, i32, i32) {
    %c0_i32 = arith.constant 0 : i32
    %c0_i32_0 = arith.constant 0 : i32
    %c0_i32_1 = arith.constant 0 : i32
    return %arg0, %c0_i32, %c0_i32_0 : i32, i32, i32
  }
  func.func @transform_10(%arg0: i32) -> (i32, i32, i32) {
    %c0_i32 = arith.constant 0 : i32
    %c0_i32_0 = arith.constant 0 : i32
    %c0_i32_1 = arith.constant 0 : i32
    return %arg0, %c0_i32, %c0_i32_0 : i32, i32, i32
  }
  func.func @transform_11(%arg0: i32) -> (i32, i32, i32) {
    %c0_i32 = arith.constant 0 : i32
    %c0_i32_0 = arith.constant 0 : i32
    %c0_i32_1 = arith.constant 0 : i32
    return %arg0, %c0_i32, %c0_i32_0 : i32, i32, i32
  }
  func.func @transform_12(%arg0: i32) -> (i32, i32, i32) {
    %c0_i32 = arith.constant 0 : i32
    %c0_i32_0 = arith.constant 0 : i32
    %c0_i32_1 = arith.constant 0 : i32
    return %arg0, %c0_i32, %c0_i32_0 : i32, i32, i32
  }
  func.func @transform_13(%arg0: i32) -> (i32, i32, i32) {
    %c0_i32 = arith.constant 0 : i32
    %c0_i32_0 = arith.constant 0 : i32
    %c0_i32_1 = arith.constant 0 : i32
    return %arg0, %c0_i32, %c0_i32_0 : i32, i32, i32
  }
  func.func @transform_14(%arg0: i32) -> (i32, i32, i32) {
    %c0_i32 = arith.constant 0 : i32
    %c0_i32_0 = arith.constant 0 : i32
    %c0_i32_1 = arith.constant 0 : i32
    return %arg0, %c0_i32, %c0_i32_0 : i32, i32, i32
  }
  func.func @transform_15(%arg0: i32) -> (i32, i32, i32) {
    %c0_i32 = arith.constant 0 : i32
    %c0_i32_0 = arith.constant 0 : i32
    %c0_i32_1 = arith.constant 0 : i32
    return %arg0, %c0_i32, %c0_i32_0 : i32, i32, i32
  }
  func.func @transform_16(%arg0: i32) -> (i32, i32) {
    %c0_i32 = arith.constant 0 : i32
    %c0_i32_0 = arith.constant 0 : i32
    %c0_i32_1 = arith.constant 0 : i32
    return %c0_i32, %c0_i32_0 : i32, i32
  }
}

</mosaic_0001>

<llo_original>
// kernel: _lambda_.3
$region0: #{_lambda_.3}
  #allocation0 [shape = 'u32[]', space=smem, size = 0x4, offset = 0x4, fixed_abs, tag = 'smem constant byte address 0x4 - core index']
  #allocation1 [shape = 'u32[144,128]{1,0:T(1,128)}', space=vmem, size = 0x12000, scoped, tag = 'internal scratch']
  #allocation2 [shape = 'f32[2,32]{1,0:T(2,128)}', space=vmem, size = 0x400, scoped, tag = 'scratch operand']
  %s0 = inlined_call_operand.vmem [shape: f32[2,32], index: 0, kind: input, shape index: {}]
  %s1 = inlined_call_operand.vmem [shape: bf16[32,32], index: 1, kind: input, shape index: {}]
  %s2 = inlined_call_operand.vmem [shape: f32[1,32], index: 2, kind: input, shape index: {}, may-alias: {2,16}]
  %s3 = inlined_call_operand.vmem [shape: f32[1,32], index: 3, kind: input, shape index: {}]
  %s4 = inlined_call_operand.vmem [shape: f32[2,1,32], index: 4, kind: input, shape index: {}, may-alias: {4,9}]
  %s5 = inlined_call_operand.vmem [shape: f32[2,1,32], index: 5, kind: input, shape index: {}, may-alias: {5,8,10,14}]
  %s6 = inlined_call_operand.vmem [shape: bf16[2,3,32,32], index: 6, kind: input, shape index: {}]
  %s7 = inlined_call_operand.vmem [shape: bf16[2,32,32], index: 7, kind: input, shape index: {}]
  %s8 = inlined_call_operand.vmem [shape: f32[2,1,32], index: 8, kind: input, shape index: {}, may-alias: {5,8,10,14}]
  %s9 = inlined_call_operand.vmem [shape: f32[2,1,32], index: 9, kind: input, shape index: {}, may-alias: {4,9}]
  %s10 = inlined_call_operand.vmem [shape: f32[2,1,32], index: 10, kind: input, shape index: {}, may-alias: {5,8,10,14}]
  %s11 = inlined_call_operand.vmem [shape: bf16[2,32,128], index: 11, kind: input, shape index: {}]
  %s12 = inlined_call_operand.vmem [shape: f32[2,1,128], index: 12, kind: input, shape index: {}]
  %s13 = inlined_call_operand.vmem [shape: bf16[2,128,32], index: 13, kind: input, shape index: {}]
  %s14 = inlined_call_operand.vmem [shape: f32[2,1,32], index: 14, kind: input, shape index: {}, may-alias: {5,8,10,14}]
  %s15 = inlined_call_operand.vmem [shape: f32[1,32], index: 15, kind: input, shape index: {}]
  %s16 = inlined_call_operand.vmem [shape: f32[1,32], index: 16, kind: input, shape index: {}, may-alias: {2,16}]
  %s17 = inlined_call_operand.vmem [shape: bf16[32,64], index: 17, kind: input, shape index: {}]
  %s18 = inlined_call_operand.hbm [shape: f32[2,64], index: 18, kind: output, shape index: {}]
  %s19 = sld [smem:[#allocation0]]
  $region113: #{_lambda_.3} parent=0
    _
  %s21 = ssub.s32 1, %s19
  %s22 = scalar_select 0, %s21, %s19
  $region1: #{_lambda_.3} parent=0
    #allocation3 [shape = 'u8[1024]{0}', space=vmem, size = 0x400, scoped, tag = 'output window, operand 0, single buffered']
    #allocation4 [shape = 's32[2]{0}', space=sflag, size = 0x8, scoped, tag = 'scoped memory for _lambda_.3']
    %23 = vsyncpa [#allocation4], 0
    loop: start=0, step=1, limit=4
    $region2: #{_lambda_.3} parent=1 // loop_pre_header
      _
    $region3: #{_lambda_.3} parent=1 // loop_header
      %s25 = sphi 0, %s29
      %p26 = scmp.ge.s32.totalorder %s25, 4
      %s33 = sphi 0, %s33
      %s35 = sphi 0, %s33
      %s36 = sphi 0, %s35
      %s50 = sphi 0, %s36
      %s54 = sphi 0, %s54
      %s56 = sphi 0, %s54
      %s57 = sphi 0, %s56
      %s71 = sphi 0, %s57
      %s75 = sphi 0, %s75
      %s77 = sphi 0, %s75
      %s78 = sphi 0, %s77
      %s92 = sphi 0, %s78
      %s96 = sphi 0, %s96
      %s98 = sphi 0, %s96
      %s99 = sphi 0, %s98
      %s113 = sphi 0, %s99
      %s119 = sphi 0, %s121
      %s122 = sphi 0, %s119
      %s123 = sphi 0, %s122
      %s139 = sphi 0, %s123
      %s145 = sphi 0, %s147
      %s148 = sphi 0, %s145
      %s149 = sphi 0, %s148
      %s165 = sphi 0, %s149
      %s171 = sphi 0, %s173
      %s174 = sphi 0, %s171
      %s175 = sphi 0, %s174
      %s191 = sphi 0, %s175
      %s197 = sphi 0, %s199
      %s200 = sphi 0, %s197
      %s201 = sphi 0, %s200
      %s217 = sphi 0, %s201
      %s223 = sphi 0, %s225
      %s226 = sphi 0, %s223
      %s227 = sphi 0, %s226
      %s243 = sphi 0, %s227
      %s249 = sphi 0, %s251
      %s252 = sphi 0, %s249
      %s253 = sphi 0, %s252
      %s269 = sphi 0, %s253
      %s275 = sphi 0, %s277
      %s278 = sphi 0, %s275
      %s279 = sphi 0, %s278
      %s295 = sphi 0, %s279
      %s301 = sphi 0, %s303
      %s304 = sphi 0, %s301
      %s305 = sphi 0, %s304
      %s321 = sphi 0, %s305
      %s327 = sphi 0, %s329
      %s330 = sphi 0, %s327
      %s331 = sphi 0, %s330
      %s347 = sphi 0, %s331
      %s353 = sphi 0, %s355
      %s356 = sphi 0, %s353
      %s357 = sphi 0, %s356
      %s373 = sphi 0, %s357
      %s379 = sphi 0, %s381
      %s382 = sphi 0, %s379
      %s383 = sphi 0, %s382
      %s399 = sphi 0, %s383
      %s403 = sphi 0, %s403
      %s405 = sphi 0, %s403
      %s406 = sphi 0, %s405
      %s420 = sphi 0, %s406
      %s424 = sphi 0, %s424
      %s426 = sphi 0, %s424
      %s427 = sphi 0, %s426
      %s441 = sphi 0, %s427
      %s445 = sphi 0, %s445
      %s447 = sphi 0, %s445
      %s448 = sphi 0, %s447
      %s462 = sphi 0, %s448
      %s466 = sphi 0, %s466
      %s468 = sphi 0, %s466
      %s469 = sphi 0, %s468
      %s483 = sphi 0, %s469
    $region4: #{_lambda_.3} parent=1 // loop_header_branch
      %28 = sbr.rel (%p26) target = $region8
    $region5: #{_lambda_.3} parent=1 // loop_body
      %s30 = ssub.s32 %s25, 1
      %s31 = ssub.s32 %s25, 2
      %s32 = sadd.s32 %s25, 1
      %s34 = sadd.s32 %s33, 1
      %p37 = scmp.eq.s32.totalorder %s25, 1
      %p38 = scmp.ne.s32.totalorder %s33, %s35
      %p39 = scmp.eq.s32.totalorder %s25, 0
      %p40 = por %p38, %p39
      %p41 = scmp.ne.s32.totalorder %s33, %s35
      %p42 = scmp.eq.s32.totalorder %s30, 1
      %p43 = por %p41, %p42
      %p44 = scmp.ne.s32.totalorder %s35, %s36
      %p45 = scmp.eq.s32.totalorder %s30, 0
      %p46 = por %p44, %p45
      %p47 = scmp.ne.s32.totalorder %s35, %s36
      %p48 = scmp.eq.s32.totalorder %s31, 1
      %p49 = por %p47, %p48
      %p51 = scmp.ne.s32.totalorder %s36, %s50
      %p52 = scmp.eq.s32.totalorder %s31, 0
      %p53 = por %p51, %p52
      %s55 = sadd.s32 %s54, 1
      %p58 = scmp.eq.s32.totalorder %s25, 1
      %p59 = scmp.ne.s32.totalorder %s54, %s56
      %p60 = scmp.eq.s32.totalorder %s25, 0
      %p61 = por %p59, %p60
      %p62 = scmp.ne.s32.totalorder %s54, %s56
      %p63 = scmp.eq.s32.totalorder %s30, 1
      %p64 = por %p62, %p63
      %p65 = scmp.ne.s32.totalorder %s56, %s57
      %p66 = scmp.eq.s32.totalorder %s30, 0
      %p67 = por %p65, %p66
      %p68 = scmp.ne.s32.totalorder %s56, %s57
      %p69 = scmp.eq.s32.totalorder %s31, 1
      %p70 = por %p68, %p69
      %p72 = scmp.ne.s32.totalorder %s57, %s71
      %p73 = scmp.eq.s32.totalorder %s31, 0
      %p74 = por %p72, %p73
      %s76 = sadd.s32 %s75, 1
      %p79 = scmp.eq.s32.totalorder %s25, 1
      %p80 = scmp.ne.s32.totalorder %s75, %s77
      %p81 = scmp.eq.s32.totalorder %s25, 0
      %p82 = por %p80, %p81
      %p83 = scmp.ne.s32.totalorder %s75, %s77
      %p84 = scmp.eq.s32.totalorder %s30, 1
      %p85 = por %p83, %p84
      %p86 = scmp.ne.s32.totalorder %s77, %s78
      %p87 = scmp.eq.s32.totalorder %s30, 0
      %p88 = por %p86, %p87
      %p89 = scmp.ne.s32.totalorder %s77, %s78
      %p90 = scmp.eq.s32.totalorder %s31, 1
      %p91 = por %p89, %p90
      %p93 = scmp.ne.s32.totalorder %s78, %s92
      %p94 = scmp.eq.s32.totalorder %s31, 0
      %p95 = por %p93, %p94
      %s97 = sadd.s32 %s96, 1
      %p100 = scmp.eq.s32.totalorder %s25, 1
      %p101 = scmp.ne.s32.totalorder %s96, %s98
      %p102 = scmp.eq.s32.totalorder %s25, 0
      %p103 = por %p101, %p102
      %p104 = scmp.ne.s32.totalorder %s96, %s98
      %p105 = scmp.eq.s32.totalorder %s30, 1
      %p106 = por %p104, %p105
      %p107 = scmp.ne.s32.totalorder %s98, %s99
      %p108 = scmp.eq.s32.totalorder %s30, 0
      %p109 = por %p107, %p108
      %p110 = scmp.ne.s32.totalorder %s98, %s99
      %p111 = scmp.eq.s32.totalorder %s31, 1
      %p112 = por %p110, %p111
      %p114 = scmp.ne.s32.totalorder %s99, %s113
      %p115 = scmp.eq.s32.totalorder %s31, 0
      %p116 = por %p114, %p115
      %s117 = ssub.s32 %s25, %s32
      %p118 = scmp.eq.s32.totalorder %s117, 0
      %s120 = sadd.s32 %s119, 1
      %s121 = scalar_select %p118, %s119, %s120
      %p124 = pneg %p118
      %p125 = scmp.eq.s32.totalorder %s25, 1
      %p126 = por %p124, %p125
      %p127 = scmp.ne.s32.totalorder %s119, %s122
      %p128 = scmp.eq.s32.totalorder %s25, 0
      %p129 = por %p127, %p128
      %p130 = scmp.ne.s32.totalorder %s119, %s122
      %p131 = scmp.eq.s32.totalorder %s30, 1
      %p132 = por %p130, %p131
      %p133 = scmp.ne.s32.totalorder %s122, %s123
      %p134 = scmp.eq.s32.totalorder %s30, 0
      %p135 = por %p133, %p134
      %p136 = scmp.ne.s32.totalorder %s122, %s123
      %p137 = scmp.eq.s32.totalorder %s31, 1
      %p138 = por %p136, %p137
      %p140 = scmp.ne.s32.totalorder %s123, %s139
      %p141 = scmp.eq.s32.totalorder %s31, 0
      %p142 = por %p140, %p141
      %s143 = ssub.s32 %s25, %s32
      %p144 = scmp.eq.s32.totalorder %s143, 0
      %s146 = sadd.s32 %s145, 1
      %s147 = scalar_select %p144, %s145, %s146
      %p150 = pneg %p144
      %p151 = scmp.eq.s32.totalorder %s25, 1
      %p152 = por %p150, %p151
      %p153 = scmp.ne.s32.totalorder %s145, %s148
      %p154 = scmp.eq.s32.totalorder %s25, 0
      %p155 = por %p153, %p154
      %p156 = scmp.ne.s32.totalorder %s145, %s148
      %p157 = scmp.eq.s32.totalorder %s30, 1
      %p158 = por %p156, %p157
      %p159 = scmp.ne.s32.totalorder %s148, %s149
      %p160 = scmp.eq.s32.totalorder %s30, 0
      %p161 = por %p159, %p160
      %p162 = scmp.ne.s32.totalorder %s148, %s149
      %p163 = scmp.eq.s32.totalorder %s31, 1
      %p164 = por %p162, %p163
      %p166 = scmp.ne.s32.totalorder %s149, %s165
      %p167 = scmp.eq.s32.totalorder %s31, 0
      %p168 = por %p166, %p167
      %s169 = ssub.s32 %s25, %s32
      %p170 = scmp.eq.s32.totalorder %s169, 0
      %s172 = sadd.s32 %s171, 1
      %s173 = scalar_select %p170, %s171, %s172
      %p176 = pneg %p170
      %p177 = scmp.eq.s32.totalorder %s25, 1
      %p178 = por %p176, %p177
      %p179 = scmp.ne.s32.totalorder %s171, %s174
      %p180 = scmp.eq.s32.totalorder %s25, 0
      %p181 = por %p179, %p180
      %p182 = scmp.ne.s32.totalorder %s171, %s174
      %p183 = scmp.eq.s32.totalorder %s30, 1
      %p184 = por %p182, %p183
      %p185 = scmp.ne.s32.totalorder %s174, %s175
      %p186 = scmp.eq.s32.totalorder %s30, 0
      %p187 = por %p185, %p186
      %p188 = scmp.ne.s32.totalorder %s174, %s175
      %p189 = scmp.eq.s32.totalorder %s31, 1
      %p190 = por %p188, %p189
      %p192 = scmp.ne.s32.totalorder %s175, %s191
      %p193 = scmp.eq.s32.totalorder %s31, 0
      %p194 = por %p192, %p193
      %s195 = ssub.s32 %s25, %s32
      %p196 = scmp.eq.s32.totalorder %s195, 0
      %s198 = sadd.s32 %s197, 1
      %s199 = scalar_select %p196, %s197, %s198
      %p202 = pneg %p196
      %p203 = scmp.eq.s32.totalorder %s25, 1
      %p204 = por %p202, %p203
      %p205 = scmp.ne.s32.totalorder %s197, %s200
      %p206 = scmp.eq.s32.totalorder %s25, 0
      %p207 = por %p205, %p206
      %p208 = scmp.ne.s32.totalorder %s197, %s200
      %p209 = scmp.eq.s32.totalorder %s30, 1
      %p210 = por %p208, %p209
      %p211 = scmp.ne.s32.totalorder %s200, %s201
      %p212 = scmp.eq.s32.totalorder %s30, 0
      %p213 = por %p211, %p212
      %p214 = scmp.ne.s32.totalorder %s200, %s201
      %p215 = scmp.eq.s32.totalorder %s31, 1
      %p216 = por %p214, %p215
      %p218 = scmp.ne.s32.totalorder %s201, %s217
      %p219 = scmp.eq.s32.totalorder %s31, 0
      %p220 = por %p218, %p219
      %s221 = ssub.s32 %s25, %s32
      %p222 = scmp.eq.s32.totalorder %s221, 0
      %s224 = sadd.s32 %s223, 1
      %s225 = scalar_select %p222, %s223, %s224
      %p228 = pneg %p222
      %p229 = scmp.eq.s32.totalorder %s25, 1
      %p230 = por %p228, %p229
      %p231 = scmp.ne.s32.totalorder %s223, %s226
      %p232 = scmp.eq.s32.totalorder %s25, 0
      %p233 = por %p231, %p232
      %p234 = scmp.ne.s32.totalorder %s223, %s226
      %p235 = scmp.eq.s32.totalorder %s30, 1
      %p236 = por %p234, %p235
      %p237 = scmp.ne.s32.totalorder %s226, %s227
      %p238 = scmp.eq.s32.totalorder %s30, 0
      %p239 = por %p237, %p238
      %p240 = scmp.ne.s32.totalorder %s226, %s227
      %p241 = scmp.eq.s32.totalorder %s31, 1
      %p242 = por %p240, %p241
      %p244 = scmp.ne.s32.totalorder %s227, %s243
      %p245 = scmp.eq.s32.totalorder %s31, 0
      %p246 = por %p244, %p245
      %s247 = ssub.s32 %s25, %s32
      %p248 = scmp.eq.s32.totalorder %s247, 0
      %s250 = sadd.s32 %s249, 1
      %s251 = scalar_select %p248, %s249, %s250
      %p254 = pneg %p248
      %p255 = scmp.eq.s32.totalorder %s25, 1
      %p256 = por %p254, %p255
      %p257 = scmp.ne.s32.totalorder %s249, %s252
      %p258 = scmp.eq.s32.totalorder %s25, 0
      %p259 = por %p257, %p258
      %p260 = scmp.ne.s32.totalorder %s249, %s252
      %p261 = scmp.eq.s32.totalorder %s30, 1
      %p262 = por %p260, %p261
      %p263 = scmp.ne.s32.totalorder %s252, %s253
      %p264 = scmp.eq.s32.totalorder %s30, 0
      %p265 = por %p263, %p264
      %p266 = scmp.ne.s32.totalorder %s252, %s253
      %p267 = scmp.eq.s32.totalorder %s31, 1
      %p268 = por %p266, %p267
      %p270 = scmp.ne.s32.totalorder %s253, %s269
      %p271 = scmp.eq.s32.totalorder %s31, 0
      %p272 = por %p270, %p271
      %s273 = ssub.s32 %s25, %s32
      %p274 = scmp.eq.s32.totalorder %s273, 0
      %s276 = sadd.s32 %s275, 1
      %s277 = scalar_select %p274, %s275, %s276
      %p280 = pneg %p274
      %p281 = scmp.eq.s32.totalorder %s25, 1
      %p282 = por %p280, %p281
      %p283 = scmp.ne.s32.totalorder %s275, %s278
      %p284 = scmp.eq.s32.totalorder %s25, 0
      %p285 = por %p283, %p284
      %p286 = scmp.ne.s32.totalorder %s275, %s278
      %p287 = scmp.eq.s32.totalorder %s30, 1
      %p288 = por %p286, %p287
      %p289 = scmp.ne.s32.totalorder %s278, %s279
      %p290 = scmp.eq.s32.totalorder %s30, 0
      %p291 = por %p289, %p290
      %p292 = scmp.ne.s32.totalorder %s278, %s279
      %p293 = scmp.eq.s32.totalorder %s31, 1
      %p294 = por %p292, %p293
      %p296 = scmp.ne.s32.totalorder %s279, %s295
      %p297 = scmp.eq.s32.totalorder %s31, 0
      %p298 = por %p296, %p297
      %s299 = ssub.s32 %s25, %s32
      %p300 = scmp.eq.s32.totalorder %s299, 0
      %s302 = sadd.s32 %s301, 1
      %s303 = scalar_select %p300, %s301, %s302
      %p306 = pneg %p300
      %p307 = scmp.eq.s32.totalorder %s25, 1
      %p308 = por %p306, %p307
      %p309 = scmp.ne.s32.totalorder %s301, %s304
      %p310 = scmp.eq.s32.totalorder %s25, 0
      %p311 = por %p309, %p310
      %p312 = scmp.ne.s32.totalorder %s301, %s304
      %p313 = scmp.eq.s32.totalorder %s30, 1
      %p314 = por %p312, %p313
      %p315 = scmp.ne.s32.totalorder %s304, %s305
      %p316 = scmp.eq.s32.totalorder %s30, 0
      %p317 = por %p315, %p316
      %p318 = scmp.ne.s32.totalorder %s304, %s305
      %p319 = scmp.eq.s32.totalorder %s31, 1
      %p320 = por %p318, %p319
      %p322 = scmp.ne.s32.totalorder %s305, %s321
      %p323 = scmp.eq.s32.totalorder %s31, 0
      %p324 = por %p322, %p323
      %s325 = ssub.s32 %s25, %s32
      %p326 = scmp.eq.s32.totalorder %s325, 0
      %s328 = sadd.s32 %s327, 1
      %s329 = scalar_select %p326, %s327, %s328
      %p332 = pneg %p326
      %p333 = scmp.eq.s32.totalorder %s25, 1
      %p334 = por %p332, %p333
      %p335 = scmp.ne.s32.totalorder %s327, %s330
      %p336 = scmp.eq.s32.totalorder %s25, 0
      %p337 = por %p335, %p336
      %p338 = scmp.ne.s32.totalorder %s327, %s330
      %p339 = scmp.eq.s32.totalorder %s30, 1
      %p340 = por %p338, %p339
      %p341 = scmp.ne.s32.totalorder %s330, %s331
      %p342 = scmp.eq.s32.totalorder %s30, 0
      %p343 = por %p341, %p342
      %p344 = scmp.ne.s32.totalorder %s330, %s331
      %p345 = scmp.eq.s32.totalorder %s31, 1
      %p346 = por %p344, %p345
      %p348 = scmp.ne.s32.totalorder %s331, %s347
      %p349 = scmp.eq.s32.totalorder %s31, 0
      %p350 = por %p348, %p349
      %s351 = ssub.s32 %s25, %s32
      %p352 = scmp.eq.s32.totalorder %s351, 0
      %s354 = sadd.s32 %s353, 1
      %s355 = scalar_select %p352, %s353, %s354
      %p358 = pneg %p352
      %p359 = scmp.eq.s32.totalorder %s25, 1
      %p360 = por %p358, %p359
      %p361 = scmp.ne.s32.totalorder %s353, %s356
      %p362 = scmp.eq.s32.totalorder %s25, 0
      %p363 = por %p361, %p362
      %p364 = scmp.ne.s32.totalorder %s353, %s356
      %p365 = scmp.eq.s32.totalorder %s30, 1
      %p366 = por %p364, %p365
      %p367 = scmp.ne.s32.totalorder %s356, %s357
      %p368 = scmp.eq.s32.totalorder %s30, 0
      %p369 = por %p367, %p368
      %p370 = scmp.ne.s32.totalorder %s356, %s357
      %p371 = scmp.eq.s32.totalorder %s31, 1
      %p372 = por %p370, %p371
      %p374 = scmp.ne.s32.totalorder %s357, %s373
      %p375 = scmp.eq.s32.totalorder %s31, 0
      %p376 = por %p374, %p375
      %s377 = ssub.s32 %s25, %s32
      %p378 = scmp.eq.s32.totalorder %s377, 0
      %s380 = sadd.s32 %s379, 1
      %s381 = scalar_select %p378, %s379, %s380
      %p384 = pneg %p378
      %p385 = scmp.eq.s32.totalorder %s25, 1
      %p386 = por %p384, %p385
      %p387 = scmp.ne.s32.totalorder %s379, %s382
      %p388 = scmp.eq.s32.totalorder %s25, 0
      %p389 = por %p387, %p388
      %p390 = scmp.ne.s32.totalorder %s379, %s382
      %p391 = scmp.eq.s32.totalorder %s30, 1
      %p392 = por %p390, %p391
      %p393 = scmp.ne.s32.totalorder %s382, %s383
      %p394 = scmp.eq.s32.totalorder %s30, 0
      %p395 = por %p393, %p394
      %p396 = scmp.ne.s32.totalorder %s382, %s383
      %p397 = scmp.eq.s32.totalorder %s31, 1
      %p398 = por %p396, %p397
      %p400 = scmp.ne.s32.totalorder %s383, %s399
      %p401 = scmp.eq.s32.totalorder %s31, 0
      %p402 = por %p400, %p401
      %s404 = sadd.s32 %s403, 1
      %p407 = scmp.eq.s32.totalorder %s25, 1
      %p408 = scmp.ne.s32.totalorder %s403, %s405
      %p409 = scmp.eq.s32.totalorder %s25, 0
      %p410 = por %p408, %p409
      %p411 = scmp.ne.s32.totalorder %s403, %s405
      %p412 = scmp.eq.s32.totalorder %s30, 1
      %p413 = por %p411, %p412
      %p414 = scmp.ne.s32.totalorder %s405, %s406
      %p415 = scmp.eq.s32.totalorder %s30, 0
      %p416 = por %p414, %p415
      %p417 = scmp.ne.s32.totalorder %s405, %s406
      %p418 = scmp.eq.s32.totalorder %s31, 1
      %p419 = por %p417, %p418
      %p421 = scmp.ne.s32.totalorder %s406, %s420
      %p422 = scmp.eq.s32.totalorder %s31, 0
      %p423 = por %p421, %p422
      %s425 = sadd.s32 %s424, 1
      %p428 = scmp.eq.s32.totalorder %s25, 1
      %p429 = scmp.ne.s32.totalorder %s424, %s426
      %p430 = scmp.eq.s32.totalorder %s25, 0
      %p431 = por %p429, %p430
      %p432 = scmp.ne.s32.totalorder %s424, %s426
      %p433 = scmp.eq.s32.totalorder %s30, 1
      %p434 = por %p432, %p433
      %p435 = scmp.ne.s32.totalorder %s426, %s427
      %p436 = scmp.eq.s32.totalorder %s30, 0
      %p437 = por %p435, %p436
      %p438 = scmp.ne.s32.totalorder %s426, %s427
      %p439 = scmp.eq.s32.totalorder %s31, 1
      %p440 = por %p438, %p439
      %p442 = scmp.ne.s32.totalorder %s427, %s441
      %p443 = scmp.eq.s32.totalorder %s31, 0
      %p444 = por %p442, %p443
      %s446 = sadd.s32 %s445, 1
      %p449 = scmp.eq.s32.totalorder %s25, 1
      %p450 = scmp.ne.s32.totalorder %s445, %s447
      %p451 = scmp.eq.s32.totalorder %s25, 0
      %p452 = por %p450, %p451
      %p453 = scmp.ne.s32.totalorder %s445, %s447
      %p454 = scmp.eq.s32.totalorder %s30, 1
      %p455 = por %p453, %p454
      %p456 = scmp.ne.s32.totalorder %s447, %s448
      %p457 = scmp.eq.s32.totalorder %s30, 0
      %p458 = por %p456, %p457
      %p459 = scmp.ne.s32.totalorder %s447, %s448
      %p460 = scmp.eq.s32.totalorder %s31, 1
      %p461 = por %p459, %p460
      %p463 = scmp.ne.s32.totalorder %s448, %s462
      %p464 = scmp.eq.s32.totalorder %s31, 0
      %p465 = por %p463, %p464
      %s467 = sadd.s32 %s466, 1
      %p470 = scmp.eq.s32.totalorder %s25, 1
      %p471 = scmp.ne.s32.totalorder %s466, %s468
      %p472 = scmp.eq.s32.totalorder %s25, 0
      %p473 = por %p471, %p472
      %p474 = scmp.ne.s32.totalorder %s466, %s468
      %p475 = scmp.eq.s32.totalorder %s30, 1
      %p476 = por %p474, %p475
      %p477 = scmp.ne.s32.totalorder %s468, %s469
      %p478 = scmp.eq.s32.totalorder %s30, 0
      %p479 = por %p477, %p478
      %p480 = scmp.ne.s32.totalorder %s468, %s469
      %p481 = scmp.eq.s32.totalorder %s31, 1
      %p482 = por %p480, %p481
      %p484 = scmp.ne.s32.totalorder %s469, %s483
      %p485 = scmp.eq.s32.totalorder %s31, 0
      %p486 = por %p484, %p485
      %p487 = scmp.le.s32.totalorder 1, %s25
      %p488 = scmp.lt.s32.totalorder %s25, 3
      %p489 = pnand %p487, %p488
      %p490 = pneg %p489
      // Predicated region
      $region9: #{_lambda_.3} parent=5 // pred_check
        _
      $region10: #{_lambda_.3} parent=5 // pred_check_branch
        %492 = sbr.rel (%p489) target = $region12
      $region11: #{_lambda_.3} parent=5 // pred_region
        %s493 = ssub.s32 %s25, 1
        // Predicated region
        $region13: #{_lambda_.3} parent=11 // pred_check
          %p494 = pneg %p46
        $region14: #{_lambda_.3} parent=11 // pred_check_branch
          %496 = sbr.rel (%p494) target = $region16
        $region15: #{_lambda_.3} parent=11 // pred_region
          _
        $region16: #{_lambda_.3} parent=11 // pred_fallthru
          _
        // Predicated region
        $region17: #{_lambda_.3} parent=11 // pred_check
          %p497 = pneg %p67
        $region18: #{_lambda_.3} parent=11 // pred_check_branch
          %499 = sbr.rel (%p497) target = $region20
        $region19: #{_lambda_.3} parent=11 // pred_region
          _
        $region20: #{_lambda_.3} parent=11 // pred_fallthru
          _
        // Predicated region
        $region21: #{_lambda_.3} parent=11 // pred_check
          %p500 = pneg %p88
        $region22: #{_lambda_.3} parent=11 // pred_check_branch
          %502 = sbr.rel (%p500) target = $region24
        $region23: #{_lambda_.3} parent=11 // pred_region
          _
        $region24: #{_lambda_.3} parent=11 // pred_fallthru
          _
        // Predicated region
        $region25: #{_lambda_.3} parent=11 // pred_check
          %p503 = pneg %p109
        $region26: #{_lambda_.3} parent=11 // pred_check_branch
          %505 = sbr.rel (%p503) target = $region28
        $region27: #{_lambda_.3} parent=11 // pred_region
          _
        $region28: #{_lambda_.3} parent=11 // pred_fallthru
          _
        // Predicated region
        $region29: #{_lambda_.3} parent=11 // pred_check
          %p506 = pneg %p416
        $region30: #{_lambda_.3} parent=11 // pred_check_branch
          %508 = sbr.rel (%p506) target = $region32
        $region31: #{_lambda_.3} parent=11 // pred_region
          _
        $region32: #{_lambda_.3} parent=11 // pred_fallthru
          _
        // Predicated region
        $region33: #{_lambda_.3} parent=11 // pred_check
          %p509 = pneg %p437
        $region34: #{_lambda_.3} parent=11 // pred_check_branch
          %511 = sbr.rel (%p509) target = $region36
        $region35: #{_lambda_.3} parent=11 // pred_region
          _
        $region36: #{_lambda_.3} parent=11 // pred_fallthru
          _
        // Predicated region
        $region37: #{_lambda_.3} parent=11 // pred_check
          %p512 = pneg %p458
        $region38: #{_lambda_.3} parent=11 // pred_check_branch
          %514 = sbr.rel (%p512) target = $region40
        $region39: #{_lambda_.3} parent=11 // pred_region
          _
        $region40: #{_lambda_.3} parent=11 // pred_fallthru
          _
      $region12: #{_lambda_.3} parent=5 // pred_fallthru
        _
      %p515 = scmp.lt.s32.totalorder %s25, 2
      // Predicated region
      $region41: #{_lambda_.3} parent=5 // pred_check
        %p516 = pneg %p515
      $region42: #{_lambda_.3} parent=5 // pred_check_branch
        %518 = sbr.rel (%p516) target = $region44
      $region43: #{_lambda_.3} parent=5 // pred_region
        // Predicated region
        $region45: #{_lambda_.3} parent=43 // pred_check
          %p519 = pneg %p129
        $region46: #{_lambda_.3} parent=43 // pred_check_branch
          %521 = sbr.rel (%p519) target = $region48
        $region47: #{_lambda_.3} parent=43 // pred_region
          %p522 = scmp.lt.s32.totalorder %s25, 1
          %s523 = scalar_select %p522, %s25, 1
          %s524 = scalar_lea.vmem %s4, %s523
        $region48: #{_lambda_.3} parent=43 // pred_fallthru
          _
        // Predicated region
        $region49: #{_lambda_.3} parent=43 // pred_check
          %p525 = pneg %p155
        $region50: #{_lambda_.3} parent=43 // pred_check_branch
          %527 = sbr.rel (%p525) target = $region52
        $region51: #{_lambda_.3} parent=43 // pred_region
          %p528 = scmp.lt.s32.totalorder %s25, 1
          %s529 = scalar_select %p528, %s25, 1
          %s530 = scalar_lea.vmem %s5, %s529
        $region52: #{_lambda_.3} parent=43 // pred_fallthru
          _
        // Predicated region
        $region53: #{_lambda_.3} parent=43 // pred_check
          %p531 = pneg %p181
        $region54: #{_lambda_.3} parent=43 // pred_check_branch
          %533 = sbr.rel (%p531) target = $region56
        $region55: #{_lambda_.3} parent=43 // pred_region
          %p534 = scmp.lt.s32.totalorder %s25, 1
          %s535 = scalar_select %p534, %s25, 1
          %s536 = smul.addr %s535, 12
          %s537 = sadd.s32 8, %s536
          %s538 = smul.addr %s537, 4
          %s539 = scalar_lea.vmem %s6, %s538
        $region56: #{_lambda_.3} parent=43 // pred_fallthru
          _
        // Predicated region
        $region57: #{_lambda_.3} parent=43 // pred_check
          %p540 = pneg %p207
        $region58: #{_lambda_.3} parent=43 // pred_check_branch
          %542 = sbr.rel (%p540) target = $region60
        $region59: #{_lambda_.3} parent=43 // pred_region
          %p543 = scmp.lt.s32.totalorder %s25, 1
          %s544 = scalar_select %p543, %s25, 1
          %s545 = smul.addr %s544, 4
          %s546 = smul.addr %s545, 4
          %s547 = scalar_lea.vmem %s7, %s546
        $region60: #{_lambda_.3} parent=43 // pred_fallthru
          _
        // Predicated region
        $region61: #{_lambda_.3} parent=43 // pred_check
          %p548 = pneg %p233
        $region62: #{_lambda_.3} parent=43 // pred_check_branch
          %550 = sbr.rel (%p548) target = $region64
        $region63: #{_lambda_.3} parent=43 // pred_region
          %p551 = scmp.lt.s32.totalorder %s25, 1
          %s552 = scalar_select %p551, %s25, 1
          %s553 = scalar_lea.vmem %s8, %s552
        $region64: #{_lambda_.3} parent=43 // pred_fallthru
          _
        // Predicated region
        $region65: #{_lambda_.3} parent=43 // pred_check
          %p554 = pneg %p259
        $region66: #{_lambda_.3} parent=43 // pred_check_branch
          %556 = sbr.rel (%p554) target = $region68
        $region67: #{_lambda_.3} parent=43 // pred_region
          %p557 = scmp.lt.s32.totalorder %s25, 1
          %s558 = scalar_select %p557, %s25, 1
          %s559 = scalar_lea.vmem %s9, %s558
        $region68: #{_lambda_.3} parent=43 // pred_fallthru
          _
        // Predicated region
        $region69: #{_lambda_.3} parent=43 // pred_check
          %p560 = pneg %p285
        $region70: #{_lambda_.3} parent=43 // pred_check_branch
          %562 = sbr.rel (%p560) target = $region72
        $region71: #{_lambda_.3} parent=43 // pred_region
          %p563 = scmp.lt.s32.totalorder %s25, 1
          %s564 = scalar_select %p563, %s25, 1
          %s565 = scalar_lea.vmem %s10, %s564
        $region72: #{_lambda_.3} parent=43 // pred_fallthru
          _
        // Predicated region
        $region73: #{_lambda_.3} parent=43 // pred_check
          %p566 = pneg %p311
        $region74: #{_lambda_.3} parent=43 // pred_check_branch
          %568 = sbr.rel (%p566) target = $region76
        $region75: #{_lambda_.3} parent=43 // pred_region
          %p569 = scmp.lt.s32.totalorder %s25, 1
          %s570 = scalar_select %p569, %s25, 1
          %s571 = smul.addr %s570, 4
          %s572 = smul.addr %s571, 4
          %s573 = scalar_lea.vmem %s11, %s572
        $region76: #{_lambda_.3} parent=43 // pred_fallthru
          _
        // Predicated region
        $region77: #{_lambda_.3} parent=43 // pred_check
          %p574 = pneg %p337
        $region78: #{_lambda_.3} parent=43 // pred_check_branch
          %576 = sbr.rel (%p574) target = $region80
        $region79: #{_lambda_.3} parent=43 // pred_region
          %p577 = scmp.lt.s32.totalorder %s25, 1
          %s578 = scalar_select %p577, %s25, 1
          %s579 = scalar_lea.vmem %s12, %s578
        $region80: #{_lambda_.3} parent=43 // pred_fallthru
          _
        // Predicated region
        $region81: #{_lambda_.3} parent=43 // pred_check
          %p580 = pneg %p363
        $region82: #{_lambda_.3} parent=43 // pred_check_branch
          %582 = sbr.rel (%p580) target = $region84
        $region83: #{_lambda_.3} parent=43 // pred_region
          %p583 = scmp.lt.s32.totalorder %s25, 1
          %s584 = scalar_select %p583, %s25, 1
          %s585 = smul.addr %s584, 16
          %s586 = smul.addr %s585, 4
          %s587 = scalar_lea.vmem %s13, %s586
        $region84: #{_lambda_.3} parent=43 // pred_fallthru
          _
        // Predicated region
        $region85: #{_lambda_.3} parent=43 // pred_check
          %p588 = pneg %p389
        $region86: #{_lambda_.3} parent=43 // pred_check_branch
          %590 = sbr.rel (%p588) target = $region88
        $region87: #{_lambda_.3} parent=43 // pred_region
          %p591 = scmp.lt.s32.totalorder %s25, 1
          %s592 = scalar_select %p591, %s25, 1
          %s593 = scalar_lea.vmem %s14, %s592
        $region88: #{_lambda_.3} parent=43 // pred_fallthru
          _
      $region44: #{_lambda_.3} parent=5 // pred_fallthru
        _
      %p594 = scmp.le.s32.totalorder 1, %s25
      %p595 = scmp.lt.s32.totalorder %s25, 3
      %p596 = pnand %p594, %p595
      %p597 = pneg %p596
      // Predicated region
      $region89: #{_lambda_.3} parent=5 // pred_check
        _
      $region90: #{_lambda_.3} parent=5 // pred_check_branch
        %599 = sbr.rel (%p596) target = $region92
      $region91: #{_lambda_.3} parent=5 // pred_region
        %s600 = ssub.s32 %s25, 1
        %p601 = pneg %p46
        %p602 = pneg %p43
        %p603 = pneg %p67
        %p604 = pneg %p64
        %p605 = pneg %p88
        %p606 = pneg %p85
        %p607 = pneg %p109
        %p608 = pneg %p106
        %p609 = scmp.lt.s32.totalorder %s30, 1
        %s610 = scalar_select %p609, %s30, 1
        %s611 = scalar_lea.vmem %s4, %s610
        %p612 = pneg %p135
        %p613 = pneg %p132
        %p614 = scmp.lt.s32.totalorder %s30, 1
        %s615 = scalar_select %p614, %s30, 1
        %s616 = scalar_lea.vmem %s5, %s615
        %p617 = pneg %p161
        %p618 = pneg %p158
        %p619 = scmp.lt.s32.totalorder %s30, 1
        %s620 = scalar_select %p619, %s30, 1
        %s621 = smul.addr %s620, 12
        %s622 = sadd.s32 8, %s621
        %s623 = smul.addr %s622, 4
        %s624 = scalar_lea.vmem %s6, %s623
        %p625 = pneg %p187
        %p626 = pneg %p184
        %p627 = scmp.lt.s32.totalorder %s30, 1
        %s628 = scalar_select %p627, %s30, 1
        %s629 = smul.addr %s628, 4
        %s630 = smul.addr %s629, 4
        %s631 = scalar_lea.vmem %s7, %s630
        %p632 = pneg %p213
        %p633 = pneg %p210
        %p634 = scmp.lt.s32.totalorder %s30, 1
        %s635 = scalar_select %p634, %s30, 1
        %s636 = scalar_lea.vmem %s8, %s635
        %p637 = pneg %p239
        %p638 = pneg %p236
        %p639 = scmp.lt.s32.totalorder %s30, 1
        %s640 = scalar_select %p639, %s30, 1
        %s641 = scalar_lea.vmem %s9, %s640
        %p642 = pneg %p265
        %p643 = pneg %p262
        %p644 = scmp.lt.s32.totalorder %s30, 1
        %s645 = scalar_select %p644, %s30, 1
        %s646 = scalar_lea.vmem %s10, %s645
        %p647 = pneg %p291
        %p648 = pneg %p288
        %p649 = scmp.lt.s32.totalorder %s30, 1
        %s650 = scalar_select %p649, %s30, 1
        %s651 = smul.addr %s650, 4
        %s652 = smul.addr %s651, 4
        %s653 = scalar_lea.vmem %s11, %s652
        %p654 = pneg %p317
        %p655 = pneg %p314
        %p656 = scmp.lt.s32.totalorder %s30, 1
        %s657 = scalar_select %p656, %s30, 1
        %s658 = scalar_lea.vmem %s12, %s657
        %p659 = pneg %p343
        %p660 = pneg %p340
        %p661 = scmp.lt.s32.totalorder %s30, 1
        %s662 = scalar_select %p661, %s30, 1
        %s663 = smul.addr %s662, 16
        %s664 = smul.addr %s663, 4
        %s665 = scalar_lea.vmem %s13, %s664
        %p666 = pneg %p369
        %p667 = pneg %p366
        %p668 = scmp.lt.s32.totalorder %s30, 1
        %s669 = scalar_select %p668, %s30, 1
        %s670 = scalar_lea.vmem %s14, %s669
        %p671 = pneg %p395
        %p672 = pneg %p392
        %p673 = pneg %p416
        %p674 = pneg %p413
        %p675 = pneg %p437
        %p676 = pneg %p434
        %p677 = pneg %p458
        %p678 = pneg %p455
        %p679 = pneg %p479
        %p680 = pneg %p476
        %p681 = scmp.lt.s32.totalorder %s30, 1
        %s682 = scalar_select %p681, %s30, 1
        %s683 = scalar_lea.vmem %s4, %s682
        %p684 = scmp.lt.s32.totalorder %s30, 1
        %s685 = scalar_select %p684, %s30, 1
        %s686 = scalar_lea.vmem %s5, %s685
        %p687 = scmp.lt.s32.totalorder %s30, 1
        %s688 = scalar_select %p687, %s30, 1
        %s689 = smul.addr %s688, 12
        %s690 = sadd.s32 8, %s689
        %s691 = smul.addr %s690, 4
        %s692 = scalar_lea.vmem %s6, %s691
        %p693 = scmp.lt.s32.totalorder %s30, 1
        %s694 = scalar_select %p693, %s30, 1
        %s695 = smul.addr %s694, 4
        %s696 = smul.addr %s695, 4
        %s697 = scalar_lea.vmem %s7, %s696
        %p698 = scmp.lt.s32.totalorder %s30, 1
        %s699 = scalar_select %p698, %s30, 1
        %s700 = scalar_lea.vmem %s8, %s699
        %p701 = scmp.lt.s32.totalorder %s30, 1
        %s702 = scalar_select %p701, %s30, 1
        %s703 = scalar_lea.vmem %s9, %s702
        %p704 = scmp.lt.s32.totalorder %s30, 1
        %s705 = scalar_select %p704, %s30, 1
        %s706 = scalar_lea.vmem %s10, %s705
        %p707 = scmp.lt.s32.totalorder %s30, 1
        %s708 = scalar_select %p707, %s30, 1
        %s709 = smul.addr %s708, 4
        %s710 = smul.addr %s709, 4
        %s711 = scalar_lea.vmem %s11, %s710
        %p712 = scmp.lt.s32.totalorder %s30, 1
        %s713 = scalar_select %p712, %s30, 1
        %s714 = scalar_lea.vmem %s12, %s713
        %p715 = scmp.lt.s32.totalorder %s30, 1
        %s716 = scalar_select %p715, %s30, 1
        %s717 = smul.addr %s716, 16
        %s718 = smul.addr %s717, 4
        %s719 = scalar_lea.vmem %s13, %s718
        %p720 = scmp.lt.s32.totalorder %s30, 1
        %s721 = scalar_select %p720, %s30, 1
        %s722 = scalar_lea.vmem %s14, %s721
        %p724 = scmp.eq.s32.totalorder %s30, 0
        // Predicated region
        $region93: #{_lambda_.3} parent=91 // pred_check
          %p725 = pneg %p724
        $region94: #{_lambda_.3} parent=91 // pred_check_branch
          %727 = sbr.rel (%p725) target = $region96
        $region95: #{_lambda_.3} parent=91 // pred_region
          %v728 = vld [vmem:[%s0] sm:$0x3]
          %v729 = vpack.c.bf16 %v728, %v728
          %v730 = vld [vmem:[%s1] sm:$0xf]
          %v731 = vld [vmem:[%s1 + $0x4] sm:$0xf]
          %v732 = vld [vmem:[%s1 + $0x8] sm:$0xf]
          %v733 = vld [vmem:[%s1 + $0xc] sm:$0xf]
          %v734 = vld [vmem:[%s2] sm:$0x1]
          %v736 = vlaneseq
          %v737 = vshrl.u32 %v736, 7
          %v738 = vsub.s32 0, %v737
          %v739 = vrot.slane %v734, %v738
          %v745 = vunpack.c.l.b16 %v730
          %v746 = vunpack.c.l.b16 %v731
          %v747 = vunpack.c.l.b16 %v732
          %v748 = vunpack.c.l.b16 %v733
          %v749 = vpack.c.b16 %v746, %v745
          %v750 = vpack.c.b16 %v748, %v747
          %vm753 = vcmask 261120
          %v755 = vsel %vm753, %v729, 0
          %757 = vmatprep.subr.bf16.mxu0 0
          %758 = vmatpush1.bf16.msra.mxu0 %v749
          %759 = vmatprep.subr.bf16.mxu0 0
          %760 = vmatpush1.bf16.msra.mxu0 %v750
          %761 = vmatprep.subr.bf16.mxu0 0
          %762 = vmatpush1.bf16.msra.mxu0 0
          %763 = vmatprep.subr.bf16.mxu0 0
          %764 = vmatpush1.bf16.msra.mxu0 0
          %765 = vmatprep.subr.bf16.mxu0 0
          %766 = vmatpush1.bf16.msra.mxu0 0
          %767 = vmatprep.subr.bf16.mxu0 0
          %768 = vmatpush1.bf16.msra.mxu0 0
          %769 = vmatprep.subr.bf16.mxu0 0
          %770 = vmatpush1.bf16.msra.mxu0 0
          %771 = vmatprep.subr.bf16.mxu0 0
          %772 = vmatpush1.bf16.msra.mxu0 0
          %773 = vmatprep.subr.bf16.mxu0 0
          %774 = vmatpush1.bf16.msra.mxu0 0
          %775 = vmatprep.subr.bf16.mxu0 0
          %776 = vmatpush1.bf16.msra.mxu0 0
          %777 = vmatprep.subr.bf16.mxu0 0
          %778 = vmatpush1.bf16.msra.mxu0 0
          %779 = vmatprep.subr.bf16.mxu0 0
          %780 = vmatpush1.bf16.msra.mxu0 0
          %781 = vmatprep.subr.bf16.mxu0 0
          %782 = vmatpush1.bf16.msra.mxu0 0
          %783 = vmatprep.subr.bf16.mxu0 0
          %784 = vmatpush1.bf16.msra.mxu0 0
          %785 = vmatprep.subr.bf16.mxu0 0
          %786 = vmatpush1.bf16.msra.mxu0 0
          %787 = vmatprep.subr.bf16.mxu0 0
          %788 = vmatpush1.bf16.msra.mxu0 0
          %789 = vmatprep.mubr.bf16.mxu0 0
          %790 = vmatmul.mubr.bf16.gmra.mrb[0].mxu0 %v755
          %v791 = vpop.f32.mrb[0].mxu0
          %v792 = vadd.f32 %v739, %v791
          %v793 = vpop.f32.mrb[0].mxu0
          %v794 = vpop.f32.mrb[0].mxu0
          %v795 = vpop.f32.mrb[0].mxu0
          %796 = vdwg.mxu0
          %v797 = vld [vmem:[%s3] sm:$0x1]
          %v799 = vlaneseq
          %v800 = vshrl.u32 %v799, 7
          %v801 = vsub.s32 0, %v800
          %v802 = vrot.slane %v797, %v801
          %v804 = vadd.f32 %v792, %v802
          %vm805 = vcmask 254976
          %806 = vst.msk [vmem:[#allocation2] sm:$0x3] %vm805, %v804
        $region96: #{_lambda_.3} parent=91 // pred_fallthru
          _
        %v807 = vld [vmem:[#allocation2] sm:$0x3]
        %v808 = vld [vmem:[%s683] sm:$0x1]
        %v809 = vld [vmem:[%s686] sm:$0x1]
        %vm810 = vcmask 254976
        %v811 = vsel %vm810, %v807, 0.0
        %812 = vadd.xlane.f32.xlu0 %v811
        %v813 = vpop.xlane.xlu0 %812
        %v814 = vrcp.pop 32.0
        %v815 = vmul.f32 %v813, %v814
        %v816 = vsub.f32 %v807, %v815
        %v817 = vmul.f32 %v816, %v816
        %v818 = vsel %vm810, %v817, 0.0
        %819 = vadd.xlane.f32.xlu0 %v818
        %v820 = vpop.xlane.xlu0 %819
        %v821 = vmul.f32 %v820, %v814
        %v822 = vadd.f32 %v821, 1e-05
        %v823 = vrsqrt.pop %v822
        %v824 = vmul.f32 %v816, %v823
        %v826 = vlaneseq
        %v827 = vshrl.u32 %v826, 7
        %v828 = vsub.s32 0, %v827
        %v829 = vrot.slane %v808, %v828
        %v831 = vmul.f32 %v824, %v829
        %v833 = vlaneseq
        %v834 = vshrl.u32 %v833, 7
        %v835 = vsub.s32 0, %v834
        %v836 = vrot.slane %v809, %v835
        %v838 = vadd.f32 %v831, %v836
        %v839 = vpack.c.bf16 %v838, %v838
        %v840 = vld [vmem:[%s692] sm:$0xf]
        %v841 = vld [vmem:[%s692 + $0x4] sm:$0xf]
        %v842 = vld [vmem:[%s692 + $0x8] sm:$0xf]
        %v843 = vld [vmem:[%s692 + $0xc] sm:$0xf]
        %v848 = vunpack.c.l.b16 %v840
        %v849 = vunpack.c.l.b16 %v841
        %v850 = vunpack.c.l.b16 %v842
        %v851 = vunpack.c.l.b16 %v843
        %v852 = vpack.c.b16 %v849, %v848
        %v853 = vpack.c.b16 %v851, %v850
        %vm856 = vcmask 261120
        %v858 = vsel %vm856, %v839, 0
        %860 = vmatprep.subr.bf16.mxu0 0
        %861 = vmatpush1.bf16.msra.mxu0 %v852
        %862 = vmatprep.subr.bf16.mxu0 0
        %863 = vmatpush1.bf16.msra.mxu0 %v853
        %864 = vmatprep.subr.bf16.mxu0 0
        %865 = vmatpush1.bf16.msra.mxu0 0
        %866 = vmatprep.subr.bf16.mxu0 0
        %867 = vmatpush1.bf16.msra.mxu0 0
        %868 = vmatprep.subr.bf16.mxu0 0
        %869 = vmatpush1.bf16.msra.mxu0 0
        %870 = vmatprep.subr.bf16.mxu0 0
        %871 = vmatpush1.bf16.msra.mxu0 0
        %872 = vmatprep.subr.bf16.mxu0 0
        %873 = vmatpush1.bf16.msra.mxu0 0
        %874 = vmatprep.subr.bf16.mxu0 0
        %875 = vmatpush1.bf16.msra.mxu0 0
        %876 = vmatprep.subr.bf16.mxu0 0
        %877 = vmatpush1.bf16.msra.mxu0 0
        %878 = vmatprep.subr.bf16.mxu0 0
        %879 = vmatpush1.bf16.msra.mxu0 0
        %880 = vmatprep.subr.bf16.mxu0 0
        %881 = vmatpush1.bf16.msra.mxu0 0
        %882 = vmatprep.subr.bf16.mxu0 0
        %883 = vmatpush1.bf16.msra.mxu0 0
        %884 = vmatprep.subr.bf16.mxu0 0
        %885 = vmatpush1.bf16.msra.mxu0 0
        %886 = vmatprep.subr.bf16.mxu0 0
        %887 = vmatpush1.bf16.msra.mxu0 0
        %888 = vmatprep.subr.bf16.mxu0 0
        %889 = vmatpush1.bf16.msra.mxu0 0
        %890 = vmatprep.subr.bf16.mxu0 0
        %891 = vmatpush1.bf16.msra.mxu0 0
        %892 = vmatprep.mubr.bf16.mxu0 0
        %893 = vmatmul.mubr.bf16.gmra.mrb[0].mxu0 %v858
        %v894 = vpop.f32.mrb[0].mxu0
        %v895 = vadd.f32 0.0, %v894
        %v896 = vpop.f32.mrb[0].mxu0
        %v897 = vpop.f32.mrb[0].mxu0
        %v898 = vpop.f32.mrb[0].mxu0
        %899 = vdwg.mxu0
        %v900 = vpack.c.bf16 %v895, %v895
        %v901 = vld [vmem:[%s697] sm:$0xf]
        %v902 = vld [vmem:[%s697 + $0x4] sm:$0xf]
        %v903 = vld [vmem:[%s697 + $0x8] sm:$0xf]
        %v904 = vld [vmem:[%s697 + $0xc] sm:$0xf]
        %v905 = vld [vmem:[%s700] sm:$0x1]
        %v907 = vlaneseq
        %v908 = vshrl.u32 %v907, 7
        %v909 = vsub.s32 0, %v908
        %v910 = vrot.slane %v905, %v909
        %v916 = vunpack.c.l.b16 %v901
        %v917 = vunpack.c.l.b16 %v902
        %v918 = vunpack.c.l.b16 %v903
        %v919 = vunpack.c.l.b16 %v904
        %v920 = vpack.c.b16 %v917, %v916
        %v921 = vpack.c.b16 %v919, %v918
        %v925 = vsel %vm856, %v900, 0
        %927 = vmatprep.subr.bf16.mxu0 0
        %928 = vmatpush1.bf16.msra.mxu0 %v920
        %929 = vmatprep.subr.bf16.mxu0 0
        %930 = vmatpush1.bf16.msra.mxu0 %v921
        %931 = vmatprep.subr.bf16.mxu0 0
        %932 = vmatpush1.bf16.msra.mxu0 0
        %933 = vmatprep.subr.bf16.mxu0 0
        %934 = vmatpush1.bf16.msra.mxu0 0
        %935 = vmatprep.subr.bf16.mxu0 0
        %936 = vmatpush1.bf16.msra.mxu0 0
        %937 = vmatprep.subr.bf16.mxu0 0
        %938 = vmatpush1.bf16.msra.mxu0 0
        %939 = vmatprep.subr.bf16.mxu0 0
        %940 = vmatpush1.bf16.msra.mxu0 0
        %941 = vmatprep.subr.bf16.mxu0 0
        %942 = vmatpush1.bf16.msra.mxu0 0
        %943 = vmatprep.subr.bf16.mxu0 0
        %944 = vmatpush1.bf16.msra.mxu0 0
        %945 = vmatprep.subr.bf16.mxu0 0
        %946 = vmatpush1.bf16.msra.mxu0 0
        %947 = vmatprep.subr.bf16.mxu0 0
        %948 = vmatpush1.bf16.msra.mxu0 0
        %949 = vmatprep.subr.bf16.mxu0 0
        %950 = vmatpush1.bf16.msra.mxu0 0
        %951 = vmatprep.subr.bf16.mxu0 0
        %952 = vmatpush1.bf16.msra.mxu0 0
        %953 = vmatprep.subr.bf16.mxu0 0
        %954 = vmatpush1.bf16.msra.mxu0 0
        %955 = vmatprep.subr.bf16.mxu0 0
        %956 = vmatpush1.bf16.msra.mxu0 0
        %957 = vmatprep.subr.bf16.mxu0 0
        %958 = vmatpush1.bf16.msra.mxu0 0
        %959 = vmatprep.mubr.bf16.mxu0 0
        %960 = vmatmul.mubr.bf16.gmra.mrb[0].mxu0 %v925
        %v961 = vpop.f32.mrb[0].mxu0
        %v962 = vadd.f32 %v910, %v961
        %v963 = vpop.f32.mrb[0].mxu0
        %v964 = vpop.f32.mrb[0].mxu0
        %v965 = vpop.f32.mrb[0].mxu0
        %966 = vdwg.mxu0
        %v967 = vadd.f32 %v807, %v962
        %v968 = vld [vmem:[%s703] sm:$0x1]
        %v969 = vld [vmem:[%s706] sm:$0x1]
        %v970 = vsel %vm810, %v967, 0.0
        %971 = vadd.xlane.f32.xlu0 %v970
        %v972 = vpop.xlane.xlu0 %971
        %v973 = vmul.f32 %v972, %v814
        %v974 = vsub.f32 %v967, %v973
        %v975 = vmul.f32 %v974, %v974
        %v976 = vsel %vm810, %v975, 0.0
        %977 = vadd.xlane.f32.xlu0 %v976
        %v978 = vpop.xlane.xlu0 %977
        %v979 = vmul.f32 %v978, %v814
        %v980 = vadd.f32 %v979, 1e-05
        %v981 = vrsqrt.pop %v980
        %v982 = vmul.f32 %v974, %v981
        %v984 = vlaneseq
        %v985 = vshrl.u32 %v984, 7
        %v986 = vsub.s32 0, %v985
        %v987 = vrot.slane %v968, %v986
        %v989 = vmul.f32 %v982, %v987
        %v991 = vlaneseq
        %v992 = vshrl.u32 %v991, 7
        %v993 = vsub.s32 0, %v992
        %v994 = vrot.slane %v969, %v993
        %v996 = vadd.f32 %v989, %v994
        %v997 = vpack.c.bf16 %v996, %v996
        %v998 = vld [vmem:[%s711] sm:$0xf]
        %v999 = vld [vmem:[%s711 + $0x4] sm:$0xf]
        %v1000 = vld [vmem:[%s711 + $0x8] sm:$0xf]
        %v1001 = vld [vmem:[%s711 + $0xc] sm:$0xf]
        %v1002 = vld [vmem:[%s714] sm:$0x1]
        %v1004 = vlaneseq
        %v1005 = vshrl.u32 %v1004, 7
        %v1006 = vsub.s32 0, %v1005
        %v1007 = vrot.slane %v1002, %v1006
        %v1013 = vunpack.c.l.b16 %v998
        %v1014 = vunpack.c.l.b16 %v999
        %v1015 = vunpack.c.l.b16 %v1000
        %v1016 = vunpack.c.l.b16 %v1001
        %v1017 = vpack.c.b16 %v1014, %v1013
        %v1018 = vpack.c.b16 %v1016, %v1015
        %v1022 = vsel %vm856, %v997, 0
        %1024 = vmatprep.subr.bf16.mxu0 0
        %1025 = vmatpush1.bf16.msra.mxu0 %v1017
        %1026 = vmatprep.subr.bf16.mxu0 0
        %1027 = vmatpush1.bf16.msra.mxu0 %v1018
        %1028 = vmatprep.subr.bf16.mxu0 0
        %1029 = vmatpush1.bf16.msra.mxu0 0
        %1030 = vmatprep.subr.bf16.mxu0 0
        %1031 = vmatpush1.bf16.msra.mxu0 0
        %1032 = vmatprep.subr.bf16.mxu0 0
        %1033 = vmatpush1.bf16.msra.mxu0 0
        %1034 = vmatprep.subr.bf16.mxu0 0
        %1035 = vmatpush1.bf16.msra.mxu0 0
        %1036 = vmatprep.subr.bf16.mxu0 0
        %1037 = vmatpush1.bf16.msra.mxu0 0
        %1038 = vmatprep.subr.bf16.mxu0 0
        %1039 = vmatpush1.bf16.msra.mxu0 0
        %1040 = vmatprep.subr.bf16.mxu0 0
        %1041 = vmatpush1.bf16.msra.mxu0 0
        %1042 = vmatprep.subr.bf16.mxu0 0
        %1043 = vmatpush1.bf16.msra.mxu0 0
        %1044 = vmatprep.subr.bf16.mxu0 0
        %1045 = vmatpush1.bf16.msra.mxu0 0
        %1046 = vmatprep.subr.bf16.mxu0 0
        %1047 = vmatpush1.bf16.msra.mxu0 0
        %1048 = vmatprep.subr.bf16.mxu0 0
        %1049 = vmatpush1.bf16.msra.mxu0 0
        %1050 = vmatprep.subr.bf16.mxu0 0
        %1051 = vmatpush1.bf16.msra.mxu0 0
        %1052 = vmatprep.subr.bf16.mxu0 0
        %1053 = vmatpush1.bf16.msra.mxu0 0
        %1054 = vmatprep.subr.bf16.mxu0 0
        %1055 = vmatpush1.bf16.msra.mxu0 0
        %1056 = vmatprep.mubr.bf16.mxu0 0
        %1057 = vmatmul.mubr.bf16.gmra.mrb[0].mxu0 %v1022
        %v1058 = vpop.f32.mrb[0].mxu0
        %v1059 = vadd.f32 %v1007, %v1058
        %v1060 = vpop.f32.mrb[0].mxu0
        %v1061 = vpop.f32.mrb[0].mxu0
        %v1062 = vpop.f32.mrb[0].mxu0
        %1063 = vdwg.mxu0
        %v1064 = vmul.f32 %v1059, 0.5
        %v1065 = vmul.f32 %v1059, 0.044715
        %v1066 = vmul.f32 %v1065, %v1059
        %v1067 = vmul.f32 %v1066, %v1059
        %v1068 = vadd.f32 %v1059, %v1067
        %v1069 = vmul.f32 %v1068, 0.7978846
        %v1070 = vtanh.pop %v1069
        %v1071 = vadd.f32 %v1070, 1.0
        %v1072 = vmul.f32 %v1064, %v1071
        %v1073 = vpack.c.bf16 %v1072, %v1072
        %v1074 = vld [vmem:[%s719] sm:$0xf]
        %v1075 = vld [vmem:[%s719 + $0x4] sm:$0xf]
        %v1076 = vld [vmem:[%s719 + $0x8] sm:$0xf]
        %v1077 = vld [vmem:[%s719 + $0xc] sm:$0xf]
        %v1078 = vld [vmem:[%s719 + $0x10] sm:$0xf]
        %v1079 = vld [vmem:[%s719 + $0x14] sm:$0xf]
        %v1080 = vld [vmem:[%s719 + $0x18] sm:$0xf]
        %v1081 = vld [vmem:[%s719 + $0x1c] sm:$0xf]
        %v1082 = vld [vmem:[%s719 + $0x20] sm:$0xf]
        %v1083 = vld [vmem:[%s719 + $0x24] sm:$0xf]
        %v1084 = vld [vmem:[%s719 + $0x28] sm:$0xf]
        %v1085 = vld [vmem:[%s719 + $0x2c] sm:$0xf]
        %v1086 = vld [vmem:[%s719 + $0x30] sm:$0xf]
        %v1087 = vld [vmem:[%s719 + $0x34] sm:$0xf]
        %v1088 = vld [vmem:[%s719 + $0x38] sm:$0xf]
        %v1089 = vld [vmem:[%s719 + $0x3c] sm:$0xf]
        %v1090 = vld [vmem:[%s722] sm:$0x1]
        %v1092 = vlaneseq
        %v1093 = vshrl.u32 %v1092, 7
        %v1094 = vsub.s32 0, %v1093
        %v1095 = vrot.slane %v1090, %v1094
        %v1113 = vunpack.c.l.b16 %v1074
        %v1114 = vunpack.c.l.b16 %v1075
        %v1115 = vunpack.c.l.b16 %v1076
        %v1116 = vunpack.c.l.b16 %v1077
        %v1117 = vunpack.c.l.b16 %v1078
        %v1118 = vunpack.c.l.b16 %v1079
        %v1119 = vunpack.c.l.b16 %v1080
        %v1120 = vunpack.c.l.b16 %v1081
        %v1121 = vunpack.c.l.b16 %v1082
        %v1122 = vunpack.c.l.b16 %v1083
        %v1123 = vunpack.c.l.b16 %v1084
        %v1124 = vunpack.c.l.b16 %v1085
        %v1125 = vunpack.c.l.b16 %v1086
        %v1126 = vunpack.c.l.b16 %v1087
        %v1127 = vunpack.c.l.b16 %v1088
        %v1128 = vunpack.c.l.b16 %v1089
        %v1129 = vpack.c.b16 %v1114, %v1113
        %v1130 = vpack.c.b16 %v1116, %v1115
        %v1131 = vpack.c.b16 %v1118, %v1117
        %v1132 = vpack.c.b16 %v1120, %v1119
        %v1133 = vpack.c.b16 %v1122, %v1121
        %v1134 = vpack.c.b16 %v1124, %v1123
        %v1135 = vpack.c.b16 %v1126, %v1125
        %v1136 = vpack.c.b16 %v1128, %v1127
        %1145 = vmatprep.subr.bf16.mxu0 0
        %1146 = vmatpush1.bf16.msra.mxu0 %v1129
        %1147 = vmatprep.subr.bf16.mxu0 0
        %1148 = vmatpush1.bf16.msra.mxu0 %v1130
        %1149 = vmatprep.subr.bf16.mxu0 0
        %1150 = vmatpush1.bf16.msra.mxu0 %v1131
        %1151 = vmatprep.subr.bf16.mxu0 0
        %1152 = vmatpush1.bf16.msra.mxu0 %v1132
        %1153 = vmatprep.subr.bf16.mxu0 0
        %1154 = vmatpush1.bf16.msra.mxu0 %v1133
        %1155 = vmatprep.subr.bf16.mxu0 0
        %1156 = vmatpush1.bf16.msra.mxu0 %v1134
        %1157 = vmatprep.subr.bf16.mxu0 0
        %1158 = vmatpush1.bf16.msra.mxu0 %v1135
        %1159 = vmatprep.subr.bf16.mxu0 0
        %1160 = vmatpush1.bf16.msra.mxu0 %v1136
        %1161 = vmatprep.subr.bf16.mxu0 0
        %1162 = vmatpush1.bf16.msra.mxu0 0
        %1163 = vmatprep.subr.bf16.mxu0 0
        %1164 = vmatpush1.bf16.msra.mxu0 0
        %1165 = vmatprep.subr.bf16.mxu0 0
        %1166 = vmatpush1.bf16.msra.mxu0 0
        %1167 = vmatprep.subr.bf16.mxu0 0
        %1168 = vmatpush1.bf16.msra.mxu0 0
        %1169 = vmatprep.subr.bf16.mxu0 0
        %1170 = vmatpush1.bf16.msra.mxu0 0
        %1171 = vmatprep.subr.bf16.mxu0 0
        %1172 = vmatpush1.bf16.msra.mxu0 0
        %1173 = vmatprep.subr.bf16.mxu0 0
        %1174 = vmatpush1.bf16.msra.mxu0 0
        %1175 = vmatprep.subr.bf16.mxu0 0
        %1176 = vmatpush1.bf16.msra.mxu0 0
        %1177 = vmatprep.mubr.bf16.mxu0 0
        %1178 = vmatmul.mubr.bf16.gmra.mrb[0].mxu0 %v1073
        %v1179 = vpop.f32.mrb[0].mxu0
        %v1180 = vadd.f32 %v1095, %v1179
        %v1181 = vpop.f32.mrb[0].mxu0
        %v1182 = vpop.f32.mrb[0].mxu0
        %v1183 = vpop.f32.mrb[0].mxu0
        %1184 = vdwg.mxu0
        %v1185 = vadd.f32 %v967, %v1180
        %1186 = vst.msk [vmem:[#allocation2] sm:$0x3] %vm810, %v1185
        %p1187 = scmp.eq.s32.totalorder %s30, 1
        // Predicated region
        $region97: #{_lambda_.3} parent=91 // pred_check
          %p1188 = pneg %p1187
        $region98: #{_lambda_.3} parent=91 // pred_check_branch
          %1190 = sbr.rel (%p1188) target = $region100
        $region99: #{_lambda_.3} parent=91 // pred_region
          %v1191 = vld [vmem:[%s15] sm:$0x1]
          %v1192 = vld [vmem:[%s16] sm:$0x1]
          %v1193 = vsel %vm810, %v1185, 0.0
          %1194 = vadd.xlane.f32.xlu0 %v1193
          %v1195 = vpop.xlane.xlu0 %1194
          %v1196 = vmul.f32 %v1195, %v814
          %v1197 = vsub.f32 %v1185, %v1196
          %v1198 = vmul.f32 %v1197, %v1197
          %v1199 = vsel %vm810, %v1198, 0.0
          %1200 = vadd.xlane.f32.xlu0 %v1199
          %v1201 = vpop.xlane.xlu0 %1200
          %v1202 = vmul.f32 %v1201, %v814
          %v1203 = vadd.f32 %v1202, 1e-05
          %v1204 = vrsqrt.pop %v1203
          %v1205 = vmul.f32 %v1197, %v1204
          %v1207 = vlaneseq
          %v1208 = vshrl.u32 %v1207, 7
          %v1209 = vsub.s32 0, %v1208
          %v1210 = vrot.slane %v1191, %v1209
          %v1212 = vmul.f32 %v1205, %v1210
          %v1214 = vlaneseq
          %v1215 = vshrl.u32 %v1214, 7
          %v1216 = vsub.s32 0, %v1215
          %v1217 = vrot.slane %v1192, %v1216
          %v1219 = vadd.f32 %v1212, %v1217
          %v1220 = vpack.c.bf16 %v1219, %v1219
          %v1221 = vld [vmem:[%s17] sm:$0xf]
          %v1222 = vld [vmem:[%s17 + $0x4] sm:$0xf]
          %v1223 = vld [vmem:[%s17 + $0x8] sm:$0xf]
          %v1224 = vld [vmem:[%s17 + $0xc] sm:$0xf]
          %v1229 = vunpack.c.l.b16 %v1221
          %v1230 = vunpack.c.l.b16 %v1222
          %v1231 = vunpack.c.l.b16 %v1223
          %v1232 = vunpack.c.l.b16 %v1224
          %v1233 = vpack.c.b16 %v1230, %v1229
          %v1234 = vpack.c.b16 %v1232, %v1231
          %v1238 = vsel %vm856, %v1220, 0
          %1240 = vmatprep.subr.bf16.mxu0 0
          %1241 = vmatpush1.bf16.msra.mxu0 %v1233
          %1242 = vmatprep.subr.bf16.mxu0 0
          %1243 = vmatpush1.bf16.msra.mxu0 %v1234
          %1244 = vmatprep.subr.bf16.mxu0 0
          %1245 = vmatpush1.bf16.msra.mxu0 0
          %1246 = vmatprep.subr.bf16.mxu0 0
          %1247 = vmatpush1.bf16.msra.mxu0 0
          %1248 = vmatprep.subr.bf16.mxu0 0
          %1249 = vmatpush1.bf16.msra.mxu0 0
          %1250 = vmatprep.subr.bf16.mxu0 0
          %1251 = vmatpush1.bf16.msra.mxu0 0
          %1252 = vmatprep.subr.bf16.mxu0 0
          %1253 = vmatpush1.bf16.msra.mxu0 0
          %1254 = vmatprep.subr.bf16.mxu0 0
          %1255 = vmatpush1.bf16.msra.mxu0 0
          %1256 = vmatprep.subr.bf16.mxu0 0
          %1257 = vmatpush1.bf16.msra.mxu0 0
          %1258 = vmatprep.subr.bf16.mxu0 0
          %1259 = vmatpush1.bf16.msra.mxu0 0
          %1260 = vmatprep.subr.bf16.mxu0 0
          %1261 = vmatpush1.bf16.msra.mxu0 0
          %1262 = vmatprep.subr.bf16.mxu0 0
          %1263 = vmatpush1.bf16.msra.mxu0 0
          %1264 = vmatprep.subr.bf16.mxu0 0
          %1265 = vmatpush1.bf16.msra.mxu0 0
          %1266 = vmatprep.subr.bf16.mxu0 0
          %1267 = vmatpush1.bf16.msra.mxu0 0
          %1268 = vmatprep.subr.bf16.mxu0 0
          %1269 = vmatpush1.bf16.msra.mxu0 0
          %1270 = vmatprep.subr.bf16.mxu0 0
          %1271 = vmatpush1.bf16.msra.mxu0 0
          %1272 = vmatprep.mubr.bf16.mxu0 0
          %1273 = vmatmul.mubr.bf16.gmra.mrb[0].mxu0 %v1238
          %v1274 = vpop.f32.mrb[0].mxu0
          %v1275 = vadd.f32 0.0, %v1274
          %v1276 = vpop.f32.mrb[0].mxu0
          %v1277 = vpop.f32.mrb[0].mxu0
          %v1278 = vpop.f32.mrb[0].mxu0
          %1279 = vdwg.mxu0
          %vm1280 = vcmask 517120
          %1281 = vst.msk [vmem:[#allocation3] sm:$0x3] %vm1280, %v1275
        $region100: #{_lambda_.3} parent=91 // pred_fallthru
          _
        // Predicated region
        $region101: #{_lambda_.3} parent=91 // pred_check
          %p1282 = pneg %p476
        $region102: #{_lambda_.3} parent=91 // pred_check_branch
          %1284 = sbr.rel (%p1282) target = $region104
        $region103: #{_lambda_.3} parent=91 // pred_region
          %s1286 = ssub.s32 32, 32
          %1287 = vsyncadd [#allocation4], %s1286
          %s1289 = sshll.u32 [#allocation3], 4
          %s1290 = int_to_ptr.vmem [resolvable:$true] %s1289
          %1292 = dma.vmem_to_hbm [thread:$0]  %s1290, 32, %s18, [#allocation4]
        $region104: #{_lambda_.3} parent=91 // pred_fallthru
          _
        // Predicated region
        $region105: #{_lambda_.3} parent=91 // pred_check
          %p1293 = pneg %p476
        $region106: #{_lambda_.3} parent=91 // pred_check_branch
          %1295 = sbr.rel (%p1293) target = $region108
        $region107: #{_lambda_.3} parent=91 // pred_region
          %1296 = dma.done [#allocation4], 32
        $region108: #{_lambda_.3} parent=91 // pred_fallthru
          _
      $region92: #{_lambda_.3} parent=5 // pred_fallthru
        _
      %p1297 = scmp.le.s32.totalorder 2, %s25
      // Predicated region
      $region109: #{_lambda_.3} parent=5 // pred_check
        %p1298 = pneg %p1297
      $region110: #{_lambda_.3} parent=5 // pred_check_branch
        %1300 = sbr.rel (%p1298) target = $region112
      $region111: #{_lambda_.3} parent=5 // pred_region
        %s1301 = ssub.s32 %s25, 2
      $region112: #{_lambda_.3} parent=5 // pred_fallthru
        _
    $region6: #{_lambda_.3} parent=1 // loop_footer
      %s29 = sadd.s32 1, %s25
    $region7: #{_lambda_.3} parent=1 // loop_footer_branch
      %24 = sbr.rel target = $region3
    $region8: #{_lambda_.3} parent=1 // loop_exit
      _
    %1302 = vsyncpa [#allocation4], 1
    %s1303 = scalar_lea.sflag [#allocation4], 1
    %1304 = vsyncpa %s1303, 1

// kernel: _lambda_.2
$region0: #{_lambda_.2}
  #allocation0 [shape = 'u32[]', space=smem, size = 0x4, offset = 0x4, fixed_abs, tag = 'smem constant byte address 0x4 - core index']
  #allocation1 [shape = 'u32[144,128]{1,0:T(1,128)}', space=vmem, size = 0x12000, scoped, tag = 'internal scratch']
  %s0 = inlined_call_operand.vmem [shape: f32[16,32], index: 0, kind: input, shape index: {}, may-alias: {0,16}]
  %s1 = inlined_call_operand.vmem [shape: f32[2,8], index: 1, kind: input, shape index: {}]
  %s2 = inlined_call_operand.vmem [shape: f32[1,32], index: 2, kind: input, shape index: {}]
  %s3 = inlined_call_operand.vmem [shape: f32[1,32], index: 3, kind: input, shape index: {}]
  %s4 = inlined_call_operand.vmem [shape: bf16[2,3,32,32], index: 4, kind: input, shape index: {}]
  %s5 = inlined_call_operand.vmem [shape: f32[2,3,1,32], index: 5, kind: input, shape index: {}]
  %s6 = inlined_call_operand.hbm [shape: bf16[2,32,32], index: 6, kind: input, shape index: {}]
  %s7 = inlined_call_operand.vmem [shape: f32[2,1,32], index: 7, kind: input, shape index: {}, may-alias: {7,9,13,15}]
  %s8 = inlined_call_operand.vmem [shape: f32[2,1,32], index: 8, kind: input, shape index: {}, may-alias: {8,14}]
  %s9 = inlined_call_operand.vmem [shape: f32[2,1,32], index: 9, kind: input, shape index: {}, may-alias: {7,9,13,15}]
  %s10 = inlined_call_operand.hbm [shape: bf16[2,32,128], index: 10, kind: input, shape index: {}]
  %s11 = inlined_call_operand.vmem [shape: f32[2,1,128], index: 11, kind: input, shape index: {}]
  %s12 = inlined_call_operand.vmem [shape: bf16[2,128,32], index: 12, kind: input, shape index: {}]
  %s13 = inlined_call_operand.vmem [shape: f32[2,1,32], index: 13, kind: input, shape index: {}, may-alias: {7,9,13,15}]
  %s14 = inlined_call_operand.vmem [shape: f32[2,1,32], index: 14, kind: input, shape index: {}, may-alias: {8,14}]
  %s15 = inlined_call_operand.vmem [shape: f32[2,1,32], index: 15, kind: input, shape index: {}, may-alias: {7,9,13,15}]
  %s16 = inlined_call_operand.vmem [shape: f32[16,32], index: 16, kind: output, shape index: {}, may-alias: {0,16}]
  %s17 = sld [smem:[#allocation0]]
  $region109: #{_lambda_.2} parent=0
    _
  %s19 = ssub.s32 1, %s17
  %s20 = scalar_select 0, %s19, %s17
  $region1: #{_lambda_.2} parent=0
    #allocation2 [shape = 'u8[16384]{0}', space=vmem, size = 0x4000, scoped, tag = 'input window, operand 6']
    #allocation3 [shape = 's32[2]{0}', space=sflag, size = 0x8, scoped, tag = 'scoped memory for _lambda_.2']
    #allocation4 [shape = 'u8[16384]{0}', space=vmem, size = 0x4000, scoped, tag = 'input window, operand 10']
    #allocation5 [shape = 's32[2]{0}', space=sflag, size = 0x8, scoped, tag = 'scoped memory for _lambda_.2']
    %21 = vsyncpa [#allocation3], 0
    %s22 = scalar_lea.sflag [#allocation3], 1
    %23 = vsyncpa %s22, 0
    %24 = vsyncpa [#allocation5], 0
    %s25 = scalar_lea.sflag [#allocation5], 1
    %26 = vsyncpa %s25, 0
    loop: start=0, step=1, limit=4
    $region2: #{_lambda_.2} parent=1 // loop_pre_header
      _
    $region3: #{_lambda_.2} parent=1 // loop_header
      %s28 = sphi 0, %s32
      %p29 = scmp.ge.s32.totalorder %s28, 4
      %s36 = sphi 0, %s36
      %s38 = sphi 0, %s36
      %s39 = sphi 0, %s38
      %s53 = sphi 0, %s39
      %s57 = sphi 0, %s57
      %s59 = sphi 0, %s57
      %s60 = sphi 0, %s59
      %s74 = sphi 0, %s60
      %s78 = sphi 0, %s78
      %s80 = sphi 0, %s78
      %s81 = sphi 0, %s80
      %s95 = sphi 0, %s81
      %s99 = sphi 0, %s99
      %s101 = sphi 0, %s99
      %s102 = sphi 0, %s101
      %s116 = sphi 0, %s102
      %s122 = sphi 0, %s124
      %s125 = sphi 0, %s122
      %s126 = sphi 0, %s125
      %s142 = sphi 0, %s126
      %s148 = sphi 0, %s150
      %s151 = sphi 0, %s148
      %s152 = sphi 0, %s151
      %s168 = sphi 0, %s152
      %s174 = sphi 0, %s176
      %s177 = sphi 0, %s174
      %s178 = sphi 0, %s177
      %s194 = sphi 0, %s178
      %s200 = sphi 0, %s202
      %s203 = sphi 0, %s200
      %s204 = sphi 0, %s203
      %s220 = sphi 0, %s204
      %s226 = sphi 0, %s228
      %s229 = sphi 0, %s226
      %s230 = sphi 0, %s229
      %s246 = sphi 0, %s230
      %s252 = sphi 0, %s254
      %s255 = sphi 0, %s252
      %s256 = sphi 0, %s255
      %s272 = sphi 0, %s256
      %s278 = sphi 0, %s280
      %s281 = sphi 0, %s278
      %s282 = sphi 0, %s281
      %s298 = sphi 0, %s282
      %s304 = sphi 0, %s306
      %s307 = sphi 0, %s304
      %s308 = sphi 0, %s307
      %s324 = sphi 0, %s308
      %s330 = sphi 0, %s332
      %s333 = sphi 0, %s330
      %s334 = sphi 0, %s333
      %s350 = sphi 0, %s334
      %s356 = sphi 0, %s358
      %s359 = sphi 0, %s356
      %s360 = sphi 0, %s359
      %s376 = sphi 0, %s360
      %s382 = sphi 0, %s384
      %s385 = sphi 0, %s382
      %s386 = sphi 0, %s385
      %s402 = sphi 0, %s386
      %s408 = sphi 0, %s410
      %s411 = sphi 0, %s408
      %s412 = sphi 0, %s411
      %s428 = sphi 0, %s412
      %s432 = sphi 0, %s432
      %s434 = sphi 0, %s432
      %s435 = sphi 0, %s434
      %s449 = sphi 0, %s435
    $region4: #{_lambda_.2} parent=1 // loop_header_branch
      %31 = sbr.rel (%p29) target = $region8
    $region5: #{_lambda_.2} parent=1 // loop_body
      %s33 = ssub.s32 %s28, 1
      %s34 = ssub.s32 %s28, 2
      %s35 = sadd.s32 %s28, 1
      %s37 = sadd.s32 %s36, 1
      %p40 = scmp.eq.s32.totalorder %s28, 1
      %p41 = scmp.ne.s32.totalorder %s36, %s38
      %p42 = scmp.eq.s32.totalorder %s28, 0
      %p43 = por %p41, %p42
      %p44 = scmp.ne.s32.totalorder %s36, %s38
      %p45 = scmp.eq.s32.totalorder %s33, 1
      %p46 = por %p44, %p45
      %p47 = scmp.ne.s32.totalorder %s38, %s39
      %p48 = scmp.eq.s32.totalorder %s33, 0
      %p49 = por %p47, %p48
      %p50 = scmp.ne.s32.totalorder %s38, %s39
      %p51 = scmp.eq.s32.totalorder %s34, 1
      %p52 = por %p50, %p51
      %p54 = scmp.ne.s32.totalorder %s39, %s53
      %p55 = scmp.eq.s32.totalorder %s34, 0
      %p56 = por %p54, %p55
      %s58 = sadd.s32 %s57, 1
      %p61 = scmp.eq.s32.totalorder %s28, 1
      %p62 = scmp.ne.s32.totalorder %s57, %s59
      %p63 = scmp.eq.s32.totalorder %s28, 0
      %p64 = por %p62, %p63
      %p65 = scmp.ne.s32.totalorder %s57, %s59
      %p66 = scmp.eq.s32.totalorder %s33, 1
      %p67 = por %p65, %p66
      %p68 = scmp.ne.s32.totalorder %s59, %s60
      %p69 = scmp.eq.s32.totalorder %s33, 0
      %p70 = por %p68, %p69
      %p71 = scmp.ne.s32.totalorder %s59, %s60
      %p72 = scmp.eq.s32.totalorder %s34, 1
      %p73 = por %p71, %p72
      %p75 = scmp.ne.s32.totalorder %s60, %s74
      %p76 = scmp.eq.s32.totalorder %s34, 0
      %p77 = por %p75, %p76
      %s79 = sadd.s32 %s78, 1
      %p82 = scmp.eq.s32.totalorder %s28, 1
      %p83 = scmp.ne.s32.totalorder %s78, %s80
      %p84 = scmp.eq.s32.totalorder %s28, 0
      %p85 = por %p83, %p84
      %p86 = scmp.ne.s32.totalorder %s78, %s80
      %p87 = scmp.eq.s32.totalorder %s33, 1
      %p88 = por %p86, %p87
      %p89 = scmp.ne.s32.totalorder %s80, %s81
      %p90 = scmp.eq.s32.totalorder %s33, 0
      %p91 = por %p89, %p90
      %p92 = scmp.ne.s32.totalorder %s80, %s81
      %p93 = scmp.eq.s32.totalorder %s34, 1
      %p94 = por %p92, %p93
      %p96 = scmp.ne.s32.totalorder %s81, %s95
      %p97 = scmp.eq.s32.totalorder %s34, 0
      %p98 = por %p96, %p97
      %s100 = sadd.s32 %s99, 1
      %p103 = scmp.eq.s32.totalorder %s28, 1
      %p104 = scmp.ne.s32.totalorder %s99, %s101
      %p105 = scmp.eq.s32.totalorder %s28, 0
      %p106 = por %p104, %p105
      %p107 = scmp.ne.s32.totalorder %s99, %s101
      %p108 = scmp.eq.s32.totalorder %s33, 1
      %p109 = por %p107, %p108
      %p110 = scmp.ne.s32.totalorder %s101, %s102
      %p111 = scmp.eq.s32.totalorder %s33, 0
      %p112 = por %p110, %p111
      %p113 = scmp.ne.s32.totalorder %s101, %s102
      %p114 = scmp.eq.s32.totalorder %s34, 1
      %p115 = por %p113, %p114
      %p117 = scmp.ne.s32.totalorder %s102, %s116
      %p118 = scmp.eq.s32.totalorder %s34, 0
      %p119 = por %p117, %p118
      %s120 = ssub.s32 %s28, %s35
      %p121 = scmp.eq.s32.totalorder %s120, 0
      %s123 = sadd.s32 %s122, 1
      %s124 = scalar_select %p121, %s122, %s123
      %p127 = pneg %p121
      %p128 = scmp.eq.s32.totalorder %s28, 1
      %p129 = por %p127, %p128
      %p130 = scmp.ne.s32.totalorder %s122, %s125
      %p131 = scmp.eq.s32.totalorder %s28, 0
      %p132 = por %p130, %p131
      %p133 = scmp.ne.s32.totalorder %s122, %s125
      %p134 = scmp.eq.s32.totalorder %s33, 1
      %p135 = por %p133, %p134
      %p136 = scmp.ne.s32.totalorder %s125, %s126
      %p137 = scmp.eq.s32.totalorder %s33, 0
      %p138 = por %p136, %p137
      %p139 = scmp.ne.s32.totalorder %s125, %s126
      %p140 = scmp.eq.s32.totalorder %s34, 1
      %p141 = por %p139, %p140
      %p143 = scmp.ne.s32.totalorder %s126, %s142
      %p144 = scmp.eq.s32.totalorder %s34, 0
      %p145 = por %p143, %p144
      %s146 = ssub.s32 %s28, %s35
      %p147 = scmp.eq.s32.totalorder %s146, 0
      %s149 = sadd.s32 %s148, 1
      %s150 = scalar_select %p147, %s148, %s149
      %p153 = pneg %p147
      %p154 = scmp.eq.s32.totalorder %s28, 1
      %p155 = por %p153, %p154
      %p156 = scmp.ne.s32.totalorder %s148, %s151
      %p157 = scmp.eq.s32.totalorder %s28, 0
      %p158 = por %p156, %p157
      %p159 = scmp.ne.s32.totalorder %s148, %s151
      %p160 = scmp.eq.s32.totalorder %s33, 1
      %p161 = por %p159, %p160
      %p162 = scmp.ne.s32.totalorder %s151, %s152
      %p163 = scmp.eq.s32.totalorder %s33, 0
      %p164 = por %p162, %p163
      %p165 = scmp.ne.s32.totalorder %s151, %s152
      %p166 = scmp.eq.s32.totalorder %s34, 1
      %p167 = por %p165, %p166
      %p169 = scmp.ne.s32.totalorder %s152, %s168
      %p170 = scmp.eq.s32.totalorder %s34, 0
      %p171 = por %p169, %p170
      %s172 = ssub.s32 %s28, %s35
      %p173 = scmp.eq.s32.totalorder %s172, 0
      %s175 = sadd.s32 %s174, 1
      %s176 = scalar_select %p173, %s174, %s175
      %p179 = pneg %p173
      %p180 = scmp.eq.s32.totalorder %s28, 1
      %p181 = por %p179, %p180
      %p182 = scmp.ne.s32.totalorder %s174, %s177
      %p183 = scmp.eq.s32.totalorder %s28, 0
      %p184 = por %p182, %p183
      %p185 = scmp.ne.s32.totalorder %s174, %s177
      %p186 = scmp.eq.s32.totalorder %s33, 1
      %p187 = por %p185, %p186
      %p188 = scmp.ne.s32.totalorder %s177, %s178
      %p189 = scmp.eq.s32.totalorder %s33, 0
      %p190 = por %p188, %p189
      %p191 = scmp.ne.s32.totalorder %s177, %s178
      %p192 = scmp.eq.s32.totalorder %s34, 1
      %p193 = por %p191, %p192
      %p195 = scmp.ne.s32.totalorder %s178, %s194
      %p196 = scmp.eq.s32.totalorder %s34, 0
      %p197 = por %p195, %p196
      %s198 = ssub.s32 %s28, %s35
      %p199 = scmp.eq.s32.totalorder %s198, 0
      %s201 = sadd.s32 %s200, 1
      %s202 = scalar_select %p199, %s200, %s201
      %p205 = pneg %p199
      %p206 = scmp.eq.s32.totalorder %s28, 1
      %p207 = por %p205, %p206
      %p208 = scmp.ne.s32.totalorder %s200, %s203
      %p209 = scmp.eq.s32.totalorder %s28, 0
      %p210 = por %p208, %p209
      %p211 = scmp.ne.s32.totalorder %s200, %s203
      %p212 = scmp.eq.s32.totalorder %s33, 1
      %p213 = por %p211, %p212
      %p214 = scmp.ne.s32.totalorder %s203, %s204
      %p215 = scmp.eq.s32.totalorder %s33, 0
      %p216 = por %p214, %p215
      %p217 = scmp.ne.s32.totalorder %s203, %s204
      %p218 = scmp.eq.s32.totalorder %s34, 1
      %p219 = por %p217, %p218
      %p221 = scmp.ne.s32.totalorder %s204, %s220
      %p222 = scmp.eq.s32.totalorder %s34, 0
      %p223 = por %p221, %p222
      %s224 = ssub.s32 %s28, %s35
      %p225 = scmp.eq.s32.totalorder %s224, 0
      %s227 = sadd.s32 %s226, 1
      %s228 = scalar_select %p225, %s226, %s227
      %p231 = pneg %p225
      %p232 = scmp.eq.s32.totalorder %s28, 1
      %p233 = por %p231, %p232
      %p234 = scmp.ne.s32.totalorder %s226, %s229
      %p235 = scmp.eq.s32.totalorder %s28, 0
      %p236 = por %p234, %p235
      %p237 = scmp.ne.s32.totalorder %s226, %s229
      %p238 = scmp.eq.s32.totalorder %s33, 1
      %p239 = por %p237, %p238
      %p240 = scmp.ne.s32.totalorder %s229, %s230
      %p241 = scmp.eq.s32.totalorder %s33, 0
      %p242 = por %p240, %p241
      %p243 = scmp.ne.s32.totalorder %s229, %s230
      %p244 = scmp.eq.s32.totalorder %s34, 1
      %p245 = por %p243, %p244
      %p247 = scmp.ne.s32.totalorder %s230, %s246
      %p248 = scmp.eq.s32.totalorder %s34, 0
      %p249 = por %p247, %p248
      %s250 = ssub.s32 %s28, %s35
      %p251 = scmp.eq.s32.totalorder %s250, 0
      %s253 = sadd.s32 %s252, 1
      %s254 = scalar_select %p251, %s252, %s253
      %p257 = pneg %p251
      %p258 = scmp.eq.s32.totalorder %s28, 1
      %p259 = por %p257, %p258
      %p260 = scmp.ne.s32.totalorder %s252, %s255
      %p261 = scmp.eq.s32.totalorder %s28, 0
      %p262 = por %p260, %p261
      %p263 = scmp.ne.s32.totalorder %s252, %s255
      %p264 = scmp.eq.s32.totalorder %s33, 1
      %p265 = por %p263, %p264
      %p266 = scmp.ne.s32.totalorder %s255, %s256
      %p267 = scmp.eq.s32.totalorder %s33, 0
      %p268 = por %p266, %p267
      %p269 = scmp.ne.s32.totalorder %s255, %s256
      %p270 = scmp.eq.s32.totalorder %s34, 1
      %p271 = por %p269, %p270
      %p273 = scmp.ne.s32.totalorder %s256, %s272
      %p274 = scmp.eq.s32.totalorder %s34, 0
      %p275 = por %p273, %p274
      %s276 = ssub.s32 %s28, %s35
      %p277 = scmp.eq.s32.totalorder %s276, 0
      %s279 = sadd.s32 %s278, 1
      %s280 = scalar_select %p277, %s278, %s279
      %p283 = pneg %p277
      %p284 = scmp.eq.s32.totalorder %s28, 1
      %p285 = por %p283, %p284
      %p286 = scmp.ne.s32.totalorder %s278, %s281
      %p287 = scmp.eq.s32.totalorder %s28, 0
      %p288 = por %p286, %p287
      %p289 = scmp.ne.s32.totalorder %s278, %s281
      %p290 = scmp.eq.s32.totalorder %s33, 1
      %p291 = por %p289, %p290
      %p292 = scmp.ne.s32.totalorder %s281, %s282
      %p293 = scmp.eq.s32.totalorder %s33, 0
      %p294 = por %p292, %p293
      %p295 = scmp.ne.s32.totalorder %s281, %s282
      %p296 = scmp.eq.s32.totalorder %s34, 1
      %p297 = por %p295, %p296
      %p299 = scmp.ne.s32.totalorder %s282, %s298
      %p300 = scmp.eq.s32.totalorder %s34, 0
      %p301 = por %p299, %p300
      %s302 = ssub.s32 %s28, %s35
      %p303 = scmp.eq.s32.totalorder %s302, 0
      %s305 = sadd.s32 %s304, 1
      %s306 = scalar_select %p303, %s304, %s305
      %p309 = pneg %p303
      %p310 = scmp.eq.s32.totalorder %s28, 1
      %p311 = por %p309, %p310
      %p312 = scmp.ne.s32.totalorder %s304, %s307
      %p313 = scmp.eq.s32.totalorder %s28, 0
      %p314 = por %p312, %p313
      %p315 = scmp.ne.s32.totalorder %s304, %s307
      %p316 = scmp.eq.s32.totalorder %s33, 1
      %p317 = por %p315, %p316
      %p318 = scmp.ne.s32.totalorder %s307, %s308
      %p319 = scmp.eq.s32.totalorder %s33, 0
      %p320 = por %p318, %p319
      %p321 = scmp.ne.s32.totalorder %s307, %s308
      %p322 = scmp.eq.s32.totalorder %s34, 1
      %p323 = por %p321, %p322
      %p325 = scmp.ne.s32.totalorder %s308, %s324
      %p326 = scmp.eq.s32.totalorder %s34, 0
      %p327 = por %p325, %p326
      %s328 = ssub.s32 %s28, %s35
      %p329 = scmp.eq.s32.totalorder %s328, 0
      %s331 = sadd.s32 %s330, 1
      %s332 = scalar_select %p329, %s330, %s331
      %p335 = pneg %p329
      %p336 = scmp.eq.s32.totalorder %s28, 1
      %p337 = por %p335, %p336
      %p338 = scmp.ne.s32.totalorder %s330, %s333
      %p339 = scmp.eq.s32.totalorder %s28, 0
      %p340 = por %p338, %p339
      %p341 = scmp.ne.s32.totalorder %s330, %s333
      %p342 = scmp.eq.s32.totalorder %s33, 1
      %p343 = por %p341, %p342
      %p344 = scmp.ne.s32.totalorder %s333, %s334
      %p345 = scmp.eq.s32.totalorder %s33, 0
      %p346 = por %p344, %p345
      %p347 = scmp.ne.s32.totalorder %s333, %s334
      %p348 = scmp.eq.s32.totalorder %s34, 1
      %p349 = por %p347, %p348
      %p351 = scmp.ne.s32.totalorder %s334, %s350
      %p352 = scmp.eq.s32.totalorder %s34, 0
      %p353 = por %p351, %p352
      %s354 = ssub.s32 %s28, %s35
      %p355 = scmp.eq.s32.totalorder %s354, 0
      %s357 = sadd.s32 %s356, 1
      %s358 = scalar_select %p355, %s356, %s357
      %p361 = pneg %p355
      %p362 = scmp.eq.s32.totalorder %s28, 1
      %p363 = por %p361, %p362
      %p364 = scmp.ne.s32.totalorder %s356, %s359
      %p365 = scmp.eq.s32.totalorder %s28, 0
      %p366 = por %p364, %p365
      %p367 = scmp.ne.s32.totalorder %s356, %s359
      %p368 = scmp.eq.s32.totalorder %s33, 1
      %p369 = por %p367, %p368
      %p370 = scmp.ne.s32.totalorder %s359, %s360
      %p371 = scmp.eq.s32.totalorder %s33, 0
      %p372 = por %p370, %p371
      %p373 = scmp.ne.s32.totalorder %s359, %s360
      %p374 = scmp.eq.s32.totalorder %s34, 1
      %p375 = por %p373, %p374
      %p377 = scmp.ne.s32.totalorder %s360, %s376
      %p378 = scmp.eq.s32.totalorder %s34, 0
      %p379 = por %p377, %p378
      %s380 = ssub.s32 %s28, %s35
      %p381 = scmp.eq.s32.totalorder %s380, 0
      %s383 = sadd.s32 %s382, 1
      %s384 = scalar_select %p381, %s382, %s383
      %p387 = pneg %p381
      %p388 = scmp.eq.s32.totalorder %s28, 1
      %p389 = por %p387, %p388
      %p390 = scmp.ne.s32.totalorder %s382, %s385
      %p391 = scmp.eq.s32.totalorder %s28, 0
      %p392 = por %p390, %p391
      %p393 = scmp.ne.s32.totalorder %s382, %s385
      %p394 = scmp.eq.s32.totalorder %s33, 1
      %p395 = por %p393, %p394
      %p396 = scmp.ne.s32.totalorder %s385, %s386
      %p397 = scmp.eq.s32.totalorder %s33, 0
      %p398 = por %p396, %p397
      %p399 = scmp.ne.s32.totalorder %s385, %s386
      %p400 = scmp.eq.s32.totalorder %s34, 1
      %p401 = por %p399, %p400
      %p403 = scmp.ne.s32.totalorder %s386, %s402
      %p404 = scmp.eq.s32.totalorder %s34, 0
      %p405 = por %p403, %p404
      %s406 = ssub.s32 %s28, %s35
      %p407 = scmp.eq.s32.totalorder %s406, 0
      %s409 = sadd.s32 %s408, 1
      %s410 = scalar_select %p407, %s408, %s409
      %p413 = pneg %p407
      %p414 = scmp.eq.s32.totalorder %s28, 1
      %p415 = por %p413, %p414
      %p416 = scmp.ne.s32.totalorder %s408, %s411
      %p417 = scmp.eq.s32.totalorder %s28, 0
      %p418 = por %p416, %p417
      %p419 = scmp.ne.s32.totalorder %s408, %s411
      %p420 = scmp.eq.s32.totalorder %s33, 1
      %p421 = por %p419, %p420
      %p422 = scmp.ne.s32.totalorder %s411, %s412
      %p423 = scmp.eq.s32.totalorder %s33, 0
      %p424 = por %p422, %p423
      %p425 = scmp.ne.s32.totalorder %s411, %s412
      %p426 = scmp.eq.s32.totalorder %s34, 1
      %p427 = por %p425, %p426
      %p429 = scmp.ne.s32.totalorder %s412, %s428
      %p430 = scmp.eq.s32.totalorder %s34, 0
      %p431 = por %p429, %p430
      %s433 = sadd.s32 %s432, 1
      %p436 = scmp.eq.s32.totalorder %s28, 1
      %p437 = scmp.ne.s32.totalorder %s432, %s434
      %p438 = scmp.eq.s32.totalorder %s28, 0
      %p439 = por %p437, %p438
      %p440 = scmp.ne.s32.totalorder %s432, %s434
      %p441 = scmp.eq.s32.totalorder %s33, 1
      %p442 = por %p440, %p441
      %p443 = scmp.ne.s32.totalorder %s434, %s435
      %p444 = scmp.eq.s32.totalorder %s33, 0
      %p445 = por %p443, %p444
      %p446 = scmp.ne.s32.totalorder %s434, %s435
      %p447 = scmp.eq.s32.totalorder %s34, 1
      %p448 = por %p446, %p447
      %p450 = scmp.ne.s32.totalorder %s435, %s449
      %p451 = scmp.eq.s32.totalorder %s34, 0
      %p452 = por %p450, %p451
      %p453 = scmp.le.s32.totalorder 1, %s28
      %p454 = scmp.lt.s32.totalorder %s28, 3
      %p455 = pnand %p453, %p454
      %p456 = pneg %p455
      // Predicated region
      $region9: #{_lambda_.2} parent=5 // pred_check
        _
      $region10: #{_lambda_.2} parent=5 // pred_check_branch
        %458 = sbr.rel (%p455) target = $region12
      $region11: #{_lambda_.2} parent=5 // pred_region
        %s459 = ssub.s32 %s28, 1
        // Predicated region
        $region13: #{_lambda_.2} parent=11 // pred_check
          %p460 = pneg %p49
        $region14: #{_lambda_.2} parent=11 // pred_check_branch
          %462 = sbr.rel (%p460) target = $region16
        $region15: #{_lambda_.2} parent=11 // pred_region
          _
        $region16: #{_lambda_.2} parent=11 // pred_fallthru
          _
        // Predicated region
        $region17: #{_lambda_.2} parent=11 // pred_check
          %p463 = pneg %p70
        $region18: #{_lambda_.2} parent=11 // pred_check_branch
          %465 = sbr.rel (%p463) target = $region20
        $region19: #{_lambda_.2} parent=11 // pred_region
          _
        $region20: #{_lambda_.2} parent=11 // pred_fallthru
          _
        // Predicated region
        $region21: #{_lambda_.2} parent=11 // pred_check
          %p466 = pneg %p91
        $region22: #{_lambda_.2} parent=11 // pred_check_branch
          %468 = sbr.rel (%p466) target = $region24
        $region23: #{_lambda_.2} parent=11 // pred_region
          _
        $region24: #{_lambda_.2} parent=11 // pred_fallthru
          _
        // Predicated region
        $region25: #{_lambda_.2} parent=11 // pred_check
          %p469 = pneg %p112
        $region26: #{_lambda_.2} parent=11 // pred_check_branch
          %471 = sbr.rel (%p469) target = $region28
        $region27: #{_lambda_.2} parent=11 // pred_region
          _
        $region28: #{_lambda_.2} parent=11 // pred_fallthru
          _
      $region12: #{_lambda_.2} parent=5 // pred_fallthru
        _
      %p472 = scmp.lt.s32.totalorder %s28, 2
      // Predicated region
      $region29: #{_lambda_.2} parent=5 // pred_check
        %p473 = pneg %p472
      $region30: #{_lambda_.2} parent=5 // pred_check_branch
        %475 = sbr.rel (%p473) target = $region32
      $region31: #{_lambda_.2} parent=5 // pred_region
        // Predicated region
        $region33: #{_lambda_.2} parent=31 // pred_check
          %p476 = pneg %p132
        $region34: #{_lambda_.2} parent=31 // pred_check_branch
          %478 = sbr.rel (%p476) target = $region36
        $region35: #{_lambda_.2} parent=31 // pred_region
          %p479 = scmp.lt.s32.totalorder %s28, 1
          %s480 = scalar_select %p479, %s28, 1
          %s481 = smul.addr %s480, 12
          %s482 = smul.addr %s481, 4
          %s483 = scalar_lea.vmem %s4, %s482
        $region36: #{_lambda_.2} parent=31 // pred_fallthru
          _
        // Predicated region
        $region37: #{_lambda_.2} parent=31 // pred_check
          %p484 = pneg %p158
        $region38: #{_lambda_.2} parent=31 // pred_check_branch
          %486 = sbr.rel (%p484) target = $region40
        $region39: #{_lambda_.2} parent=31 // pred_region
          %p487 = scmp.lt.s32.totalorder %s28, 1
          %s488 = scalar_select %p487, %s28, 1
          %s489 = smul.addr %s488, 3
          %s490 = scalar_lea.vmem %s5, %s489
        $region40: #{_lambda_.2} parent=31 // pred_fallthru
          _
        // Predicated region
        $region41: #{_lambda_.2} parent=31 // pred_check
          %p491 = pneg %p184
        $region42: #{_lambda_.2} parent=31 // pred_check_branch
          %493 = sbr.rel (%p491) target = $region44
        $region43: #{_lambda_.2} parent=31 // pred_region
          %s494 = sand.u32 %s174, 1
          %s495 = scalar_lea.sflag [#allocation3], %s494
          %s496 = sand.u32 %s174, 1
          %s497 = smul.addr %s496, 16
          %s498 = scalar_lea.vmem [#allocation2], %s497
          %s500 = ssub.s32 256, 256
          %501 = vsyncadd %s495, %s500
          %s502 = smul.addr %s28, 4
          %s503 = smul.addr %s502, 64
          %s504 = scalar_lea.hbm %s6, %s503
          %s505 = sshll.u32 %s498, 4
          %s506 = int_to_ptr.vmem [resolvable:$true] %s505
          %511 = dma.hbm_to_vmem [thread:$0]  %s504, 256, %s506, %s495, 64, 64, 4
        $region44: #{_lambda_.2} parent=31 // pred_fallthru
          _
        // Predicated region
        $region45: #{_lambda_.2} parent=31 // pred_check
          %p512 = pneg %p210
        $region46: #{_lambda_.2} parent=31 // pred_check_branch
          %514 = sbr.rel (%p512) target = $region48
        $region47: #{_lambda_.2} parent=31 // pred_region
          %p515 = scmp.lt.s32.totalorder %s28, 1
          %s516 = scalar_select %p515, %s28, 1
          %s517 = scalar_lea.vmem %s7, %s516
        $region48: #{_lambda_.2} parent=31 // pred_fallthru
          _
        // Predicated region
        $region49: #{_lambda_.2} parent=31 // pred_check
          %p518 = pneg %p236
        $region50: #{_lambda_.2} parent=31 // pred_check_branch
          %520 = sbr.rel (%p518) target = $region52
        $region51: #{_lambda_.2} parent=31 // pred_region
          %p521 = scmp.lt.s32.totalorder %s28, 1
          %s522 = scalar_select %p521, %s28, 1
          %s523 = scalar_lea.vmem %s8, %s522
        $region52: #{_lambda_.2} parent=31 // pred_fallthru
          _
        // Predicated region
        $region53: #{_lambda_.2} parent=31 // pred_check
          %p524 = pneg %p262
        $region54: #{_lambda_.2} parent=31 // pred_check_branch
          %526 = sbr.rel (%p524) target = $region56
        $region55: #{_lambda_.2} parent=31 // pred_region
          %p527 = scmp.lt.s32.totalorder %s28, 1
          %s528 = scalar_select %p527, %s28, 1
          %s529 = scalar_lea.vmem %s9, %s528
        $region56: #{_lambda_.2} parent=31 // pred_fallthru
          _
        // Predicated region
        $region57: #{_lambda_.2} parent=31 // pred_check
          %p530 = pneg %p288
        $region58: #{_lambda_.2} parent=31 // pred_check_branch
          %532 = sbr.rel (%p530) target = $region60
        $region59: #{_lambda_.2} parent=31 // pred_region
          %s533 = sand.u32 %s278, 1
          %s534 = scalar_lea.sflag [#allocation5], %s533
          %s535 = sand.u32 %s278, 1
          %s536 = smul.addr %s535, 16
          %s537 = scalar_lea.vmem [#allocation4], %s536
          %s539 = ssub.s32 256, 256
          %540 = vsyncadd %s534, %s539
          %s541 = smul.addr %s28, 4
          %s542 = smul.addr %s541, 64
          %s543 = scalar_lea.hbm %s10, %s542
          %s544 = sshll.u32 %s537, 4
          %s545 = int_to_ptr.vmem [resolvable:$true] %s544
          %550 = dma.hbm_to_vmem [thread:$0]  %s543, 256, %s545, %s534, 64, 64, 4
        $region60: #{_lambda_.2} parent=31 // pred_fallthru
          _
        // Predicated region
        $region61: #{_lambda_.2} parent=31 // pred_check
          %p551 = pneg %p314
        $region62: #{_lambda_.2} parent=31 // pred_check_branch
          %553 = sbr.rel (%p551) target = $region64
        $region63: #{_lambda_.2} parent=31 // pred_region
          %p554 = scmp.lt.s32.totalorder %s28, 1
          %s555 = scalar_select %p554, %s28, 1
          %s556 = scalar_lea.vmem %s11, %s555
        $region64: #{_lambda_.2} parent=31 // pred_fallthru
          _
        // Predicated region
        $region65: #{_lambda_.2} parent=31 // pred_check
          %p557 = pneg %p340
        $region66: #{_lambda_.2} parent=31 // pred_check_branch
          %559 = sbr.rel (%p557) target = $region68
        $region67: #{_lambda_.2} parent=31 // pred_region
          %p560 = scmp.lt.s32.totalorder %s28, 1
          %s561 = scalar_select %p560, %s28, 1
          %s562 = smul.addr %s561, 16
          %s563 = smul.addr %s562, 4
          %s564 = scalar_lea.vmem %s12, %s563
        $region68: #{_lambda_.2} parent=31 // pred_fallthru
          _
        // Predicated region
        $region69: #{_lambda_.2} parent=31 // pred_check
          %p565 = pneg %p366
        $region70: #{_lambda_.2} parent=31 // pred_check_branch
          %567 = sbr.rel (%p565) target = $region72
        $region71: #{_lambda_.2} parent=31 // pred_region
          %p568 = scmp.lt.s32.totalorder %s28, 1
          %s569 = scalar_select %p568, %s28, 1
          %s570 = scalar_lea.vmem %s13, %s569
        $region72: #{_lambda_.2} parent=31 // pred_fallthru
          _
        // Predicated region
        $region73: #{_lambda_.2} parent=31 // pred_check
          %p571 = pneg %p392
        $region74: #{_lambda_.2} parent=31 // pred_check_branch
          %573 = sbr.rel (%p571) target = $region76
        $region75: #{_lambda_.2} parent=31 // pred_region
          %p574 = scmp.lt.s32.totalorder %s28, 1
          %s575 = scalar_select %p574, %s28, 1
          %s576 = scalar_lea.vmem %s14, %s575
        $region76: #{_lambda_.2} parent=31 // pred_fallthru
          _
        // Predicated region
        $region77: #{_lambda_.2} parent=31 // pred_check
          %p577 = pneg %p418
        $region78: #{_lambda_.2} parent=31 // pred_check_branch
          %579 = sbr.rel (%p577) target = $region80
        $region79: #{_lambda_.2} parent=31 // pred_region
          %p580 = scmp.lt.s32.totalorder %s28, 1
          %s581 = scalar_select %p580, %s28, 1
          %s582 = scalar_lea.vmem %s15, %s581
        $region80: #{_lambda_.2} parent=31 // pred_fallthru
          _
      $region32: #{_lambda_.2} parent=5 // pred_fallthru
        _
      %p583 = scmp.le.s32.totalorder 1, %s28
      %p584 = scmp.lt.s32.totalorder %s28, 3
      %p585 = pnand %p583, %p584
      %p586 = pneg %p585
      // Predicated region
      $region81: #{_lambda_.2} parent=5 // pred_check
        _
      $region82: #{_lambda_.2} parent=5 // pred_check_branch
        %588 = sbr.rel (%p585) target = $region84
      $region83: #{_lambda_.2} parent=5 // pred_region
        %s589 = ssub.s32 %s28, 1
        %s590 = sand.u32 %s177, 1
        %s591 = scalar_lea.sflag [#allocation3], %s590
        %s592 = sand.u32 %s177, 1
        %s593 = smul.addr %s592, 16
        %s594 = scalar_lea.vmem [#allocation2], %s593
        // Predicated region
        $region85: #{_lambda_.2} parent=83 // pred_check
          %p595 = pneg %p190
        $region86: #{_lambda_.2} parent=83 // pred_check_branch
          %597 = sbr.rel (%p595) target = $region88
        $region87: #{_lambda_.2} parent=83 // pred_region
          %598 = dma.done %s591, 256
        $region88: #{_lambda_.2} parent=83 // pred_fallthru
          _
        %s599 = sand.u32 %s281, 1
        %s600 = scalar_lea.sflag [#allocation5], %s599
        %s601 = sand.u32 %s281, 1
        %s602 = smul.addr %s601, 16
        %s603 = scalar_lea.vmem [#allocation4], %s602
        // Predicated region
        $region89: #{_lambda_.2} parent=83 // pred_check
          %p604 = pneg %p294
        $region90: #{_lambda_.2} parent=83 // pred_check_branch
          %606 = sbr.rel (%p604) target = $region92
        $region91: #{_lambda_.2} parent=83 // pred_region
          %607 = dma.done %s600, 256
        $region92: #{_lambda_.2} parent=83 // pred_fallthru
          _
        %p608 = pneg %p49
        %p609 = pneg %p46
        %p610 = pneg %p70
        %p611 = pneg %p67
        %p612 = pneg %p91
        %p613 = pneg %p88
        %p614 = pneg %p112
        %p615 = pneg %p109
        %p616 = scmp.lt.s32.totalorder %s33, 1
        %s617 = scalar_select %p616, %s33, 1
        %s618 = smul.addr %s617, 12
        %s619 = smul.addr %s618, 4
        %s620 = scalar_lea.vmem %s4, %s619
        %p621 = pneg %p138
        %p622 = pneg %p135
        %p623 = scmp.lt.s32.totalorder %s33, 1
        %s624 = scalar_select %p623, %s33, 1
        %s625 = smul.addr %s624, 3
        %s626 = scalar_lea.vmem %s5, %s625
        %p627 = pneg %p164
        %p628 = pneg %p161
        %s629 = sand.u32 %s177, 1
        %s630 = scalar_lea.sflag [#allocation3], %s629
        %s631 = sand.u32 %s177, 1
        %s632 = smul.addr %s631, 16
        %s633 = scalar_lea.vmem [#allocation2], %s632
        %p634 = pneg %p190
        %p635 = pneg %p187
        %p636 = scmp.lt.s32.totalorder %s33, 1
        %s637 = scalar_select %p636, %s33, 1
        %s638 = scalar_lea.vmem %s7, %s637
        %p639 = pneg %p216
        %p640 = pneg %p213
        %p641 = scmp.lt.s32.totalorder %s33, 1
        %s642 = scalar_select %p641, %s33, 1
        %s643 = scalar_lea.vmem %s8, %s642
        %p644 = pneg %p242
        %p645 = pneg %p239
        %p646 = scmp.lt.s32.totalorder %s33, 1
        %s647 = scalar_select %p646, %s33, 1
        %s648 = scalar_lea.vmem %s9, %s647
        %p649 = pneg %p268
        %p650 = pneg %p265
        %s651 = sand.u32 %s281, 1
        %s652 = scalar_lea.sflag [#allocation5], %s651
        %s653 = sand.u32 %s281, 1
        %s654 = smul.addr %s653, 16
        %s655 = scalar_lea.vmem [#allocation4], %s654
        %p656 = pneg %p294
        %p657 = pneg %p291
        %p658 = scmp.lt.s32.totalorder %s33, 1
        %s659 = scalar_select %p658, %s33, 1
        %s660 = scalar_lea.vmem %s11, %s659
        %p661 = pneg %p320
        %p662 = pneg %p317
        %p663 = scmp.lt.s32.totalorder %s33, 1
        %s664 = scalar_select %p663, %s33, 1
        %s665 = smul.addr %s664, 16
        %s666 = smul.addr %s665, 4
        %s667 = scalar_lea.vmem %s12, %s666
        %p668 = pneg %p346
        %p669 = pneg %p343
        %p670 = scmp.lt.s32.totalorder %s33, 1
        %s671 = scalar_select %p670, %s33, 1
        %s672 = scalar_lea.vmem %s13, %s671
        %p673 = pneg %p372
        %p674 = pneg %p369
        %p675 = scmp.lt.s32.totalorder %s33, 1
        %s676 = scalar_select %p675, %s33, 1
        %s677 = scalar_lea.vmem %s14, %s676
        %p678 = pneg %p398
        %p679 = pneg %p395
        %p680 = scmp.lt.s32.totalorder %s33, 1
        %s681 = scalar_select %p680, %s33, 1
        %s682 = scalar_lea.vmem %s15, %s681
        %p683 = pneg %p424
        %p684 = pneg %p421
        %p685 = pneg %p445
        %p686 = pneg %p442
        %p687 = scmp.lt.s32.totalorder %s33, 1
        %s688 = scalar_select %p687, %s33, 1
        %s689 = smul.addr %s688, 12
        %s690 = smul.addr %s689, 4
        %s691 = scalar_lea.vmem %s4, %s690
        %p692 = scmp.lt.s32.totalorder %s33, 1
        %s693 = scalar_select %p692, %s33, 1
        %s694 = smul.addr %s693, 3
        %s695 = scalar_lea.vmem %s5, %s694
        %p696 = scmp.lt.s32.totalorder %s33, 1
        %s697 = scalar_select %p696, %s33, 1
        %s698 = scalar_lea.vmem %s7, %s697
        %p699 = scmp.lt.s32.totalorder %s33, 1
        %s700 = scalar_select %p699, %s33, 1
        %s701 = scalar_lea.vmem %s8, %s700
        %p702 = scmp.lt.s32.totalorder %s33, 1
        %s703 = scalar_select %p702, %s33, 1
        %s704 = scalar_lea.vmem %s9, %s703
        %p705 = scmp.lt.s32.totalorder %s33, 1
        %s706 = scalar_select %p705, %s33, 1
        %s707 = scalar_lea.vmem %s11, %s706
        %p708 = scmp.lt.s32.totalorder %s33, 1
        %s709 = scalar_select %p708, %s33, 1
        %s710 = smul.addr %s709, 16
        %s711 = smul.addr %s710, 4
        %s712 = scalar_lea.vmem %s12, %s711
        %p713 = scmp.lt.s32.totalorder %s33, 1
        %s714 = scalar_select %p713, %s33, 1
        %s715 = scalar_lea.vmem %s13, %s714
        %p716 = scmp.lt.s32.totalorder %s33, 1
        %s717 = scalar_select %p716, %s33, 1
        %s718 = scalar_lea.vmem %s14, %s717
        %p719 = scmp.lt.s32.totalorder %s33, 1
        %s720 = scalar_select %p719, %s33, 1
        %s721 = scalar_lea.vmem %s15, %s720
        %p723 = scmp.eq.s32.totalorder %s33, 0
        // Predicated region
        $region93: #{_lambda_.2} parent=83 // pred_check
          %p724 = pneg %p723
        $region94: #{_lambda_.2} parent=83 // pred_check_branch
          %726 = sbr.rel (%p724) target = $region96
        $region95: #{_lambda_.2} parent=83 // pred_region
          %v727 = vld [vmem:[%s0] sm:$0xff]
          %v728 = vld [vmem:[%s0 + $0x8] sm:$0xff]
          %v729 = vld [vmem:[%s2] sm:$0x1]
          %v730 = vld [vmem:[%s3] sm:$0x1]
          %vm731 = vcmask 261120
          %v732 = vsel %vm731, %v727, 0.0
          %733 = vadd.xlane.f32.xlu0 %v732
          %v734 = vpop.xlane.xlu0 %733
          %v735 = vsel %vm731, %v728, 0.0
          %736 = vadd.xlane.f32.xlu0 %v735
          %v737 = vpop.xlane.xlu0 %736
          %v738 = vrcp.pop 32.0
          %v739 = vmul.f32 %v734, %v738
          %v740 = vmul.f32 %v737, %v738
          %v741 = vsub.f32 %v727, %v739
          %v742 = vsub.f32 %v728, %v740
          %v743 = vmul.f32 %v741, %v741
          %v744 = vmul.f32 %v742, %v742
          %v745 = vsel %vm731, %v743, 0.0
          %746 = vadd.xlane.f32.xlu0 %v745
          %v747 = vpop.xlane.xlu0 %746
          %v748 = vsel %vm731, %v744, 0.0
          %749 = vadd.xlane.f32.xlu0 %v748
          %v750 = vpop.xlane.xlu0 %749
          %v751 = vmul.f32 %v747, %v738
          %v752 = vmul.f32 %v750, %v738
          %v753 = vadd.f32 %v751, 1e-12
          %v754 = vadd.f32 %v752, 1e-12
          %v755 = vrsqrt.pop %v753
          %v756 = vrsqrt.pop %v754
          %v757 = vmul.f32 %v741, %v755
          %v758 = vmul.f32 %v742, %v756
          %v760 = vlaneseq
          %v761 = vshrl.u32 %v760, 7
          %v762 = vsub.s32 0, %v761
          %v763 = vrot.slane %v729, %v762
          %v765 = vmul.f32 %v757, %v763
          %v766 = vmul.f32 %v758, %v763
          %v768 = vlaneseq
          %v769 = vshrl.u32 %v768, 7
          %v770 = vsub.s32 0, %v769
          %v771 = vrot.slane %v730, %v770
          %v773 = vadd.f32 %v765, %v771
          %v774 = vadd.f32 %v766, %v771
          %775 = vst.msk [vmem:[%s16] sm:$0xff] %vm731, %v773
          %776 = vst.msk [vmem:[%s16 + $0x8] sm:$0xff] %vm731, %v774
        $region96: #{_lambda_.2} parent=83 // pred_fallthru
          _
        %v777 = vld [vmem:[%s16] sm:$0xff]
        %v778 = vld [vmem:[%s16 + $0x8] sm:$0xff]
        %v779 = vpack.c.bf16 %v778, %v777
        %v780 = vld [vmem:[%s691] sm:$0xf]
        %v781 = vld [vmem:[%s691 + $0x4] sm:$0xf]
        %v782 = vld [vmem:[%s691 + $0x8] sm:$0xf]
        %v783 = vld [vmem:[%s691 + $0xc] sm:$0xf]
        %v784 = vld [vmem:[%s695] sm:$0x1]
        %v786 = vlaneseq
        %v787 = vshrl.u32 %v786, 7
        %v788 = vsub.s32 0, %v787
        %v789 = vrot.slane %v784, %v788
        %v795 = vunpack.c.l.b16 %v780
        %v796 = vunpack.c.l.b16 %v781
        %v797 = vunpack.c.l.b16 %v782
        %v798 = vunpack.c.l.b16 %v783
        %v799 = vpack.c.b16 %v796, %v795
        %v800 = vpack.c.b16 %v798, %v797
        %vm803 = vcmask 261120
        %v805 = vsel %vm803, %v779, 0
        %807 = vmatprep.subr.bf16.mxu0 0
        %808 = vmatpush1.bf16.msra.mxu0 %v799
        %809 = vmatprep.subr.bf16.mxu0 0
        %810 = vmatpush1.bf16.msra.mxu0 %v800
        %811 = vmatprep.subr.bf16.mxu0 0
        %812 = vmatpush1.bf16.msra.mxu0 0
        %813 = vmatprep.subr.bf16.mxu0 0
        %814 = vmatpush1.bf16.msra.mxu0 0
        %815 = vmatprep.subr.bf16.mxu0 0
        %816 = vmatpush1.bf16.msra.mxu0 0
        %817 = vmatprep.subr.bf16.mxu0 0
        %818 = vmatpush1.bf16.msra.mxu0 0
        %819 = vmatprep.subr.bf16.mxu0 0
        %820 = vmatpush1.bf16.msra.mxu0 0
        %821 = vmatprep.subr.bf16.mxu0 0
        %822 = vmatpush1.bf16.msra.mxu0 0
        %823 = vmatprep.subr.bf16.mxu0 0
        %824 = vmatpush1.bf16.msra.mxu0 0
        %825 = vmatprep.subr.bf16.mxu0 0
        %826 = vmatpush1.bf16.msra.mxu0 0
        %827 = vmatprep.subr.bf16.mxu0 0
        %828 = vmatpush1.bf16.msra.mxu0 0
        %829 = vmatprep.subr.bf16.mxu0 0
        %830 = vmatpush1.bf16.msra.mxu0 0
        %831 = vmatprep.subr.bf16.mxu0 0
        %832 = vmatpush1.bf16.msra.mxu0 0
        %833 = vmatprep.subr.bf16.mxu0 0
        %834 = vmatpush1.bf16.msra.mxu0 0
        %835 = vmatprep.subr.bf16.mxu0 0
        %836 = vmatpush1.bf16.msra.mxu0 0
        %837 = vmatprep.subr.bf16.mxu0 0
        %838 = vmatpush1.bf16.msra.mxu0 0
        %839 = vmatprep.mubr.bf16.mxu0 0
        %840 = vmatmul.mubr.bf16.gmra.mrb[0].mxu0 %v805
        %v841 = vpop.f32.mrb[0].mxu0
        %v842 = vadd.f32 %v789, %v841
        %v843 = vpop.f32.mrb[0].mxu0
        %v844 = vpop.f32.mrb[0].mxu0
        %v845 = vadd.f32 %v789, %v844
        %v846 = vpop.f32.mrb[0].mxu0
        %847 = vdwg.mxu0
        %s848 = scalar_lea.vmem %s691, 16
        %v849 = vld [vmem:[%s848] sm:$0xf]
        %v850 = vld [vmem:[%s848 + $0x4] sm:$0xf]
        %v851 = vld [vmem:[%s848 + $0x8] sm:$0xf]
        %v852 = vld [vmem:[%s848 + $0xc] sm:$0xf]
        %s853 = scalar_lea.vmem %s695, 1
        %v854 = vld [vmem:[%s853] sm:$0x1]
        %v856 = vlaneseq
        %v857 = vshrl.u32 %v856, 7
        %v858 = vsub.s32 0, %v857
        %v859 = vrot.slane %v854, %v858
        %v865 = vunpack.c.l.b16 %v849
        %v866 = vunpack.c.l.b16 %v850
        %v867 = vunpack.c.l.b16 %v851
        %v868 = vunpack.c.l.b16 %v852
        %v869 = vpack.c.b16 %v866, %v865
        %v870 = vpack.c.b16 %v868, %v867
        %873 = vmatprep.subr.bf16.mxu0 0
        %874 = vmatpush1.bf16.msra.mxu0 %v869
        %875 = vmatprep.subr.bf16.mxu0 0
        %876 = vmatpush1.bf16.msra.mxu0 %v870
        %877 = vmatprep.subr.bf16.mxu0 0
        %878 = vmatpush1.bf16.msra.mxu0 0
        %879 = vmatprep.subr.bf16.mxu0 0
        %880 = vmatpush1.bf16.msra.mxu0 0
        %881 = vmatprep.subr.bf16.mxu0 0
        %882 = vmatpush1.bf16.msra.mxu0 0
        %883 = vmatprep.subr.bf16.mxu0 0
        %884 = vmatpush1.bf16.msra.mxu0 0
        %885 = vmatprep.subr.bf16.mxu0 0
        %886 = vmatpush1.bf16.msra.mxu0 0
        %887 = vmatprep.subr.bf16.mxu0 0
        %888 = vmatpush1.bf16.msra.mxu0 0
        %889 = vmatprep.subr.bf16.mxu0 0
        %890 = vmatpush1.bf16.msra.mxu0 0
        %891 = vmatprep.subr.bf16.mxu0 0
        %892 = vmatpush1.bf16.msra.mxu0 0
        %893 = vmatprep.subr.bf16.mxu0 0
        %894 = vmatpush1.bf16.msra.mxu0 0
        %895 = vmatprep.subr.bf16.mxu0 0
        %896 = vmatpush1.bf16.msra.mxu0 0
        %897 = vmatprep.subr.bf16.mxu0 0
        %898 = vmatpush1.bf16.msra.mxu0 0
        %899 = vmatprep.subr.bf16.mxu0 0
        %900 = vmatpush1.bf16.msra.mxu0 0
        %901 = vmatprep.subr.bf16.mxu0 0
        %902 = vmatpush1.bf16.msra.mxu0 0
        %903 = vmatprep.subr.bf16.mxu0 0
        %904 = vmatpush1.bf16.msra.mxu0 0
        %905 = vmatprep.mubr.bf16.mxu0 0
        %906 = vmatmul.mubr.bf16.gmra.mrb[0].mxu0 %v805
        %v907 = vpop.f32.mrb[0].mxu0
        %v908 = vadd.f32 %v859, %v907
        %v909 = vpop.f32.mrb[0].mxu0
        %v910 = vpop.f32.mrb[0].mxu0
        %v911 = vadd.f32 %v859, %v910
        %v912 = vpop.f32.mrb[0].mxu0
        %913 = vdwg.mxu0
        %s914 = scalar_lea.vmem %s691, 32
        %v915 = vld [vmem:[%s914] sm:$0xf]
        %v916 = vld [vmem:[%s914 + $0x4] sm:$0xf]
        %v917 = vld [vmem:[%s914 + $0x8] sm:$0xf]
        %v918 = vld [vmem:[%s914 + $0xc] sm:$0xf]
        %s919 = scalar_lea.vmem %s695, 2
        %v920 = vld [vmem:[%s919] sm:$0x1]
        %v922 = vlaneseq
        %v923 = vshrl.u32 %v922, 7
        %v924 = vsub.s32 0, %v923
        %v925 = vrot.slane %v920, %v924
        %v931 = vunpack.c.l.b16 %v915
        %v932 = vunpack.c.l.b16 %v916
        %v933 = vunpack.c.l.b16 %v917
        %v934 = vunpack.c.l.b16 %v918
        %v935 = vpack.c.b16 %v932, %v931
        %v936 = vpack.c.b16 %v934, %v933
        %939 = vmatprep.subr.bf16.mxu0 0
        %940 = vmatpush1.bf16.msra.mxu0 %v935
        %941 = vmatprep.subr.bf16.mxu0 0
        %942 = vmatpush1.bf16.msra.mxu0 %v936
        %943 = vmatprep.subr.bf16.mxu0 0
        %944 = vmatpush1.bf16.msra.mxu0 0
        %945 = vmatprep.subr.bf16.mxu0 0
        %946 = vmatpush1.bf16.msra.mxu0 0
        %947 = vmatprep.subr.bf16.mxu0 0
        %948 = vmatpush1.bf16.msra.mxu0 0
        %949 = vmatprep.subr.bf16.mxu0 0
        %950 = vmatpush1.bf16.msra.mxu0 0
        %951 = vmatprep.subr.bf16.mxu0 0
        %952 = vmatpush1.bf16.msra.mxu0 0
        %953 = vmatprep.subr.bf16.mxu0 0
        %954 = vmatpush1.bf16.msra.mxu0 0
        %955 = vmatprep.subr.bf16.mxu0 0
        %956 = vmatpush1.bf16.msra.mxu0 0
        %957 = vmatprep.subr.bf16.mxu0 0
        %958 = vmatpush1.bf16.msra.mxu0 0
        %959 = vmatprep.subr.bf16.mxu0 0
        %960 = vmatpush1.bf16.msra.mxu0 0
        %961 = vmatprep.subr.bf16.mxu0 0
        %962 = vmatpush1.bf16.msra.mxu0 0
        %963 = vmatprep.subr.bf16.mxu0 0
        %964 = vmatpush1.bf16.msra.mxu0 0
        %965 = vmatprep.subr.bf16.mxu0 0
        %966 = vmatpush1.bf16.msra.mxu0 0
        %967 = vmatprep.subr.bf16.mxu0 0
        %968 = vmatpush1.bf16.msra.mxu0 0
        %969 = vmatprep.subr.bf16.mxu0 0
        %970 = vmatpush1.bf16.msra.mxu0 0
        %971 = vmatprep.mubr.bf16.mxu0 0
        %972 = vmatmul.mubr.bf16.gmra.mrb[0].mxu0 %v805
        %v973 = vpop.f32.mrb[0].mxu0
        %v974 = vadd.f32 %v925, %v973
        %v975 = vpop.f32.mrb[0].mxu0
        %v976 = vpop.f32.mrb[0].mxu0
        %v977 = vadd.f32 %v925, %v976
        %v978 = vpop.f32.mrb[0].mxu0
        %979 = vdwg.mxu0
        %v980 = vld [vmem:[%s1] sm:$0x3]
        %v983 = vunpack.c.l.s4 1966171168
        %v984 = vunpack.c.0.s8 %v983
        %v985 = vlaneseq
        %v986 = vshrl.u32 %v985, 7
        %v987 = vsub.s32 %v984, %v986
        %v988 = vrot.slane %v980, %v987
        %v989 = vcombine.high %v988, %v988
        %v991 = vunpack.c.l.s4 1966171168
        %v992 = vunpack.c.0.s8 %v991
        %v993 = vlaneseq
        %v994 = vshrl.u32 %v993, 7
        %v995 = vsub.s32 %v992, %v994
        %v996 = vrot.slane %v988, %v995
        %v998 = vunpack.c.l.s4 1966171168
        %v999 = vunpack.c.0.s8 %v998
        %v1000 = vlaneseq
        %v1001 = vshrl.u32 %v1000, 7
        %v1002 = vsub.s32 %v999, %v1001
        %v1003 = vrot.slane %v989, %v1002
        %v1004 = vpack.c.bf16 %v842, %v842
        %v1005 = vpack.c.bf16 %v845, %v845
        %v1006 = vpack.c.bf16 %v908, %v908
        %v1007 = vpack.c.bf16 %v911, %v911
        %v1008 = vpack.c.bf16 %v974, %v974
        %v1009 = vpack.c.bf16 %v977, %v977
        %v1010 = vlaneseq
        %v1011 = vshrl.u32 %v1010, 7
        %v1012 = vsub.s32 0, %v1011
        %v1013 = vrot.slane %v996, %v1012
        %v1014 = vlaneseq
        %v1015 = vshrl.u32 %v1014, 7
        %v1016 = vsub.s32 0, %v1015
        %v1017 = vrot.slane %v1003, %v1016
        %vm1020 = vcmask 64512
        %v1022 = vsel %vm1020, %v1004, 0
        %v1025 = vsel %vm1020, %v1006, 0
        %1027 = vmatprep.subr.bf16.mxu0 0
        %1028 = vmatpush1.bf16.xpose.msra.mxu0 %v1025
        %1029 = vmatprep.subr.bf16.mxu0 0
        %1030 = vmatpush1.bf16.xpose.msra.mxu0 0
        %1031 = vmatprep.subr.bf16.mxu0 0
        %1032 = vmatpush1.bf16.xpose.msra.mxu0 0
        %1033 = vmatprep.subr.bf16.mxu0 0
        %1034 = vmatpush1.bf16.xpose.msra.mxu0 0
        %1035 = vmatprep.subr.bf16.mxu0 0
        %1036 = vmatpush1.bf16.xpose.msra.mxu0 0
        %1037 = vmatprep.subr.bf16.mxu0 0
        %1038 = vmatpush1.bf16.xpose.msra.mxu0 0
        %1039 = vmatprep.subr.bf16.mxu0 0
        %1040 = vmatpush1.bf16.xpose.msra.mxu0 0
        %1041 = vmatprep.subr.bf16.mxu0 0
        %1042 = vmatpush1.bf16.xpose.msra.mxu0 0
        %1043 = vmatprep.subr.bf16.mxu0 0
        %1044 = vmatpush1.bf16.xpose.msra.mxu0 0
        %1045 = vmatprep.subr.bf16.mxu0 0
        %1046 = vmatpush1.bf16.xpose.msra.mxu0 0
        %1047 = vmatprep.subr.bf16.mxu0 0
        %1048 = vmatpush1.bf16.xpose.msra.mxu0 0
        %1049 = vmatprep.subr.bf16.mxu0 0
        %1050 = vmatpush1.bf16.xpose.msra.mxu0 0
        %1051 = vmatprep.subr.bf16.mxu0 0
        %1052 = vmatpush1.bf16.xpose.msra.mxu0 0
        %1053 = vmatprep.subr.bf16.mxu0 0
        %1054 = vmatpush1.bf16.xpose.msra.mxu0 0
        %1055 = vmatprep.subr.bf16.mxu0 0
        %1056 = vmatpush1.bf16.xpose.msra.mxu0 0
        %1057 = vmatprep.subr.bf16.mxu0 0
        %1058 = vmatpush1.bf16.xpose.msra.mxu0 0
        %1059 = vmatprep.mubr.bf16.mxu0 0
        %1060 = vmatmul.mubr.bf16.gmra.mrb[0].mxu0 %v1022
        %v1061 = vpop.f32.mrb[0].mxu0
        %v1062 = vadd.f32 %v1013, %v1061
        %v1063 = vpop.f32.mrb[0].mxu0
        %v1064 = vpop.f32.mrb[0].mxu0
        %v1065 = vpop.f32.mrb[0].mxu0
        %1066 = vdwg.mxu0
        %v1068 = vsel %vm1020, %v1005, 0
        %v1071 = vsel %vm1020, %v1007, 0
        %1073 = vmatprep.subr.bf16.mxu0 0
        %1074 = vmatpush1.bf16.xpose.msra.mxu0 %v1071
        %1075 = vmatprep.subr.bf16.mxu0 0
        %1076 = vmatpush1.bf16.xpose.msra.mxu0 0
        %1077 = vmatprep.subr.bf16.mxu0 0
        %1078 = vmatpush1.bf16.xpose.msra.mxu0 0
        %1079 = vmatprep.subr.bf16.mxu0 0
        %1080 = vmatpush1.bf16.xpose.msra.mxu0 0
        %1081 = vmatprep.subr.bf16.mxu0 0
        %1082 = vmatpush1.bf16.xpose.msra.mxu0 0
        %1083 = vmatprep.subr.bf16.mxu0 0
        %1084 = vmatpush1.bf16.xpose.msra.mxu0 0
        %1085 = vmatprep.subr.bf16.mxu0 0
        %1086 = vmatpush1.bf16.xpose.msra.mxu0 0
        %1087 = vmatprep.subr.bf16.mxu0 0
        %1088 = vmatpush1.bf16.xpose.msra.mxu0 0
        %1089 = vmatprep.subr.bf16.mxu0 0
        %1090 = vmatpush1.bf16.xpose.msra.mxu0 0
        %1091 = vmatprep.subr.bf16.mxu0 0
        %1092 = vmatpush1.bf16.xpose.msra.mxu0 0
        %1093 = vmatprep.subr.bf16.mxu0 0
        %1094 = vmatpush1.bf16.xpose.msra.mxu0 0
        %1095 = vmatprep.subr.bf16.mxu0 0
        %1096 = vmatpush1.bf16.xpose.msra.mxu0 0
        %1097 = vmatprep.subr.bf16.mxu0 0
        %1098 = vmatpush1.bf16.xpose.msra.mxu0 0
        %1099 = vmatprep.subr.bf16.mxu0 0
        %1100 = vmatpush1.bf16.xpose.msra.mxu0 0
        %1101 = vmatprep.subr.bf16.mxu0 0
        %1102 = vmatpush1.bf16.xpose.msra.mxu0 0
        %1103 = vmatprep.subr.bf16.mxu0 0
        %1104 = vmatpush1.bf16.xpose.msra.mxu0 0
        %1105 = vmatprep.mubr.bf16.mxu0 0
        %1106 = vmatmul.mubr.bf16.gmra.mrb[0].mxu0 %v1068
        %v1107 = vpop.f32.mrb[0].mxu0
        %v1108 = vadd.f32 %v1017, %v1107
        %v1109 = vpop.f32.mrb[0].mxu0
        %v1110 = vpop.f32.mrb[0].mxu0
        %v1111 = vpop.f32.mrb[0].mxu0
        %1112 = vdwg.mxu0
        %v1113 = vsel %vm1020, %v1062, -inf
        %1114 = vmax.xlane.f32.xlu0 %v1113
        %v1115 = vpop.xlane.xlu0 %1114
        %v1116 = vsel %vm1020, %v1108, -inf
        %1117 = vmax.xlane.f32.xlu0 %v1116
        %v1118 = vpop.xlane.xlu0 %1117
        %v1119 = vsub.f32 %v1062, %v1115
        %v1120 = vsub.f32 %v1108, %v1118
        %v1121 = vmul.f32 %v1119, 1.442695
        %v1122 = vpow.pop %v1121
        %v1123 = vmul.f32 %v1120, 1.442695
        %v1124 = vpow.pop %v1123
        %v1125 = vsel %vm1020, %v1122, 0.0
        %1126 = vadd.xlane.f32.xlu0 %v1125
        %v1127 = vpop.xlane.xlu0 %1126
        %v1128 = vsel %vm1020, %v1124, 0.0
        %1129 = vadd.xlane.f32.xlu0 %v1128
        %v1130 = vpop.xlane.xlu0 %1129
        %v1131 = vrcp.pop %v1127
        %v1132 = vrcp.pop %v1130
        %v1133 = vmul.f32 %v1122, %v1131
        %v1134 = vmul.f32 %v1124, %v1132
        %v1135 = vpack.c.bf16 %v1133, %v1133
        %v1136 = vpack.c.bf16 %v1134, %v1134
        %v1138 = vsel %vm1020, %v1135, 0
        %vm1140 = vcmask 1043456
        %v1142 = vsel %vm1140, %v1008, 0
        %1144 = vmatprep.subr.bf16.mxu0 0
        %1145 = vmatpush1.bf16.msra.mxu0 %v1142
        %1146 = vmatprep.subr.bf16.mxu0 0
        %1147 = vmatpush1.bf16.msra.mxu0 0
        %1148 = vmatprep.subr.bf16.mxu0 0
        %1149 = vmatpush1.bf16.msra.mxu0 0
        %1150 = vmatprep.subr.bf16.mxu0 0
        %1151 = vmatpush1.bf16.msra.mxu0 0
        %1152 = vmatprep.subr.bf16.mxu0 0
        %1153 = vmatpush1.bf16.msra.mxu0 0
        %1154 = vmatprep.subr.bf16.mxu0 0
        %1155 = vmatpush1.bf16.msra.mxu0 0
        %1156 = vmatprep.subr.bf16.mxu0 0
        %1157 = vmatpush1.bf16.msra.mxu0 0
        %1158 = vmatprep.subr.bf16.mxu0 0
        %1159 = vmatpush1.bf16.msra.mxu0 0
        %1160 = vmatprep.subr.bf16.mxu0 0
        %1161 = vmatpush1.bf16.msra.mxu0 0
        %1162 = vmatprep.subr.bf16.mxu0 0
        %1163 = vmatpush1.bf16.msra.mxu0 0
        %1164 = vmatprep.subr.bf16.mxu0 0
        %1165 = vmatpush1.bf16.msra.mxu0 0
        %1166 = vmatprep.subr.bf16.mxu0 0
        %1167 = vmatpush1.bf16.msra.mxu0 0
        %1168 = vmatprep.subr.bf16.mxu0 0
        %1169 = vmatpush1.bf16.msra.mxu0 0
        %1170 = vmatprep.subr.bf16.mxu0 0
        %1171 = vmatpush1.bf16.msra.mxu0 0
        %1172 = vmatprep.subr.bf16.mxu0 0
        %1173 = vmatpush1.bf16.msra.mxu0 0
        %1174 = vmatprep.subr.bf16.mxu0 0
        %1175 = vmatpush1.bf16.msra.mxu0 0
        %1176 = vmatprep.mubr.bf16.mxu0 0
        %1177 = vmatmul.mubr.bf16.gmra.mrb[0].mxu0 %v1138
        %v1178 = vpop.f32.mrb[0].mxu0
        %v1179 = vadd.f32 0.0, %v1178
        %v1180 = vpop.f32.mrb[0].mxu0
        %v1181 = vpop.f32.mrb[0].mxu0
        %v1182 = vpop.f32.mrb[0].mxu0
        %1183 = vdwg.mxu0
        %v1185 = vsel %vm1020, %v1136, 0
        %v1188 = vsel %vm1140, %v1009, 0
        %1190 = vmatprep.subr.bf16.mxu0 0
        %1191 = vmatpush1.bf16.msra.mxu0 %v1188
        %1192 = vmatprep.subr.bf16.mxu0 0
        %1193 = vmatpush1.bf16.msra.mxu0 0
        %1194 = vmatprep.subr.bf16.mxu0 0
        %1195 = vmatpush1.bf16.msra.mxu0 0
        %1196 = vmatprep.subr.bf16.mxu0 0
        %1197 = vmatpush1.bf16.msra.mxu0 0
        %1198 = vmatprep.subr.bf16.mxu0 0
        %1199 = vmatpush1.bf16.msra.mxu0 0
        %1200 = vmatprep.subr.bf16.mxu0 0
        %1201 = vmatpush1.bf16.msra.mxu0 0
        %1202 = vmatprep.subr.bf16.mxu0 0
        %1203 = vmatpush1.bf16.msra.mxu0 0
        %1204 = vmatprep.subr.bf16.mxu0 0
        %1205 = vmatpush1.bf16.msra.mxu0 0
        %1206 = vmatprep.subr.bf16.mxu0 0
        %1207 = vmatpush1.bf16.msra.mxu0 0
        %1208 = vmatprep.subr.bf16.mxu0 0
        %1209 = vmatpush1.bf16.msra.mxu0 0
        %1210 = vmatprep.subr.bf16.mxu0 0
        %1211 = vmatpush1.bf16.msra.mxu0 0
        %1212 = vmatprep.subr.bf16.mxu0 0
        %1213 = vmatpush1.bf16.msra.mxu0 0
        %1214 = vmatprep.subr.bf16.mxu0 0
        %1215 = vmatpush1.bf16.msra.mxu0 0
        %1216 = vmatprep.subr.bf16.mxu0 0
        %1217 = vmatpush1.bf16.msra.mxu0 0
        %1218 = vmatprep.subr.bf16.mxu0 0
        %1219 = vmatpush1.bf16.msra.mxu0 0
        %1220 = vmatprep.subr.bf16.mxu0 0
        %1221 = vmatpush1.bf16.msra.mxu0 0
        %1222 = vmatprep.mubr.bf16.mxu0 0
        %1223 = vmatmul.mubr.bf16.gmra.mrb[0].mxu0 %v1185
        %v1224 = vpop.f32.mrb[0].mxu0
        %v1225 = vadd.f32 0.0, %v1224
        %v1226 = vpop.f32.mrb[0].mxu0
        %v1227 = vpop.f32.mrb[0].mxu0
        %v1228 = vpop.f32.mrb[0].mxu0
        %1229 = vdwg.mxu0
        %1231 = vrot.lane.b32.xlu0 %v1004, 120
        %v1232 = vpop.permute.xlu0 %1231
        %1234 = vrot.lane.b32.xlu0 %v1006, 120
        %v1235 = vpop.permute.xlu0 %1234
        %v1237 = vsel %vm1020, %v1232, 0
        %v1240 = vsel %vm1020, %v1235, 0
        %1242 = vmatprep.subr.bf16.mxu0 0
        %1243 = vmatpush1.bf16.xpose.msra.mxu0 %v1240
        %1244 = vmatprep.subr.bf16.mxu0 0
        %1245 = vmatpush1.bf16.xpose.msra.mxu0 0
        %1246 = vmatprep.subr.bf16.mxu0 0
        %1247 = vmatpush1.bf16.xpose.msra.mxu0 0
        %1248 = vmatprep.subr.bf16.mxu0 0
        %1249 = vmatpush1.bf16.xpose.msra.mxu0 0
        %1250 = vmatprep.subr.bf16.mxu0 0
        %1251 = vmatpush1.bf16.xpose.msra.mxu0 0
        %1252 = vmatprep.subr.bf16.mxu0 0
        %1253 = vmatpush1.bf16.xpose.msra.mxu0 0
        %1254 = vmatprep.subr.bf16.mxu0 0
        %1255 = vmatpush1.bf16.xpose.msra.mxu0 0
        %1256 = vmatprep.subr.bf16.mxu0 0
        %1257 = vmatpush1.bf16.xpose.msra.mxu0 0
        %1258 = vmatprep.subr.bf16.mxu0 0
        %1259 = vmatpush1.bf16.xpose.msra.mxu0 0
        %1260 = vmatprep.subr.bf16.mxu0 0
        %1261 = vmatpush1.bf16.xpose.msra.mxu0 0
        %1262 = vmatprep.subr.bf16.mxu0 0
        %1263 = vmatpush1.bf16.xpose.msra.mxu0 0
        %1264 = vmatprep.subr.bf16.mxu0 0
        %1265 = vmatpush1.bf16.xpose.msra.mxu0 0
        %1266 = vmatprep.subr.bf16.mxu0 0
        %1267 = vmatpush1.bf16.xpose.msra.mxu0 0
        %1268 = vmatprep.subr.bf16.mxu0 0
        %1269 = vmatpush1.bf16.xpose.msra.mxu0 0
        %1270 = vmatprep.subr.bf16.mxu0 0
        %1271 = vmatpush1.bf16.xpose.msra.mxu0 0
        %1272 = vmatprep.subr.bf16.mxu0 0
        %1273 = vmatpush1.bf16.xpose.msra.mxu0 0
        %1274 = vmatprep.mubr.bf16.mxu0 0
        %1275 = vmatmul.mubr.bf16.gmra.mrb[0].mxu0 %v1237
        %v1276 = vpop.f32.mrb[0].mxu0
        %v1277 = vadd.f32 %v1013, %v1276
        %v1278 = vpop.f32.mrb[0].mxu0
        %v1279 = vpop.f32.mrb[0].mxu0
        %v1280 = vpop.f32.mrb[0].mxu0
        %1281 = vdwg.mxu0
        %1283 = vrot.lane.b32.xlu0 %v1005, 120
        %v1284 = vpop.permute.xlu0 %1283
        %1286 = vrot.lane.b32.xlu0 %v1007, 120
        %v1287 = vpop.permute.xlu0 %1286
        %v1289 = vsel %vm1020, %v1284, 0
        %v1292 = vsel %vm1020, %v1287, 0
        %1294 = vmatprep.subr.bf16.mxu0 0
        %1295 = vmatpush1.bf16.xpose.msra.mxu0 %v1292
        %1296 = vmatprep.subr.bf16.mxu0 0
        %1297 = vmatpush1.bf16.xpose.msra.mxu0 0
        %1298 = vmatprep.subr.bf16.mxu0 0
        %1299 = vmatpush1.bf16.xpose.msra.mxu0 0
        %1300 = vmatprep.subr.bf16.mxu0 0
        %1301 = vmatpush1.bf16.xpose.msra.mxu0 0
        %1302 = vmatprep.subr.bf16.mxu0 0
        %1303 = vmatpush1.bf16.xpose.msra.mxu0 0
        %1304 = vmatprep.subr.bf16.mxu0 0
        %1305 = vmatpush1.bf16.xpose.msra.mxu0 0
        %1306 = vmatprep.subr.bf16.mxu0 0
        %1307 = vmatpush1.bf16.xpose.msra.mxu0 0
        %1308 = vmatprep.subr.bf16.mxu0 0
        %1309 = vmatpush1.bf16.xpose.msra.mxu0 0
        %1310 = vmatprep.subr.bf16.mxu0 0
        %1311 = vmatpush1.bf16.xpose.msra.mxu0 0
        %1312 = vmatprep.subr.bf16.mxu0 0
        %1313 = vmatpush1.bf16.xpose.msra.mxu0 0
        %1314 = vmatprep.subr.bf16.mxu0 0
        %1315 = vmatpush1.bf16.xpose.msra.mxu0 0
        %1316 = vmatprep.subr.bf16.mxu0 0
        %1317 = vmatpush1.bf16.xpose.msra.mxu0 0
        %1318 = vmatprep.subr.bf16.mxu0 0
        %1319 = vmatpush1.bf16.xpose.msra.mxu0 0
        %1320 = vmatprep.subr.bf16.mxu0 0
        %1321 = vmatpush1.bf16.xpose.msra.mxu0 0
        %1322 = vmatprep.subr.bf16.mxu0 0
        %1323 = vmatpush1.bf16.xpose.msra.mxu0 0
        %1324 = vmatprep.subr.bf16.mxu0 0
        %1325 = vmatpush1.bf16.xpose.msra.mxu0 0
        %1326 = vmatprep.mubr.bf16.mxu0 0
        %1327 = vmatmul.mubr.bf16.gmra.mrb[0].mxu0 %v1289
        %v1328 = vpop.f32.mrb[0].mxu0
        %v1329 = vadd.f32 %v1017, %v1328
        %v1330 = vpop.f32.mrb[0].mxu0
        %v1331 = vpop.f32.mrb[0].mxu0
        %v1332 = vpop.f32.mrb[0].mxu0
        %1333 = vdwg.mxu0
        %v1334 = vsel %vm1020, %v1277, -inf
        %1335 = vmax.xlane.f32.xlu0 %v1334
        %v1336 = vpop.xlane.xlu0 %1335
        %v1337 = vsel %vm1020, %v1329, -inf
        %1338 = vmax.xlane.f32.xlu0 %v1337
        %v1339 = vpop.xlane.xlu0 %1338
        %v1340 = vsub.f32 %v1277, %v1336
        %v1341 = vsub.f32 %v1329, %v1339
        %v1342 = vmul.f32 %v1340, 1.442695
        %v1343 = vpow.pop %v1342
        %v1344 = vmul.f32 %v1341, 1.442695
        %v1345 = vpow.pop %v1344
        %v1346 = vsel %vm1020, %v1343, 0.0
        %1347 = vadd.xlane.f32.xlu0 %v1346
        %v1348 = vpop.xlane.xlu0 %1347
        %v1349 = vsel %vm1020, %v1345, 0.0
        %1350 = vadd.xlane.f32.xlu0 %v1349
        %v1351 = vpop.xlane.xlu0 %1350
        %v1352 = vrcp.pop %v1348
        %v1353 = vrcp.pop %v1351
        %v1354 = vmul.f32 %v1343, %v1352
        %v1355 = vmul.f32 %v1345, %v1353
        %v1356 = vpack.c.bf16 %v1354, %v1354
        %v1357 = vpack.c.bf16 %v1355, %v1355
        %1359 = vrot.lane.b32.xlu0 %v1008, 120
        %v1360 = vpop.permute.xlu0 %1359
        %v1362 = vsel %vm1020, %v1356, 0
        %v1365 = vsel %vm1140, %v1360, 0
        %1367 = vmatprep.subr.bf16.mxu0 0
        %1368 = vmatpush1.bf16.msra.mxu0 %v1365
        %1369 = vmatprep.subr.bf16.mxu0 0
        %1370 = vmatpush1.bf16.msra.mxu0 0
        %1371 = vmatprep.subr.bf16.mxu0 0
        %1372 = vmatpush1.bf16.msra.mxu0 0
        %1373 = vmatprep.subr.bf16.mxu0 0
        %1374 = vmatpush1.bf16.msra.mxu0 0
        %1375 = vmatprep.subr.bf16.mxu0 0
        %1376 = vmatpush1.bf16.msra.mxu0 0
        %1377 = vmatprep.subr.bf16.mxu0 0
        %1378 = vmatpush1.bf16.msra.mxu0 0
        %1379 = vmatprep.subr.bf16.mxu0 0
        %1380 = vmatpush1.bf16.msra.mxu0 0
        %1381 = vmatprep.subr.bf16.mxu0 0
        %1382 = vmatpush1.bf16.msra.mxu0 0
        %1383 = vmatprep.subr.bf16.mxu0 0
        %1384 = vmatpush1.bf16.msra.mxu0 0
        %1385 = vmatprep.subr.bf16.mxu0 0
        %1386 = vmatpush1.bf16.msra.mxu0 0
        %1387 = vmatprep.subr.bf16.mxu0 0
        %1388 = vmatpush1.bf16.msra.mxu0 0
        %1389 = vmatprep.subr.bf16.mxu0 0
        %1390 = vmatpush1.bf16.msra.mxu0 0
        %1391 = vmatprep.subr.bf16.mxu0 0
        %1392 = vmatpush1.bf16.msra.mxu0 0
        %1393 = vmatprep.subr.bf16.mxu0 0
        %1394 = vmatpush1.bf16.msra.mxu0 0
        %1395 = vmatprep.subr.bf16.mxu0 0
        %1396 = vmatpush1.bf16.msra.mxu0 0
        %1397 = vmatprep.subr.bf16.mxu0 0
        %1398 = vmatpush1.bf16.msra.mxu0 0
        %1399 = vmatprep.mubr.bf16.mxu0 0
        %1400 = vmatmul.mubr.bf16.gmra.mrb[0].mxu0 %v1362
        %v1401 = vpop.f32.mrb[0].mxu0
        %v1402 = vadd.f32 0.0, %v1401
        %v1403 = vpop.f32.mrb[0].mxu0
        %v1404 = vpop.f32.mrb[0].mxu0
        %v1405 = vpop.f32.mrb[0].mxu0
        %1406 = vdwg.mxu0
        %1408 = vrot.lane.b32.xlu0 %v1009, 120
        %v1409 = vpop.permute.xlu0 %1408
        %v1411 = vsel %vm1020, %v1357, 0
        %v1414 = vsel %vm1140, %v1409, 0
        %1416 = vmatprep.subr.bf16.mxu0 0
        %1417 = vmatpush1.bf16.msra.mxu0 %v1414
        %1418 = vmatprep.subr.bf16.mxu0 0
        %1419 = vmatpush1.bf16.msra.mxu0 0
        %1420 = vmatprep.subr.bf16.mxu0 0
        %1421 = vmatpush1.bf16.msra.mxu0 0
        %1422 = vmatprep.subr.bf16.mxu0 0
        %1423 = vmatpush1.bf16.msra.mxu0 0
        %1424 = vmatprep.subr.bf16.mxu0 0
        %1425 = vmatpush1.bf16.msra.mxu0 0
        %1426 = vmatprep.subr.bf16.mxu0 0
        %1427 = vmatpush1.bf16.msra.mxu0 0
        %1428 = vmatprep.subr.bf16.mxu0 0
        %1429 = vmatpush1.bf16.msra.mxu0 0
        %1430 = vmatprep.subr.bf16.mxu0 0
        %1431 = vmatpush1.bf16.msra.mxu0 0
        %1432 = vmatprep.subr.bf16.mxu0 0
        %1433 = vmatpush1.bf16.msra.mxu0 0
        %1434 = vmatprep.subr.bf16.mxu0 0
        %1435 = vmatpush1.bf16.msra.mxu0 0
        %1436 = vmatprep.subr.bf16.mxu0 0
        %1437 = vmatpush1.bf16.msra.mxu0 0
        %1438 = vmatprep.subr.bf16.mxu0 0
        %1439 = vmatpush1.bf16.msra.mxu0 0
        %1440 = vmatprep.subr.bf16.mxu0 0
        %1441 = vmatpush1.bf16.msra.mxu0 0
        %1442 = vmatprep.subr.bf16.mxu0 0
        %1443 = vmatpush1.bf16.msra.mxu0 0
        %1444 = vmatprep.subr.bf16.mxu0 0
        %1445 = vmatpush1.bf16.msra.mxu0 0
        %1446 = vmatprep.subr.bf16.mxu0 0
        %1447 = vmatpush1.bf16.msra.mxu0 0
        %1448 = vmatprep.mubr.bf16.mxu0 0
        %1449 = vmatmul.mubr.bf16.gmra.mrb[0].mxu0 %v1411
        %v1450 = vpop.f32.mrb[0].mxu0
        %v1451 = vadd.f32 0.0, %v1450
        %v1452 = vpop.f32.mrb[0].mxu0
        %v1453 = vpop.f32.mrb[0].mxu0
        %v1454 = vpop.f32.mrb[0].mxu0
        %1455 = vdwg.mxu0
        %1456 = vrot.lane.b32.xlu0 %v1004, 112
        %v1457 = vpop.permute.xlu0 %1456
        %1458 = vrot.lane.b32.xlu0 %v1006, 112
        %v1459 = vpop.permute.xlu0 %1458
        %v1461 = vsel %vm1020, %v1457, 0
        %v1464 = vsel %vm1020, %v1459, 0
        %1466 = vmatprep.subr.bf16.mxu0 0
        %1467 = vmatpush1.bf16.xpose.msra.mxu0 %v1464
        %1468 = vmatprep.subr.bf16.mxu0 0
        %1469 = vmatpush1.bf16.xpose.msra.mxu0 0
        %1470 = vmatprep.subr.bf16.mxu0 0
        %1471 = vmatpush1.bf16.xpose.msra.mxu0 0
        %1472 = vmatprep.subr.bf16.mxu0 0
        %1473 = vmatpush1.bf16.xpose.msra.mxu0 0
        %1474 = vmatprep.subr.bf16.mxu0 0
        %1475 = vmatpush1.bf16.xpose.msra.mxu0 0
        %1476 = vmatprep.subr.bf16.mxu0 0
        %1477 = vmatpush1.bf16.xpose.msra.mxu0 0
        %1478 = vmatprep.subr.bf16.mxu0 0
        %1479 = vmatpush1.bf16.xpose.msra.mxu0 0
        %1480 = vmatprep.subr.bf16.mxu0 0
        %1481 = vmatpush1.bf16.xpose.msra.mxu0 0
        %1482 = vmatprep.subr.bf16.mxu0 0
        %1483 = vmatpush1.bf16.xpose.msra.mxu0 0
        %1484 = vmatprep.subr.bf16.mxu0 0
        %1485 = vmatpush1.bf16.xpose.msra.mxu0 0
        %1486 = vmatprep.subr.bf16.mxu0 0
        %1487 = vmatpush1.bf16.xpose.msra.mxu0 0
        %1488 = vmatprep.subr.bf16.mxu0 0
        %1489 = vmatpush1.bf16.xpose.msra.mxu0 0
        %1490 = vmatprep.subr.bf16.mxu0 0
        %1491 = vmatpush1.bf16.xpose.msra.mxu0 0
        %1492 = vmatprep.subr.bf16.mxu0 0
        %1493 = vmatpush1.bf16.xpose.msra.mxu0 0
        %1494 = vmatprep.subr.bf16.mxu0 0
        %1495 = vmatpush1.bf16.xpose.msra.mxu0 0
        %1496 = vmatprep.subr.bf16.mxu0 0
        %1497 = vmatpush1.bf16.xpose.msra.mxu0 0
        %1498 = vmatprep.mubr.bf16.mxu0 0
        %1499 = vmatmul.mubr.bf16.gmra.mrb[0].mxu0 %v1461
        %v1500 = vpop.f32.mrb[0].mxu0
        %v1501 = vadd.f32 %v1013, %v1500
        %v1502 = vpop.f32.mrb[0].mxu0
        %v1503 = vpop.f32.mrb[0].mxu0
        %v1504 = vpop.f32.mrb[0].mxu0
        %1505 = vdwg.mxu0
        %1506 = vrot.lane.b32.xlu0 %v1005, 112
        %v1507 = vpop.permute.xlu0 %1506
        %1508 = vrot.lane.b32.xlu0 %v1007, 112
        %v1509 = vpop.permute.xlu0 %1508
        %v1511 = vsel %vm1020, %v1507, 0
        %v1514 = vsel %vm1020, %v1509, 0
        %1516 = vmatprep.subr.bf16.mxu0 0
        %1517 = vmatpush1.bf16.xpose.msra.mxu0 %v1514
        %1518 = vmatprep.subr.bf16.mxu0 0
        %1519 = vmatpush1.bf16.xpose.msra.mxu0 0
        %1520 = vmatprep.subr.bf16.mxu0 0
        %1521 = vmatpush1.bf16.xpose.msra.mxu0 0
        %1522 = vmatprep.subr.bf16.mxu0 0
        %1523 = vmatpush1.bf16.xpose.msra.mxu0 0
        %1524 = vmatprep.subr.bf16.mxu0 0
        %1525 = vmatpush1.bf16.xpose.msra.mxu0 0
        %1526 = vmatprep.subr.bf16.mxu0 0
        %1527 = vmatpush1.bf16.xpose.msra.mxu0 0
        %1528 = vmatprep.subr.bf16.mxu0 0
        %1529 = vmatpush1.bf16.xpose.msra.mxu0 0
        %1530 = vmatprep.subr.bf16.mxu0 0
        %1531 = vmatpush1.bf16.xpose.msra.mxu0 0
        %1532 = vmatprep.subr.bf16.mxu0 0
        %1533 = vmatpush1.bf16.xpose.msra.mxu0 0
        %1534 = vmatprep.subr.bf16.mxu0 0
        %1535 = vmatpush1.bf16.xpose.msra.mxu0 0
        %1536 = vmatprep.subr.bf16.mxu0 0
        %1537 = vmatpush1.bf16.xpose.msra.mxu0 0
        %1538 = vmatprep.subr.bf16.mxu0 0
        %1539 = vmatpush1.bf16.xpose.msra.mxu0 0
        %1540 = vmatprep.subr.bf16.mxu0 0
        %1541 = vmatpush1.bf16.xpose.msra.mxu0 0
        %1542 = vmatprep.subr.bf16.mxu0 0
        %1543 = vmatpush1.bf16.xpose.msra.mxu0 0
        %1544 = vmatprep.subr.bf16.mxu0 0
        %1545 = vmatpush1.bf16.xpose.msra.mxu0 0
        %1546 = vmatprep.subr.bf16.mxu0 0
        %1547 = vmatpush1.bf16.xpose.msra.mxu0 0
        %1548 = vmatprep.mubr.bf16.mxu0 0
        %1549 = vmatmul.mubr.bf16.gmra.mrb[0].mxu0 %v1511
        %v1550 = vpop.f32.mrb[0].mxu0
        %v1551 = vadd.f32 %v1017, %v1550
        %v1552 = vpop.f32.mrb[0].mxu0
        %v1553 = vpop.f32.mrb[0].mxu0
        %v1554 = vpop.f32.mrb[0].mxu0
        %1555 = vdwg.mxu0
        %v1556 = vsel %vm1020, %v1501, -inf
        %1557 = vmax.xlane.f32.xlu0 %v1556
        %v1558 = vpop.xlane.xlu0 %1557
        %v1559 = vsel %vm1020, %v1551, -inf
        %1560 = vmax.xlane.f32.xlu0 %v1559
        %v1561 = vpop.xlane.xlu0 %1560
        %v1562 = vsub.f32 %v1501, %v1558
        %v1563 = vsub.f32 %v1551, %v1561
        %v1564 = vmul.f32 %v1562, 1.442695
        %v1565 = vpow.pop %v1564
        %v1566 = vmul.f32 %v1563, 1.442695
        %v1567 = vpow.pop %v1566
        %v1568 = vsel %vm1020, %v1565, 0.0
        %1569 = vadd.xlane.f32.xlu0 %v1568
        %v1570 = vpop.xlane.xlu0 %1569
        %v1571 = vsel %vm1020, %v1567, 0.0
        %1572 = vadd.xlane.f32.xlu0 %v1571
        %v1573 = vpop.xlane.xlu0 %1572
        %v1574 = vrcp.pop %v1570
        %v1575 = vrcp.pop %v1573
        %v1576 = vmul.f32 %v1565, %v1574
        %v1577 = vmul.f32 %v1567, %v1575
        %v1578 = vpack.c.bf16 %v1576, %v1576
        %v1579 = vpack.c.bf16 %v1577, %v1577
        %1580 = vrot.lane.b32.xlu0 %v1008, 112
        %v1581 = vpop.permute.xlu0 %1580
        %v1583 = vsel %vm1020, %v1578, 0
        %v1586 = vsel %vm1140, %v1581, 0
        %1588 = vmatprep.subr.bf16.mxu0 0
        %1589 = vmatpush1.bf16.msra.mxu0 %v1586
        %1590 = vmatprep.subr.bf16.mxu0 0
        %1591 = vmatpush1.bf16.msra.mxu0 0
        %1592 = vmatprep.subr.bf16.mxu0 0
        %1593 = vmatpush1.bf16.msra.mxu0 0
        %1594 = vmatprep.subr.bf16.mxu0 0
        %1595 = vmatpush1.bf16.msra.mxu0 0
        %1596 = vmatprep.subr.bf16.mxu0 0
        %1597 = vmatpush1.bf16.msra.mxu0 0
        %1598 = vmatprep.subr.bf16.mxu0 0
        %1599 = vmatpush1.bf16.msra.mxu0 0
        %1600 = vmatprep.subr.bf16.mxu0 0
        %1601 = vmatpush1.bf16.msra.mxu0 0
        %1602 = vmatprep.subr.bf16.mxu0 0
        %1603 = vmatpush1.bf16.msra.mxu0 0
        %1604 = vmatprep.subr.bf16.mxu0 0
        %1605 = vmatpush1.bf16.msra.mxu0 0
        %1606 = vmatprep.subr.bf16.mxu0 0
        %1607 = vmatpush1.bf16.msra.mxu0 0
        %1608 = vmatprep.subr.bf16.mxu0 0
        %1609 = vmatpush1.bf16.msra.mxu0 0
        %1610 = vmatprep.subr.bf16.mxu0 0
        %1611 = vmatpush1.bf16.msra.mxu0 0
        %1612 = vmatprep.subr.bf16.mxu0 0
        %1613 = vmatpush1.bf16.msra.mxu0 0
        %1614 = vmatprep.subr.bf16.mxu0 0
        %1615 = vmatpush1.bf16.msra.mxu0 0
        %1616 = vmatprep.subr.bf16.mxu0 0
        %1617 = vmatpush1.bf16.msra.mxu0 0
        %1618 = vmatprep.subr.bf16.mxu0 0
        %1619 = vmatpush1.bf16.msra.mxu0 0
        %1620 = vmatprep.mubr.bf16.mxu0 0
        %1621 = vmatmul.mubr.bf16.gmra.mrb[0].mxu0 %v1583
        %v1622 = vpop.f32.mrb[0].mxu0
        %v1623 = vadd.f32 0.0, %v1622
        %v1624 = vpop.f32.mrb[0].mxu0
        %v1625 = vpop.f32.mrb[0].mxu0
        %v1626 = vpop.f32.mrb[0].mxu0
        %1627 = vdwg.mxu0
        %1628 = vrot.lane.b32.xlu0 %v1009, 112
        %v1629 = vpop.permute.xlu0 %1628
        %v1631 = vsel %vm1020, %v1579, 0
        %v1634 = vsel %vm1140, %v1629, 0
        %1636 = vmatprep.subr.bf16.mxu0 0
        %1637 = vmatpush1.bf16.msra.mxu0 %v1634
        %1638 = vmatprep.subr.bf16.mxu0 0
        %1639 = vmatpush1.bf16.msra.mxu0 0
        %1640 = vmatprep.subr.bf16.mxu0 0
        %1641 = vmatpush1.bf16.msra.mxu0 0
        %1642 = vmatprep.subr.bf16.mxu0 0
        %1643 = vmatpush1.bf16.msra.mxu0 0
        %1644 = vmatprep.subr.bf16.mxu0 0
        %1645 = vmatpush1.bf16.msra.mxu0 0
        %1646 = vmatprep.subr.bf16.mxu0 0
        %1647 = vmatpush1.bf16.msra.mxu0 0
        %1648 = vmatprep.subr.bf16.mxu0 0
        %1649 = vmatpush1.bf16.msra.mxu0 0
        %1650 = vmatprep.subr.bf16.mxu0 0
        %1651 = vmatpush1.bf16.msra.mxu0 0
        %1652 = vmatprep.subr.bf16.mxu0 0
        %1653 = vmatpush1.bf16.msra.mxu0 0
        %1654 = vmatprep.subr.bf16.mxu0 0
        %1655 = vmatpush1.bf16.msra.mxu0 0
        %1656 = vmatprep.subr.bf16.mxu0 0
        %1657 = vmatpush1.bf16.msra.mxu0 0
        %1658 = vmatprep.subr.bf16.mxu0 0
        %1659 = vmatpush1.bf16.msra.mxu0 0
        %1660 = vmatprep.subr.bf16.mxu0 0
        %1661 = vmatpush1.bf16.msra.mxu0 0
        %1662 = vmatprep.subr.bf16.mxu0 0
        %1663 = vmatpush1.bf16.msra.mxu0 0
        %1664 = vmatprep.subr.bf16.mxu0 0
        %1665 = vmatpush1.bf16.msra.mxu0 0
        %1666 = vmatprep.subr.bf16.mxu0 0
        %1667 = vmatpush1.bf16.msra.mxu0 0
        %1668 = vmatprep.mubr.bf16.mxu0 0
        %1669 = vmatmul.mubr.bf16.gmra.mrb[0].mxu0 %v1631
        %v1670 = vpop.f32.mrb[0].mxu0
        %v1671 = vadd.f32 0.0, %v1670
        %v1672 = vpop.f32.mrb[0].mxu0
        %v1673 = vpop.f32.mrb[0].mxu0
        %v1674 = vpop.f32.mrb[0].mxu0
        %1675 = vdwg.mxu0
        %1676 = vrot.lane.b32.xlu0 %v1004, 104
        %v1677 = vpop.permute.xlu0 %1676
        %1678 = vrot.lane.b32.xlu0 %v1006, 104
        %v1679 = vpop.permute.xlu0 %1678
        %v1681 = vsel %vm1020, %v1677, 0
        %v1684 = vsel %vm1020, %v1679, 0
        %1686 = vmatprep.subr.bf16.mxu0 0
        %1687 = vmatpush1.bf16.xpose.msra.mxu0 %v1684
        %1688 = vmatprep.subr.bf16.mxu0 0
        %1689 = vmatpush1.bf16.xpose.msra.mxu0 0
        %1690 = vmatprep.subr.bf16.mxu0 0
        %1691 = vmatpush1.bf16.xpose.msra.mxu0 0
        %1692 = vmatprep.subr.bf16.mxu0 0
        %1693 = vmatpush1.bf16.xpose.msra.mxu0 0
        %1694 = vmatprep.subr.bf16.mxu0 0
        %1695 = vmatpush1.bf16.xpose.msra.mxu0 0
        %1696 = vmatprep.subr.bf16.mxu0 0
        %1697 = vmatpush1.bf16.xpose.msra.mxu0 0
        %1698 = vmatprep.subr.bf16.mxu0 0
        %1699 = vmatpush1.bf16.xpose.msra.mxu0 0
        %1700 = vmatprep.subr.bf16.mxu0 0
        %1701 = vmatpush1.bf16.xpose.msra.mxu0 0
        %1702 = vmatprep.subr.bf16.mxu0 0
        %1703 = vmatpush1.bf16.xpose.msra.mxu0 0
        %1704 = vmatprep.subr.bf16.mxu0 0
        %1705 = vmatpush1.bf16.xpose.msra.mxu0 0
        %1706 = vmatprep.subr.bf16.mxu0 0
        %1707 = vmatpush1.bf16.xpose.msra.mxu0 0
        %1708 = vmatprep.subr.bf16.mxu0 0
        %1709 = vmatpush1.bf16.xpose.msra.mxu0 0
        %1710 = vmatprep.subr.bf16.mxu0 0
        %1711 = vmatpush1.bf16.xpose.msra.mxu0 0
        %1712 = vmatprep.subr.bf16.mxu0 0
        %1713 = vmatpush1.bf16.xpose.msra.mxu0 0
        %1714 = vmatprep.subr.bf16.mxu0 0
        %1715 = vmatpush1.bf16.xpose.msra.mxu0 0
        %1716 = vmatprep.subr.bf16.mxu0 0
        %1717 = vmatpush1.bf16.xpose.msra.mxu0 0
        %1718 = vmatprep.mubr.bf16.mxu0 0
        %1719 = vmatmul.mubr.bf16.gmra.mrb[0].mxu0 %v1681
        %v1720 = vpop.f32.mrb[0].mxu0
        %v1721 = vadd.f32 %v1013, %v1720
        %v1722 = vpop.f32.mrb[0].mxu0
        %v1723 = vpop.f32.mrb[0].mxu0
        %v1724 = vpop.f32.mrb[0].mxu0
        %1725 = vdwg.mxu0
        %1726 = vrot.lane.b32.xlu0 %v1005, 104
        %v1727 = vpop.permute.xlu0 %1726
        %1728 = vrot.lane.b32.xlu0 %v1007, 104
        %v1729 = vpop.permute.xlu0 %1728
        %v1731 = vsel %vm1020, %v1727, 0
        %v1734 = vsel %vm1020, %v1729, 0
        %1736 = vmatprep.subr.bf16.mxu0 0
        %1737 = vmatpush1.bf16.xpose.msra.mxu0 %v1734
        %1738 = vmatprep.subr.bf16.mxu0 0
        %1739 = vmatpush1.bf16.xpose.msra.mxu0 0
        %1740 = vmatprep.subr.bf16.mxu0 0
        %1741 = vmatpush1.bf16.xpose.msra.mxu0 0
        %1742 = vmatprep.subr.bf16.mxu0 0
        %1743 = vmatpush1.bf16.xpose.msra.mxu0 0
        %1744 = vmatprep.subr.bf16.mxu0 0
        %1745 = vmatpush1.bf16.xpose.msra.mxu0 0
        %1746 = vmatprep.subr.bf16.mxu0 0
        %1747 = vmatpush1.bf16.xpose.msra.mxu0 0
        %1748 = vmatprep.subr.bf16.mxu0 0
        %1749 = vmatpush1.bf16.xpose.msra.mxu0 0
        %1750 = vmatprep.subr.bf16.mxu0 0
        %1751 = vmatpush1.bf16.xpose.msra.mxu0 0
        %1752 = vmatprep.subr.bf16.mxu0 0
        %1753 = vmatpush1.bf16.xpose.msra.mxu0 0
        %1754 = vmatprep.subr.bf16.mxu0 0
        %1755 = vmatpush1.bf16.xpose.msra.mxu0 0
        %1756 = vmatprep.subr.bf16.mxu0 0
        %1757 = vmatpush1.bf16.xpose.msra.mxu0 0
        %1758 = vmatprep.subr.bf16.mxu0 0
        %1759 = vmatpush1.bf16.xpose.msra.mxu0 0
        %1760 = vmatprep.subr.bf16.mxu0 0
        %1761 = vmatpush1.bf16.xpose.msra.mxu0 0
        %1762 = vmatprep.subr.bf16.mxu0 0
        %1763 = vmatpush1.bf16.xpose.msra.mxu0 0
        %1764 = vmatprep.subr.bf16.mxu0 0
        %1765 = vmatpush1.bf16.xpose.msra.mxu0 0
        %1766 = vmatprep.subr.bf16.mxu0 0
        %1767 = vmatpush1.bf16.xpose.msra.mxu0 0
        %1768 = vmatprep.mubr.bf16.mxu0 0
        %1769 = vmatmul.mubr.bf16.gmra.mrb[0].mxu0 %v1731
        %v1770 = vpop.f32.mrb[0].mxu0
        %v1771 = vadd.f32 %v1017, %v1770
        %v1772 = vpop.f32.mrb[0].mxu0
        %v1773 = vpop.f32.mrb[0].mxu0
        %v1774 = vpop.f32.mrb[0].mxu0
        %1775 = vdwg.mxu0
        %v1776 = vsel %vm1020, %v1721, -inf
        %1777 = vmax.xlane.f32.xlu0 %v1776
        %v1778 = vpop.xlane.xlu0 %1777
        %v1779 = vsel %vm1020, %v1771, -inf
        %1780 = vmax.xlane.f32.xlu0 %v1779
        %v1781 = vpop.xlane.xlu0 %1780
        %v1782 = vsub.f32 %v1721, %v1778
        %v1783 = vsub.f32 %v1771, %v1781
        %v1784 = vmul.f32 %v1782, 1.442695
        %v1785 = vpow.pop %v1784
        %v1786 = vmul.f32 %v1783, 1.442695
        %v1787 = vpow.pop %v1786
        %v1788 = vsel %vm1020, %v1785, 0.0
        %1789 = vadd.xlane.f32.xlu0 %v1788
        %v1790 = vpop.xlane.xlu0 %1789
        %v1791 = vsel %vm1020, %v1787, 0.0
        %1792 = vadd.xlane.f32.xlu0 %v1791
        %v1793 = vpop.xlane.xlu0 %1792
        %v1794 = vrcp.pop %v1790
        %v1795 = vrcp.pop %v1793
        %v1796 = vmul.f32 %v1785, %v1794
        %v1797 = vmul.f32 %v1787, %v1795
        %v1798 = vpack.c.bf16 %v1796, %v1796
        %v1799 = vpack.c.bf16 %v1797, %v1797
        %1800 = vrot.lane.b32.xlu0 %v1008, 104
        %v1801 = vpop.permute.xlu0 %1800
        %v1803 = vsel %vm1020, %v1798, 0
        %v1806 = vsel %vm1140, %v1801, 0
        %1808 = vmatprep.subr.bf16.mxu0 0
        %1809 = vmatpush1.bf16.msra.mxu0 %v1806
        %1810 = vmatprep.subr.bf16.mxu0 0
        %1811 = vmatpush1.bf16.msra.mxu0 0
        %1812 = vmatprep.subr.bf16.mxu0 0
        %1813 = vmatpush1.bf16.msra.mxu0 0
        %1814 = vmatprep.subr.bf16.mxu0 0
        %1815 = vmatpush1.bf16.msra.mxu0 0
        %1816 = vmatprep.subr.bf16.mxu0 0
        %1817 = vmatpush1.bf16.msra.mxu0 0
        %1818 = vmatprep.subr.bf16.mxu0 0
        %1819 = vmatpush1.bf16.msra.mxu0 0
        %1820 = vmatprep.subr.bf16.mxu0 0
        %1821 = vmatpush1.bf16.msra.mxu0 0
        %1822 = vmatprep.subr.bf16.mxu0 0
        %1823 = vmatpush1.bf16.msra.mxu0 0
        %1824 = vmatprep.subr.bf16.mxu0 0
        %1825 = vmatpush1.bf16.msra.mxu0 0
        %1826 = vmatprep.subr.bf16.mxu0 0
        %1827 = vmatpush1.bf16.msra.mxu0 0
        %1828 = vmatprep.subr.bf16.mxu0 0
        %1829 = vmatpush1.bf16.msra.mxu0 0
        %1830 = vmatprep.subr.bf16.mxu0 0
        %1831 = vmatpush1.bf16.msra.mxu0 0
        %1832 = vmatprep.subr.bf16.mxu0 0
        %1833 = vmatpush1.bf16.msra.mxu0 0
        %1834 = vmatprep.subr.bf16.mxu0 0
        %1835 = vmatpush1.bf16.msra.mxu0 0
        %1836 = vmatprep.subr.bf16.mxu0 0
        %1837 = vmatpush1.bf16.msra.mxu0 0
        %1838 = vmatprep.subr.bf16.mxu0 0
        %1839 = vmatpush1.bf16.msra.mxu0 0
        %1840 = vmatprep.mubr.bf16.mxu0 0
        %1841 = vmatmul.mubr.bf16.gmra.mrb[0].mxu0 %v1803
        %v1842 = vpop.f32.mrb[0].mxu0
        %v1843 = vadd.f32 0.0, %v1842
        %v1844 = vpop.f32.mrb[0].mxu0
        %v1845 = vpop.f32.mrb[0].mxu0
        %v1846 = vpop.f32.mrb[0].mxu0
        %1847 = vdwg.mxu0
        %1848 = vrot.lane.b32.xlu0 %v1009, 104
        %v1849 = vpop.permute.xlu0 %1848
        %v1851 = vsel %vm1020, %v1799, 0
        %v1854 = vsel %vm1140, %v1849, 0
        %1856 = vmatprep.subr.bf16.mxu0 0
        %1857 = vmatpush1.bf16.msra.mxu0 %v1854
        %1858 = vmatprep.subr.bf16.mxu0 0
        %1859 = vmatpush1.bf16.msra.mxu0 0
        %1860 = vmatprep.subr.bf16.mxu0 0
        %1861 = vmatpush1.bf16.msra.mxu0 0
        %1862 = vmatprep.subr.bf16.mxu0 0
        %1863 = vmatpush1.bf16.msra.mxu0 0
        %1864 = vmatprep.subr.bf16.mxu0 0
        %1865 = vmatpush1.bf16.msra.mxu0 0
        %1866 = vmatprep.subr.bf16.mxu0 0
        %1867 = vmatpush1.bf16.msra.mxu0 0
        %1868 = vmatprep.subr.bf16.mxu0 0
        %1869 = vmatpush1.bf16.msra.mxu0 0
        %1870 = vmatprep.subr.bf16.mxu0 0
        %1871 = vmatpush1.bf16.msra.mxu0 0
        %1872 = vmatprep.subr.bf16.mxu0 0
        %1873 = vmatpush1.bf16.msra.mxu0 0
        %1874 = vmatprep.subr.bf16.mxu0 0
        %1875 = vmatpush1.bf16.msra.mxu0 0
        %1876 = vmatprep.subr.bf16.mxu0 0
        %1877 = vmatpush1.bf16.msra.mxu0 0
        %1878 = vmatprep.subr.bf16.mxu0 0
        %1879 = vmatpush1.bf16.msra.mxu0 0
        %1880 = vmatprep.subr.bf16.mxu0 0
        %1881 = vmatpush1.bf16.msra.mxu0 0
        %1882 = vmatprep.subr.bf16.mxu0 0
        %1883 = vmatpush1.bf16.msra.mxu0 0
        %1884 = vmatprep.subr.bf16.mxu0 0
        %1885 = vmatpush1.bf16.msra.mxu0 0
        %1886 = vmatprep.subr.bf16.mxu0 0
        %1887 = vmatpush1.bf16.msra.mxu0 0
        %1888 = vmatprep.mubr.bf16.mxu0 0
        %1889 = vmatmul.mubr.bf16.gmra.mrb[0].mxu0 %v1851
        %v1890 = vpop.f32.mrb[0].mxu0
        %v1891 = vadd.f32 0.0, %v1890
        %v1892 = vpop.f32.mrb[0].mxu0
        %v1893 = vpop.f32.mrb[0].mxu0
        %v1894 = vpop.f32.mrb[0].mxu0
        %1895 = vdwg.mxu0
        %1898 = vrot.lane.b32.xlu0 %v1402, 8
        %v1899 = vpop.permute.xlu0 %1898
        %1900 = vrot.lane.b32.xlu0 %v1451, 8
        %v1901 = vpop.permute.xlu0 %1900
        %1906 = vrot.lane.b32.xlu0 %v1623, 16
        %v1907 = vpop.permute.xlu0 %1906
        %1908 = vrot.lane.b32.xlu0 %v1671, 16
        %v1909 = vpop.permute.xlu0 %1908
        %1914 = vrot.lane.b32.xlu0 %v1843, 24
        %v1915 = vpop.permute.xlu0 %1914
        %1916 = vrot.lane.b32.xlu0 %v1891, 24
        %v1917 = vpop.permute.xlu0 %1916
        %v1920 = vsel %vm1020, %v1179, %v1899
        %v1921 = vsel %vm1020, %v1225, %v1901
        %vm1922 = vcmask 130048
        %v1923 = vsel %vm1922, %v1920, %v1907
        %v1924 = vsel %vm1922, %v1921, %v1909
        %vm1925 = vcmask 195584
        %v1926 = vsel %vm1925, %v1923, %v1915
        %v1927 = vsel %vm1925, %v1924, %v1917
        %v1928 = vpack.c.bf16 %v1927, %v1926
        %v1929 = vld [vmem:[%s594] sm:$0xf]
        %v1930 = vld [vmem:[%s594 + $0x4] sm:$0xf]
        %v1931 = vld [vmem:[%s594 + $0x8] sm:$0xf]
        %v1932 = vld [vmem:[%s594 + $0xc] sm:$0xf]
        %v1933 = vld [vmem:[%s698] sm:$0x1]
        %v1935 = vlaneseq
        %v1936 = vshrl.u32 %v1935, 7
        %v1937 = vsub.s32 0, %v1936
        %v1938 = vrot.slane %v1933, %v1937
        %v1944 = vunpack.c.l.b16 %v1929
        %v1945 = vunpack.c.l.b16 %v1930
        %v1946 = vunpack.c.l.b16 %v1931
        %v1947 = vunpack.c.l.b16 %v1932
        %v1948 = vpack.c.b16 %v1945, %v1944
        %v1949 = vpack.c.b16 %v1947, %v1946
        %v1953 = vsel %vm803, %v1928, 0
        %1955 = vmatprep.subr.bf16.mxu0 0
        %1956 = vmatpush1.bf16.msra.mxu0 %v1948
        %1957 = vmatprep.subr.bf16.mxu0 0
        %1958 = vmatpush1.bf16.msra.mxu0 %v1949
        %1959 = vmatprep.subr.bf16.mxu0 0
        %1960 = vmatpush1.bf16.msra.mxu0 0
        %1961 = vmatprep.subr.bf16.mxu0 0
        %1962 = vmatpush1.bf16.msra.mxu0 0
        %1963 = vmatprep.subr.bf16.mxu0 0
        %1964 = vmatpush1.bf16.msra.mxu0 0
        %1965 = vmatprep.subr.bf16.mxu0 0
        %1966 = vmatpush1.bf16.msra.mxu0 0
        %1967 = vmatprep.subr.bf16.mxu0 0
        %1968 = vmatpush1.bf16.msra.mxu0 0
        %1969 = vmatprep.subr.bf16.mxu0 0
        %1970 = vmatpush1.bf16.msra.mxu0 0
        %1971 = vmatprep.subr.bf16.mxu0 0
        %1972 = vmatpush1.bf16.msra.mxu0 0
        %1973 = vmatprep.subr.bf16.mxu0 0
        %1974 = vmatpush1.bf16.msra.mxu0 0
        %1975 = vmatprep.subr.bf16.mxu0 0
        %1976 = vmatpush1.bf16.msra.mxu0 0
        %1977 = vmatprep.subr.bf16.mxu0 0
        %1978 = vmatpush1.bf16.msra.mxu0 0
        %1979 = vmatprep.subr.bf16.mxu0 0
        %1980 = vmatpush1.bf16.msra.mxu0 0
        %1981 = vmatprep.subr.bf16.mxu0 0
        %1982 = vmatpush1.bf16.msra.mxu0 0
        %1983 = vmatprep.subr.bf16.mxu0 0
        %1984 = vmatpush1.bf16.msra.mxu0 0
        %1985 = vmatprep.subr.bf16.mxu0 0
        %1986 = vmatpush1.bf16.msra.mxu0 0
        %1987 = vmatprep.mubr.bf16.mxu0 0
        %1988 = vmatmul.mubr.bf16.gmra.mrb[0].mxu0 %v1953
        %v1989 = vpop.f32.mrb[0].mxu0
        %v1990 = vadd.f32 %v1938, %v1989
        %v1991 = vpop.f32.mrb[0].mxu0
        %v1992 = vpop.f32.mrb[0].mxu0
        %v1993 = vadd.f32 %v1938, %v1992
        %v1994 = vpop.f32.mrb[0].mxu0
        %1995 = vdwg.mxu0
        %v1996 = vadd.f32 %v1990, %v777
        %v1997 = vadd.f32 %v1993, %v778
        %v1998 = vld [vmem:[%s701] sm:$0x1]
        %v1999 = vld [vmem:[%s704] sm:$0x1]
        %v2000 = vsel %vm803, %v1996, 0.0
        %2001 = vadd.xlane.f32.xlu0 %v2000
        %v2002 = vpop.xlane.xlu0 %2001
        %v2003 = vsel %vm803, %v1997, 0.0
        %2004 = vadd.xlane.f32.xlu0 %v2003
        %v2005 = vpop.xlane.xlu0 %2004
        %v2006 = vrcp.pop 32.0
        %v2007 = vmul.f32 %v2002, %v2006
        %v2008 = vmul.f32 %v2005, %v2006
        %v2009 = vsub.f32 %v1996, %v2007
        %v2010 = vsub.f32 %v1997, %v2008
        %v2011 = vmul.f32 %v2009, %v2009
        %v2012 = vmul.f32 %v2010, %v2010
        %v2013 = vsel %vm803, %v2011, 0.0
        %2014 = vadd.xlane.f32.xlu0 %v2013
        %v2015 = vpop.xlane.xlu0 %2014
        %v2016 = vsel %vm803, %v2012, 0.0
        %2017 = vadd.xlane.f32.xlu0 %v2016
        %v2018 = vpop.xlane.xlu0 %2017
        %v2019 = vmul.f32 %v2015, %v2006
        %v2020 = vmul.f32 %v2018, %v2006
        %v2021 = vadd.f32 %v2019, 1e-12
        %v2022 = vadd.f32 %v2020, 1e-12
        %v2023 = vrsqrt.pop %v2021
        %v2024 = vrsqrt.pop %v2022
        %v2025 = vmul.f32 %v2009, %v2023
        %v2026 = vmul.f32 %v2010, %v2024
        %v2028 = vlaneseq
        %v2029 = vshrl.u32 %v2028, 7
        %v2030 = vsub.s32 0, %v2029
        %v2031 = vrot.slane %v1998, %v2030
        %v2033 = vmul.f32 %v2025, %v2031
        %v2034 = vmul.f32 %v2026, %v2031
        %v2036 = vlaneseq
        %v2037 = vshrl.u32 %v2036, 7
        %v2038 = vsub.s32 0, %v2037
        %v2039 = vrot.slane %v1999, %v2038
        %v2041 = vadd.f32 %v2033, %v2039
        %v2042 = vadd.f32 %v2034, %v2039
        %v2043 = vpack.c.bf16 %v2042, %v2041
        %v2044 = vld [vmem:[%s603] sm:$0xf]
        %v2045 = vld [vmem:[%s603 + $0x4] sm:$0xf]
        %v2046 = vld [vmem:[%s603 + $0x8] sm:$0xf]
        %v2047 = vld [vmem:[%s603 + $0xc] sm:$0xf]
        %v2048 = vld [vmem:[%s707] sm:$0x1]
        %v2050 = vlaneseq
        %v2051 = vshrl.u32 %v2050, 7
        %v2052 = vsub.s32 0, %v2051
        %v2053 = vrot.slane %v2048, %v2052
        %v2059 = vunpack.c.l.b16 %v2044
        %v2060 = vunpack.c.l.b16 %v2045
        %v2061 = vunpack.c.l.b16 %v2046
        %v2062 = vunpack.c.l.b16 %v2047
        %v2063 = vpack.c.b16 %v2060, %v2059
        %v2064 = vpack.c.b16 %v2062, %v2061
        %v2068 = vsel %vm803, %v2043, 0
        %2070 = vmatprep.subr.bf16.mxu0 0
        %2071 = vmatpush1.bf16.msra.mxu0 %v2063
        %2072 = vmatprep.subr.bf16.mxu0 0
        %2073 = vmatpush1.bf16.msra.mxu0 %v2064
        %2074 = vmatprep.subr.bf16.mxu0 0
        %2075 = vmatpush1.bf16.msra.mxu0 0
        %2076 = vmatprep.subr.bf16.mxu0 0
        %2077 = vmatpush1.bf16.msra.mxu0 0
        %2078 = vmatprep.subr.bf16.mxu0 0
        %2079 = vmatpush1.bf16.msra.mxu0 0
        %2080 = vmatprep.subr.bf16.mxu0 0
        %2081 = vmatpush1.bf16.msra.mxu0 0
        %2082 = vmatprep.subr.bf16.mxu0 0
        %2083 = vmatpush1.bf16.msra.mxu0 0
        %2084 = vmatprep.subr.bf16.mxu0 0
        %2085 = vmatpush1.bf16.msra.mxu0 0
        %2086 = vmatprep.subr.bf16.mxu0 0
        %2087 = vmatpush1.bf16.msra.mxu0 0
        %2088 = vmatprep.subr.bf16.mxu0 0
        %2089 = vmatpush1.bf16.msra.mxu0 0
        %2090 = vmatprep.subr.bf16.mxu0 0
        %2091 = vmatpush1.bf16.msra.mxu0 0
        %2092 = vmatprep.subr.bf16.mxu0 0
        %2093 = vmatpush1.bf16.msra.mxu0 0
        %2094 = vmatprep.subr.bf16.mxu0 0
        %2095 = vmatpush1.bf16.msra.mxu0 0
        %2096 = vmatprep.subr.bf16.mxu0 0
        %2097 = vmatpush1.bf16.msra.mxu0 0
        %2098 = vmatprep.subr.bf16.mxu0 0
        %2099 = vmatpush1.bf16.msra.mxu0 0
        %2100 = vmatprep.subr.bf16.mxu0 0
        %2101 = vmatpush1.bf16.msra.mxu0 0
        %2102 = vmatprep.mubr.bf16.mxu0 0
        %2103 = vmatmul.mubr.bf16.gmra.mrb[0].mxu0 %v2068
        %v2104 = vpop.f32.mrb[0].mxu0
        %v2105 = vadd.f32 %v2053, %v2104
        %v2106 = vpop.f32.mrb[0].mxu0
        %v2107 = vpop.f32.mrb[0].mxu0
        %v2108 = vadd.f32 %v2053, %v2107
        %v2109 = vpop.f32.mrb[0].mxu0
        %2110 = vdwg.mxu0
        %v2111 = vmul.f32 %v2105, 0.5
        %v2112 = vmul.f32 %v2108, 0.5
        %v2113 = vmul.f32 %v2105, 0.70710677
        %v2114 = vmul.f32 %v2108, 0.70710677
        %v2115 = vand.u32 2147483647, %v2113
        %v2116 = vand.u32 2147483647, %v2114
        %v2117 = vmul.f32 %v2115, 0.3275911
        %v2118 = vmul.f32 %v2116, 0.3275911
        %v2119 = vadd.f32 %v2117, 1.0
        %v2120 = vadd.f32 %v2118, 1.0
        %v2121 = vrcp.pop %v2119
        %v2122 = vmul.f32 1.0, %v2121
        %v2123 = vrcp.pop %v2120
        %v2124 = vmul.f32 1.0, %v2123
        %v2125 = vmul.f32 %v2122, 1.0614054
        %v2126 = vmul.f32 %v2124, 1.0614054
        %v2127 = vadd.f32 %v2125, -1.4531521
        %v2128 = vadd.f32 %v2126, -1.4531521
        %v2129 = vmul.f32 %v2127, %v2122
        %v2130 = vmul.f32 %v2128, %v2124
        %v2131 = vadd.f32 %v2129, 1.4214138
        %v2132 = vadd.f32 %v2130, 1.4214138
        %v2133 = vmul.f32 %v2131, %v2122
        %v2134 = vmul.f32 %v2132, %v2124
        %v2135 = vadd.f32 %v2133, -0.28449672
        %v2136 = vadd.f32 %v2134, -0.28449672
        %v2137 = vmul.f32 %v2135, %v2122
        %v2138 = vmul.f32 %v2136, %v2124
        %v2139 = vadd.f32 %v2137, 0.2548296
        %v2140 = vadd.f32 %v2138, 0.2548296
        %v2141 = vmul.f32 %v2139, %v2122
        %v2142 = vmul.f32 %v2140, %v2124
        %v2143 = vsub.f32 0.0, %v2115
        %v2144 = vsub.f32 0.0, %v2116
        %v2145 = vmul.f32 %v2143, %v2115
        %v2146 = vmul.f32 %v2144, %v2116
        %v2147 = vmul.f32 %v2145, 1.442695
        %v2148 = vpow.pop %v2147
        %v2149 = vmul.f32 %v2146, 1.442695
        %v2150 = vpow.pop %v2149
        %v2151 = vmul.f32 %v2141, %v2148
        %v2152 = vmul.f32 %v2142, %v2150
        %v2153 = vsub.f32 1.0, %v2151
        %v2154 = vsub.f32 1.0, %v2152
        %vm2155 = vcmp.ge.f32.partialorder %v2113, 0.0
        %vm2156 = vcmp.ge.f32.partialorder %v2114, 0.0
        %v2157 = vsub.f32 0.0, %v2153
        %v2158 = vsub.f32 0.0, %v2154
        %v2159 = vsel %vm2155, %v2153, %v2157
        %v2160 = vsel %vm2156, %v2154, %v2158
        %v2161 = vadd.f32 %v2159, 1.0
        %v2162 = vadd.f32 %v2160, 1.0
        %v2163 = vmul.f32 %v2111, %v2161
        %v2164 = vmul.f32 %v2112, %v2162
        %v2165 = vpack.c.bf16 %v2164, %v2163
        %v2166 = vld [vmem:[%s712] sm:$0xf]
        %v2167 = vld [vmem:[%s712 + $0x4] sm:$0xf]
        %v2168 = vld [vmem:[%s712 + $0x8] sm:$0xf]
        %v2169 = vld [vmem:[%s712 + $0xc] sm:$0xf]
        %v2170 = vld [vmem:[%s712 + $0x10] sm:$0xf]
        %v2171 = vld [vmem:[%s712 + $0x14] sm:$0xf]
        %v2172 = vld [vmem:[%s712 + $0x18] sm:$0xf]
        %v2173 = vld [vmem:[%s712 + $0x1c] sm:$0xf]
        %v2174 = vld [vmem:[%s712 + $0x20] sm:$0xf]
        %v2175 = vld [vmem:[%s712 + $0x24] sm:$0xf]
        %v2176 = vld [vmem:[%s712 + $0x28] sm:$0xf]
        %v2177 = vld [vmem:[%s712 + $0x2c] sm:$0xf]
        %v2178 = vld [vmem:[%s712 + $0x30] sm:$0xf]
        %v2179 = vld [vmem:[%s712 + $0x34] sm:$0xf]
        %v2180 = vld [vmem:[%s712 + $0x38] sm:$0xf]
        %v2181 = vld [vmem:[%s712 + $0x3c] sm:$0xf]
        %v2182 = vld [vmem:[%s715] sm:$0x1]
        %v2184 = vlaneseq
        %v2185 = vshrl.u32 %v2184, 7
        %v2186 = vsub.s32 0, %v2185
        %v2187 = vrot.slane %v2182, %v2186
        %v2205 = vunpack.c.l.b16 %v2166
        %v2206 = vunpack.c.l.b16 %v2167
        %v2207 = vunpack.c.l.b16 %v2168
        %v2208 = vunpack.c.l.b16 %v2169
        %v2209 = vunpack.c.l.b16 %v2170
        %v2210 = vunpack.c.l.b16 %v2171
        %v2211 = vunpack.c.l.b16 %v2172
        %v2212 = vunpack.c.l.b16 %v2173
        %v2213 = vunpack.c.l.b16 %v2174
        %v2214 = vunpack.c.l.b16 %v2175
        %v2215 = vunpack.c.l.b16 %v2176
        %v2216 = vunpack.c.l.b16 %v2177
        %v2217 = vunpack.c.l.b16 %v2178
        %v2218 = vunpack.c.l.b16 %v2179
        %v2219 = vunpack.c.l.b16 %v2180
        %v2220 = vunpack.c.l.b16 %v2181
        %v2221 = vpack.c.b16 %v2206, %v2205
        %v2222 = vpack.c.b16 %v2208, %v2207
        %v2223 = vpack.c.b16 %v2210, %v2209
        %v2224 = vpack.c.b16 %v2212, %v2211
        %v2225 = vpack.c.b16 %v2214, %v2213
        %v2226 = vpack.c.b16 %v2216, %v2215
        %v2227 = vpack.c.b16 %v2218, %v2217
        %v2228 = vpack.c.b16 %v2220, %v2219
        %2237 = vmatprep.subr.bf16.mxu0 0
        %2238 = vmatpush1.bf16.msra.mxu0 %v2221
        %2239 = vmatprep.subr.bf16.mxu0 0
        %2240 = vmatpush1.bf16.msra.mxu0 %v2222
        %2241 = vmatprep.subr.bf16.mxu0 0
        %2242 = vmatpush1.bf16.msra.mxu0 %v2223
        %2243 = vmatprep.subr.bf16.mxu0 0
        %2244 = vmatpush1.bf16.msra.mxu0 %v2224
        %2245 = vmatprep.subr.bf16.mxu0 0
        %2246 = vmatpush1.bf16.msra.mxu0 %v2225
        %2247 = vmatprep.subr.bf16.mxu0 0
        %2248 = vmatpush1.bf16.msra.mxu0 %v2226
        %2249 = vmatprep.subr.bf16.mxu0 0
        %2250 = vmatpush1.bf16.msra.mxu0 %v2227
        %2251 = vmatprep.subr.bf16.mxu0 0
        %2252 = vmatpush1.bf16.msra.mxu0 %v2228
        %2253 = vmatprep.subr.bf16.mxu0 0
        %2254 = vmatpush1.bf16.msra.mxu0 0
        %2255 = vmatprep.subr.bf16.mxu0 0
        %2256 = vmatpush1.bf16.msra.mxu0 0
        %2257 = vmatprep.subr.bf16.mxu0 0
        %2258 = vmatpush1.bf16.msra.mxu0 0
        %2259 = vmatprep.subr.bf16.mxu0 0
        %2260 = vmatpush1.bf16.msra.mxu0 0
        %2261 = vmatprep.subr.bf16.mxu0 0
        %2262 = vmatpush1.bf16.msra.mxu0 0
        %2263 = vmatprep.subr.bf16.mxu0 0
        %2264 = vmatpush1.bf16.msra.mxu0 0
        %2265 = vmatprep.subr.bf16.mxu0 0
        %2266 = vmatpush1.bf16.msra.mxu0 0
        %2267 = vmatprep.subr.bf16.mxu0 0
        %2268 = vmatpush1.bf16.msra.mxu0 0
        %2269 = vmatprep.mubr.bf16.mxu0 0
        %2270 = vmatmul.mubr.bf16.gmra.mrb[0].mxu0 %v2165
        %v2271 = vpop.f32.mrb[0].mxu0
        %v2272 = vadd.f32 %v2187, %v2271
        %v2273 = vpop.f32.mrb[0].mxu0
        %v2274 = vpop.f32.mrb[0].mxu0
        %v2275 = vadd.f32 %v2187, %v2274
        %v2276 = vpop.f32.mrb[0].mxu0
        %2277 = vdwg.mxu0
        %v2278 = vadd.f32 %v2272, %v2041
        %v2279 = vadd.f32 %v2275, %v2042
        %v2280 = vld [vmem:[%s718] sm:$0x1]
        %v2281 = vld [vmem:[%s721] sm:$0x1]
        %v2282 = vsel %vm803, %v2278, 0.0
        %2283 = vadd.xlane.f32.xlu0 %v2282
        %v2284 = vpop.xlane.xlu0 %2283
        %v2285 = vsel %vm803, %v2279, 0.0
        %2286 = vadd.xlane.f32.xlu0 %v2285
        %v2287 = vpop.xlane.xlu0 %2286
        %v2288 = vmul.f32 %v2284, %v2006
        %v2289 = vmul.f32 %v2287, %v2006
        %v2290 = vsub.f32 %v2278, %v2288
        %v2291 = vsub.f32 %v2279, %v2289
        %v2292 = vmul.f32 %v2290, %v2290
        %v2293 = vmul.f32 %v2291, %v2291
        %v2294 = vsel %vm803, %v2292, 0.0
        %2295 = vadd.xlane.f32.xlu0 %v2294
        %v2296 = vpop.xlane.xlu0 %2295
        %v2297 = vsel %vm803, %v2293, 0.0
        %2298 = vadd.xlane.f32.xlu0 %v2297
        %v2299 = vpop.xlane.xlu0 %2298
        %v2300 = vmul.f32 %v2296, %v2006
        %v2301 = vmul.f32 %v2299, %v2006
        %v2302 = vadd.f32 %v2300, 1e-12
        %v2303 = vadd.f32 %v2301, 1e-12
        %v2304 = vrsqrt.pop %v2302
        %v2305 = vrsqrt.pop %v2303
        %v2306 = vmul.f32 %v2290, %v2304
        %v2307 = vmul.f32 %v2291, %v2305
        %v2309 = vlaneseq
        %v2310 = vshrl.u32 %v2309, 7
        %v2311 = vsub.s32 0, %v2310
        %v2312 = vrot.slane %v2280, %v2311
        %v2314 = vmul.f32 %v2306, %v2312
        %v2315 = vmul.f32 %v2307, %v2312
        %v2317 = vlaneseq
        %v2318 = vshrl.u32 %v2317, 7
        %v2319 = vsub.s32 0, %v2318
        %v2320 = vrot.slane %v2281, %v2319
        %v2322 = vadd.f32 %v2314, %v2320
        %v2323 = vadd.f32 %v2315, %v2320
        %2324 = vst.msk [vmem:[%s16] sm:$0xff] %vm803, %v2322
        %2325 = vst.msk [vmem:[%s16 + $0x8] sm:$0xff] %vm803, %v2323
        // Predicated region
        $region97: #{_lambda_.2} parent=83 // pred_check
          %p2326 = pneg %p442
        $region98: #{_lambda_.2} parent=83 // pred_check_branch
          %2328 = sbr.rel (%p2326) target = $region100
        $region99: #{_lambda_.2} parent=83 // pred_region
          _
        $region100: #{_lambda_.2} parent=83 // pred_fallthru
          _
        // Predicated region
        $region101: #{_lambda_.2} parent=83 // pred_check
          %p2329 = pneg %p442
        $region102: #{_lambda_.2} parent=83 // pred_check_branch
          %2331 = sbr.rel (%p2329) target = $region104
        $region103: #{_lambda_.2} parent=83 // pred_region
          _
        $region104: #{_lambda_.2} parent=83 // pred_fallthru
          _
      $region84: #{_lambda_.2} parent=5 // pred_fallthru
        _
      %p2332 = scmp.le.s32.totalorder 2, %s28
      // Predicated region
      $region105: #{_lambda_.2} parent=5 // pred_check
        %p2333 = pneg %p2332
      $region106: #{_lambda_.2} parent=5 // pred_check_branch
        %2335 = sbr.rel (%p2333) target = $region108
      $region107: #{_lambda_.2} parent=5 // pred_region
        %s2336 = ssub.s32 %s28, 2
      $region108: #{_lambda_.2} parent=5 // pred_fallthru
        _
    $region6: #{_lambda_.2} parent=1 // loop_footer
      %s32 = sadd.s32 1, %s28
    $region7: #{_lambda_.2} parent=1 // loop_footer_branch
      %27 = sbr.rel target = $region3
    $region8: #{_lambda_.2} parent=1 // loop_exit
      _
    %2337 = vsyncpa [#allocation3], 1
    %s2338 = scalar_lea.sflag [#allocation3], 1
    %2339 = vsyncpa %s2338, 1
    %2340 = vsyncpa [#allocation5], 1
    %s2341 = scalar_lea.sflag [#allocation5], 1
    %2342 = vsyncpa %s2341, 1

</llo_original>
